<compile_context>
chip_gen: v6e
topology: v6e:2x2x1
jax: 0.10.0
libtpu: 0.0.40
codegen_flags: <defaults>
</compile_context>

<pallas_src>
import functools

import jax
import jax.numpy as jnp
from jax.experimental import pallas as pl
from jax.experimental.pallas import tpu as pltpu

BN_EPS = 1e-5
LANE = 128
NEG_INF = -1e30


def _round_up(v, m):
    return -(-v // m) * m


def _vmem_capacity_bytes():
    """Physical per-core VMEM (64 MiB on v7x, 128 MiB on v5e/v6e)."""
    try:
        return int(pltpu.get_tpu_info().vmem_capacity_bytes)
    except Exception:
        return 64 * 2 ** 20          # conservative (v7x-sized) fallback


def ognn_kernel(a_ref, x_ref, w_ref, par_ref, jw_ref, jb_ref, out_ref,
                h_bf, jk_acc, *, tm, resident_a):
    """One grid step = (layer s, node-row tile t).

    a_ref   : resident (Np, Np) bf16 normalized adjacency, or (tm, Np) strip
    x_ref   : (Np, P)    bf16  padded input features (resident)
    w_ref   : (1, P, P)  bf16  GCN weight of layer s
    par_ref : (8, P)     f32   [scale0, shift0, scale1, shift1, b2, 0, 0, 0]
    jw_ref  : (1, P, Op) bf16  SumJK weight of layer s
    jb_ref  : (1, Op)    f32   fused SumJK bias (-1e30 on padded class columns)
    out_ref : (tm, Op)   f32   log-softmax rows (final at s == 2)
    h_bf    : (2, Np, P) bf16  scratch: h0, h1 (matmul / residual / JK source)
    jk_acc  : (Np, Op)   f32   scratch: running sum_i h_i @ jw_i
    """
    s = pl.program_id(0)            # layer / stage (outer, sequential)
    t = pl.program_id(1)            # node-row tile (inner)
    row0 = pl.multiple_of(t * tm, tm)
    rows = pl.ds(row0, tm)

    if resident_a:
        a = a_ref[rows, :]          # slice the resident (Np, Np) block
    else:
        a = a_ref[...]              # streamed (tm, Np) strip

    w = w_ref[0]                    # (P, P)   bf16
    jw = jw_ref[0]                  # (P, Op)  bf16
    par = par_ref[...]              # (8, P)   f32

    def gcn(h_in_bf16):
        # (A_rows @ H) @ W == A_rows @ (H @ W); left association keeps total
        # flops identical without a resident H@W scratch.
        ah = jnp.dot(a, h_in_bf16, preferred_element_type=jnp.float32)
        return jnp.dot(ah.astype(jnp.bfloat16), w,
                       preferred_element_type=jnp.float32)

    @pl.when(s == 0)
    def _():
        # h0 = relu(BN0(GCN0(x)))   (GCN bias folded into shift0)
        h0 = jnp.maximum(gcn(x_ref[...]) * par[0:1, :] + par[1:2, :], 0.0)
        h0_bf = h0.astype(jnp.bfloat16)
        h_bf[0, rows, :] = h0_bf
        part = jnp.dot(h0_bf, jw, preferred_element_type=jnp.float32)
        jk_acc[rows, :] = part
        out_ref[...] = part         # keep every output DMA defined

    @pl.when(s == 1)
    def _():
        # h1 = relu(BN1(GCN1(h0))) + h0
        h0r = h_bf[0, rows, :].astype(jnp.float32)
        h1 = jnp.maximum(gcn(h_bf[0]) * par[2:3, :] + par[3:4, :], 0.0) + h0r
        h1_bf = h1.astype(jnp.bfloat16)
        h_bf[1, rows, :] = h1_bf
        part = jk_acc[rows, :] + jnp.dot(h1_bf, jw,
                                         preferred_element_type=jnp.float32)
        jk_acc[rows, :] = part
        out_ref[...] = part

    @pl.when(s == 2)
    def _():
        # h2 = GCN2(h1) + b2 + h1 ; finish fused SumJK('p') ; log-softmax
        h1r = h_bf[1, rows, :].astype(jnp.float32)
        h2 = gcn(h_bf[1]) + par[4:5, :] + h1r
        res = (jk_acc[rows, :]
               + jnp.dot(h2.astype(jnp.bfloat16), jw,
                         preferred_element_type=jnp.float32)
               + jb_ref[...])
        m = jnp.max(res, axis=-1, keepdims=True)
        zc = res - m
        lse = jnp.log(jnp.sum(jnp.exp(zc), axis=-1, keepdims=True))
        out_ref[...] = zc - lse


@functools.partial(jax.jit,
                   static_argnames=("tm", "single_buffer", "vmem_cap"))
def _ognn_forward_impl(a_hat, x, params, *, tm, single_buffer, vmem_cap):
    (w0, b0, w1, b1, w2, b2, bn0, bn1, jw, jb) = params
    n, cin = x.shape
    d = w0.shape[1]
    o = jw.shape[-1]

    p = max(_round_up(cin, LANE), _round_up(d, LANE))   # shared feature width
    op = _round_up(o, LANE)                             # padded class width
    np_ = _round_up(n, tm)                              # padded node count

    f32, bf16 = jnp.float32, jnp.bfloat16
    bufs = 1 if single_buffer else 2

    # ---- resident-A decision (static, per review: resident when it fits) ----
    resident_need = (np_ * np_ * 2 * bufs       # A (single/double buffered)
                     + 2 * np_ * p * 2          # h_bf scratch
                     + np_ * op * 4             # jk accumulator
                     + bufs * np_ * p * 2       # x
                     + 2 * p * p * 2            # W slice (varies with s)
                     + 2 * p * op * 2           # jw slice (varies with s)
                     + bufs * 8 * p * 4         # folded params
                     + bufs * op * 4            # fused bias
                     + 2 * tm * op * 4)         # output tile
    resident_a = (resident_need * 5) // 4 <= vmem_cap - 8 * 2 ** 20

    # --- pad & cast inputs/weights (zero padding is exact: padded A cols are
    #     0, padded feature cols have zero W rows/cols & zero BN scale/shift) --
    a_p = jnp.zeros((np_, np_), f32).at[:n, :n].set(a_hat).astype(bf16)
    x_p = jnp.zeros((np_, p), f32).at[:n, :cin].set(x).astype(bf16)

    w_p = jnp.zeros((3, p, p), f32)
    w_p = w_p.at[0, :cin, :d].set(w0)
    w_p = w_p.at[1, :d, :d].set(w1)
    w_p = w_p.at[2, :d, :d].set(w2)
    w_p = w_p.astype(bf16)

    def fold_bn(bn, bias):
        gamma, beta, mean, var = bn[0], bn[1], bn[2], bn[3]
        scale = gamma * jax.lax.rsqrt(var + BN_EPS)
        shift = beta - mean * scale + bias.reshape(-1) * scale
        return scale, shift

    s0, sh0 = fold_bn(bn0, b0)
    s1, sh1 = fold_bn(bn1, b1)
    par = jnp.zeros((8, p), f32)
    par = par.at[0, :d].set(s0).at[1, :d].set(sh0)
    par = par.at[2, :d].set(s1).at[3, :d].set(sh1)
    par = par.at[4, :d].set(b2.reshape(-1))

    # Per-layer SumJK weights (no lane-axis concat in the kernel any more);
    # fused bias with padded class columns masked to -inf before log-softmax.
    jw_p = jnp.zeros((3, p, op), f32).at[:, :d, :o].set(jw).astype(bf16)
    jb_p = jnp.full((1, op), NEG_INF, f32).at[0, :o].set(jb[0] + jb[1] + jb[2])

    grid = (3, np_ // tm)

    def const_spec(shape, index_map):
        # Constant-index blocks: never re-fetched; drop the dead 2nd buffer
        # when the jax build supports pipeline_mode.
        if single_buffer:
            return pl.BlockSpec(shape, index_map,
                                pipeline_mode=pl.Buffered(1))
        return pl.BlockSpec(shape, index_map)

    if resident_a:
        a_spec = const_spec((np_, np_), lambda s, t: (0, 0))
        a_bytes_hbm = np_ * np_ * 2
    else:
        a_spec = pl.BlockSpec((tm, np_), lambda s, t: (t, 0))
        a_bytes_hbm = 3 * np_ * np_ * 2

    vmem_est = resident_need if resident_a else (
        resident_need - np_ * np_ * 2 * bufs + 2 * tm * np_ * 2)
    vmem_limit = int(min(max(vmem_est * 3 // 2, 32 * 2 ** 20),
                         vmem_cap - 8 * 2 ** 20))

    cost = pl.CostEstimate(
        flops=int(2 * 3 * (np_ * np_ * p + np_ * p * p + np_ * p * op)),
        transcendentals=int(np_ * (op + 1)),
        bytes_accessed=int(a_bytes_hbm + np_ * p * 2 + 3 * p * p * 2
                           + 3 * p * op * 2 + 3 * np_ * op * 4),
    )

    out_p = pl.pallas_call(
        functools.partial(ognn_kernel, tm=tm, resident_a=resident_a),
        out_shape=jax.ShapeDtypeStruct((np_, op), jnp.float32),
        grid_spec=pltpu.PrefetchScalarGridSpec(
            num_scalar_prefetch=0,
            grid=grid,
            in_specs=[
                a_spec,                                            # Â
                const_spec((np_, p), lambda s, t: (0, 0)),         # x
                pl.BlockSpec((1, p, p), lambda s, t: (s, 0, 0)),   # W of layer s
                const_spec((8, p), lambda s, t: (0, 0)),           # folded BN
                pl.BlockSpec((1, p, op), lambda s, t: (s, 0, 0)),  # jw of layer s
                const_spec((1, op), lambda s, t: (0, 0)),          # fused bias
            ],
            out_specs=pl.BlockSpec((tm, op), lambda s, t: (t, 0)),
            scratch_shapes=[
                pltpu.VMEM((2, np_, p), jnp.bfloat16),   # resident h0 / h1
                pltpu.VMEM((np_, op), jnp.float32),      # running JK sum
            ]),
        # Both axes must stay sequential: the layer axis carries h0/h1 through
        # per-core VMEM scratch (see TODO(synk) in the header for v7x 2-TC).
        compiler_params=pltpu.CompilerParams(
            dimension_semantics=("arbitrary", "arbitrary"),
            vmem_limit_bytes=vmem_limit),
        cost_estimate=cost,
    )(a_p, x_p, w_p, par, jw_p, jb_p)

    return out_p[:n, :o]


def ognn_forward(a_hat, x, params, *, tm=256):
    assert tm % LANE == 0
    n = x.shape[0]
    tm_eff = min(tm, _round_up(n, LANE))      # don't over-pad tiny graphs
    vmem_cap = _vmem_capacity_bytes()
    try:
        out = _ognn_forward_impl(a_hat, x, params, tm=tm_eff,
                                 single_buffer=True, vmem_cap=vmem_cap)
        return jax.block_until_ready(out)
    except Exception:
        # pipeline_mode=pl.Buffered(1) unavailable on this jax/libtpu build;
        # fall back to default double buffering (constant index maps still
        # elide repeated DMA of Â / x / params).
        out = _ognn_forward_impl(a_hat, x, params, tm=tm_eff,
                                 single_buffer=False, vmem_cap=vmem_cap)
        return jax.block_until_ready(out)


def ognn_reference(a_hat, x, params):
    """Pure-JAX f32 reference of the fused forward (for a sanity check)."""
    (w0, b0, w1, b1, w2, b2, bn0, bn1, jw, jb) = params

    def bn(h, q):
        gamma, beta, mean, var = q[0], q[1], q[2], q[3]
        return (h - mean) * gamma * jax.lax.rsqrt(var + BN_EPS) + beta

    h0 = jax.nn.relu(bn(a_hat @ (x @ w0) + b0, bn0))
    h1 = jax.nn.relu(bn(a_hat @ (h0 @ w1) + b1, bn1)) + h0
    h2 = a_hat @ (h1 @ w2) + b2 + h1
    res = h0 @ jw[0] + jb[0] + h1 @ jw[1] + jb[1] + h2 @ jw[2] + jb[2]
    return jax.nn.log_softmax(res, axis=-1)


def build_normalized_adjacency(edge_index, num_nodes):
    """Dense Â = D^{-1/2}(A+I)D^{-1/2} from an edge list (symmetrized)."""
    src, dst = edge_index[0], edge_index[1]
    adj = jnp.zeros((num_nodes, num_nodes), jnp.float32)
    adj = adj.at[src, dst].set(1.0)
    adj = jnp.maximum(adj, adj.T)                          # symmetrize
    idx = jnp.arange(num_nodes)
    adj = adj.at[idx, idx].set(1.0)                        # self loops
    deg = jnp.sum(adj, axis=1)
    dinv = jax.lax.rsqrt(deg)
    return adj * dinv[:, None] * dinv[None, :]


def init_params(key, cin, d, o, num_layers=3):
    ks = jax.random.split(key, 16)
    s = 0.1
    w0 = s * jax.random.normal(ks[0], (cin, d), jnp.float32)
    b0 = s * jax.random.normal(ks[1], (1, d), jnp.float32)
    w1 = s * jax.random.normal(ks[2], (d, d), jnp.float32)
    b1 = s * jax.random.normal(ks[3], (1, d), jnp.float32)
    w2 = s * jax.random.normal(ks[4], (d, d), jnp.float32)
    b2 = s * jax.random.normal(ks[5], (1, d), jnp.float32)

    def bn_params(kg, kb):
        gamma = 1.0 + s * jax.random.normal(kg, (d,), jnp.float32)
        beta = s * jax.random.normal(kb, (d,), jnp.float32)
        mean = jnp.zeros((d,), jnp.float32)       # eval-mode running stats
        var = jnp.ones((d,), jnp.float32)
        return jnp.stack([gamma, beta, mean, var], axis=0)   # (4, d)

    bn0 = bn_params(ks[6], ks[7])
    bn1 = bn_params(ks[8], ks[9])

    jw = s * jax.random.normal(ks[10], (num_layers, d, o), jnp.float32)
    jb = s * jax.random.normal(ks[11], (num_layers, o), jnp.float32)
    return (w0, b0, w1, b1, w2, b2, bn0, bn1, jw, jb)


if __name__ == "__main__":
    key = jax.random.PRNGKey(0)
    k_x, k_e, k_p = jax.random.split(key, 3)

    N = 64          # number of graph nodes
    CIN = 16        # args.input_channel
    D = 32          # args.embed_dim
    O = 8           # args.mlp[-1] == output classes
    E = 256         # number of random edges

    x = jax.random.normal(k_x, (N, CIN), jnp.float32)
    edge_index = jax.random.randint(k_e, (2, E), 0, N, jnp.int32)

    a_hat = build_normalized_adjacency(edge_index, N)
    params = init_params(k_p, CIN, D, O)

    out = ognn_forward(a_hat, x, params)
    out = jax.block_until_ready(out)

    assert out.shape == (N, O)
    assert bool(jnp.all(jnp.isfinite(out)))
    # log_softmax rows must sum (in prob space) to ~1
    assert jnp.allclose(jnp.sum(jnp.exp(out), axis=-1), 1.0, atol=1e-3)
    # bf16 matmul path vs f32 reference: generous tolerance by design
    ref = ognn_reference(a_hat, x, params)
    assert float(jnp.max(jnp.abs(out - ref))) < 0.1
    print("KERNEL_OK")
</pallas_src>

<mosaic_0001>
module attributes {stable_mosaic.version = 11 : i64} {
  func.func @ognn_kernel(%arg0: i32, %arg1: i32, %arg2: memref<128x128xbf16, #tpu.memory_space<vmem>>, %arg3: memref<128x128xbf16, #tpu.memory_space<vmem>>, %arg4: memref<1x128x128xbf16, #tpu.memory_space<vmem>>, %arg5: memref<8x128xf32, #tpu.memory_space<vmem>>, %arg6: memref<1x128x128xbf16, #tpu.memory_space<vmem>>, %arg7: memref<1x128xf32, #tpu.memory_space<vmem>>, %arg8: memref<128x128xf32, #tpu.memory_space<vmem>>, %arg9: memref<2x128x128xbf16, #tpu.memory_space<vmem>>, %arg10: memref<128x128xf32, #tpu.memory_space<vmem>>) attributes {dimension_semantics = [#tpu.dimension_semantics<arbitrary>, #tpu.dimension_semantics<arbitrary>], iteration_bounds = array<i64: 3, 1>, scalar_prefetch = 0 : i64, scratch_operands = 2 : i64, tpu.core_type = #tpu.core_type<tc>, window_params = [{pipeline_mode = #tpu.pipeline_mode<synchronous>, transform_indices = @transform_0, window_bounds = array<i64: 128, 128>}, {pipeline_mode = #tpu.pipeline_mode<synchronous>, transform_indices = @transform_1, window_bounds = array<i64: 128, 128>}, {transform_indices = @transform_2, window_bounds = array<i64: 1, 128, 128>}, {pipeline_mode = #tpu.pipeline_mode<synchronous>, transform_indices = @transform_3, window_bounds = array<i64: 8, 128>}, {transform_indices = @transform_4, window_bounds = array<i64: 1, 128, 128>}, {pipeline_mode = #tpu.pipeline_mode<synchronous>, transform_indices = @transform_5, window_bounds = array<i64: 1, 128>}, {transform_indices = @transform_6, window_bounds = array<i64: 128, 128>}]} {
    %c128_i32 = arith.constant 128 : i32
    %0 = arith.muli %arg1, %c128_i32 : i32
    %1 = tpu.assume_multiple %0, 128 : i32
    %2 = arith.index_cast %1 : i32 to index
    %c0 = arith.constant 0 : index
    %3 = vector.load %arg2[%2, %c0] : memref<128x128xbf16, #tpu.memory_space<vmem>>, vector<128x128xbf16>
    %c0_0 = arith.constant 0 : index
    %c0_1 = arith.constant 0 : index
    %c0_2 = arith.constant 0 : index
    %4 = vector.load %arg4[%c0_0, %c0_1, %c0_2] : memref<1x128x128xbf16, #tpu.memory_space<vmem>>, vector<1x128x128xbf16>
    %5 = vector.shape_cast %4 : vector<1x128x128xbf16> to vector<128x128xbf16>
    %c0_3 = arith.constant 0 : index
    %c0_4 = arith.constant 0 : index
    %c0_5 = arith.constant 0 : index
    %6 = vector.load %arg6[%c0_3, %c0_4, %c0_5] : memref<1x128x128xbf16, #tpu.memory_space<vmem>>, vector<1x128x128xbf16>
    %7 = vector.shape_cast %6 : vector<1x128x128xbf16> to vector<128x128xbf16>
    %c0_6 = arith.constant 0 : index
    %c0_7 = arith.constant 0 : index
    %8 = vector.load %arg5[%c0_6, %c0_7] : memref<8x128xf32, #tpu.memory_space<vmem>>, vector<8x128xf32>
    %c0_i32 = arith.constant 0 : i32
    %9 = arith.cmpi eq, %arg0, %c0_i32 : i32
    %10 = arith.extui %9 : i1 to i32
    %c0_i32_8 = arith.constant 0 : i32
    %11 = arith.cmpi ne, %10, %c0_i32_8 : i32
    scf.if %11 {
      %c0_11 = arith.constant 0 : index
      %c0_12 = arith.constant 0 : index
      %18 = vector.load %arg3[%c0_11, %c0_12] : memref<128x128xbf16, #tpu.memory_space<vmem>>, vector<128x128xbf16>
      %cst = arith.constant dense<0.000000e+00> : vector<128x128xf32>
      %19 = tpu.matmul %3, %18, %cst {dimension_numbers = #tpu.dot_dimension_numbers<[1], [0], [0], [1], [0, 0, 1, 1], [], []>} : vector<128x128xbf16>, vector<128x128xbf16>, vector<128x128xf32> -> vector<128x128xf32>
      %20 = arith.truncf %19 : vector<128x128xf32> to vector<128x128xbf16>
      %cst_13 = arith.constant dense<0.000000e+00> : vector<128x128xf32>
      %21 = tpu.matmul %20, %5, %cst_13 {dimension_numbers = #tpu.dot_dimension_numbers<[1], [0], [0], [1], [0, 0, 1, 1], [], []>} : vector<128x128xbf16>, vector<128x128xbf16>, vector<128x128xf32> -> vector<128x128xf32>
      %22 = vector.extract_strided_slice %8 {offsets = [0, 0], sizes = [1, 128], strides = [1, 1]} : vector<8x128xf32> to vector<1x128xf32>
      %23 = vector.broadcast %22 : vector<1x128xf32> to vector<128x128xf32>
      %24 = arith.mulf %21, %23 : vector<128x128xf32>
      %25 = vector.extract_strided_slice %8 {offsets = [1, 0], sizes = [1, 128], strides = [1, 1]} : vector<8x128xf32> to vector<1x128xf32>
      %26 = vector.broadcast %25 : vector<1x128xf32> to vector<128x128xf32>
      %27 = arith.addf %24, %26 : vector<128x128xf32>
      %cst_14 = arith.constant 0.000000e+00 : f32
      %28 = vector.broadcast %cst_14 : f32 to vector<128x128xf32>
      %29 = arith.maximumf %27, %28 : vector<128x128xf32>
      %30 = arith.truncf %29 : vector<128x128xf32> to vector<128x128xbf16>
      %c0_15 = arith.constant 0 : index
      %31 = arith.index_cast %1 : i32 to index
      %c0_16 = arith.constant 0 : index
      %32 = vector.load %arg9[%c0_15, %31, %c0_16] : memref<2x128x128xbf16, #tpu.memory_space<vmem>>, vector<1x128x128xbf16>
      %33 = vector.shape_cast %32 : vector<1x128x128xbf16> to vector<128x128xbf16>
      %34 = vector.shape_cast %30 : vector<128x128xbf16> to vector<1x128x128xbf16>
      tpu.vector_store %arg9[%c0_15, %31, %c0_16], %34 {strides = array<i32>} : memref<2x128x128xbf16, #tpu.memory_space<vmem>>, vector<1x128x128xbf16>,
      %cst_17 = arith.constant dense<0.000000e+00> : vector<128x128xf32>
      %35 = tpu.matmul %30, %7, %cst_17 {dimension_numbers = #tpu.dot_dimension_numbers<[1], [0], [0], [1], [0, 0, 1, 1], [], []>} : vector<128x128xbf16>, vector<128x128xbf16>, vector<128x128xf32> -> vector<128x128xf32>
      %36 = arith.index_cast %1 : i32 to index
      %c0_18 = arith.constant 0 : index
      %37 = vector.load %arg10[%36, %c0_18] : memref<128x128xf32, #tpu.memory_space<vmem>>, vector<128x128xf32>
      tpu.vector_store %arg10[%36, %c0_18], %35 {strides = array<i32>} : memref<128x128xf32, #tpu.memory_space<vmem>>, vector<128x128xf32>,
      %c0_19 = arith.constant 0 : index
      %c0_20 = arith.constant 0 : index
      %38 = vector.load %arg8[%c0_19, %c0_20] : memref<128x128xf32, #tpu.memory_space<vmem>>, vector<128x128xf32>
      tpu.vector_store %arg8[%c0_19, %c0_20], %35 {strides = array<i32>} : memref<128x128xf32, #tpu.memory_space<vmem>>, vector<128x128xf32>,
    } else {
    }
    %c1_i32 = arith.constant 1 : i32
    %12 = arith.cmpi eq, %arg0, %c1_i32 : i32
    %13 = arith.extui %12 : i1 to i32
    %c0_i32_9 = arith.constant 0 : i32
    %14 = arith.cmpi ne, %13, %c0_i32_9 : i32
    scf.if %14 {
      %c0_11 = arith.constant 0 : index
      %18 = arith.index_cast %1 : i32 to index
      %c0_12 = arith.constant 0 : index
      %19 = vector.load %arg9[%c0_11, %18, %c0_12] : memref<2x128x128xbf16, #tpu.memory_space<vmem>>, vector<1x128x128xbf16>
      %20 = vector.shape_cast %19 : vector<1x128x128xbf16> to vector<128x128xbf16>
      %21 = arith.extf %20 : vector<128x128xbf16> to vector<128x128xf32>
      %c0_13 = arith.constant 0 : index
      %c0_14 = arith.constant 0 : index
      %c0_15 = arith.constant 0 : index
      %22 = vector.load %arg9[%c0_13, %c0_14, %c0_15] : memref<2x128x128xbf16, #tpu.memory_space<vmem>>, vector<1x128x128xbf16>
      %23 = vector.shape_cast %22 : vector<1x128x128xbf16> to vector<128x128xbf16>
      %cst = arith.constant dense<0.000000e+00> : vector<128x128xf32>
      %24 = tpu.matmul %3, %23, %cst {dimension_numbers = #tpu.dot_dimension_numbers<[1], [0], [0], [1], [0, 0, 1, 1], [], []>} : vector<128x128xbf16>, vector<128x128xbf16>, vector<128x128xf32> -> vector<128x128xf32>
      %25 = arith.truncf %24 : vector<128x128xf32> to vector<128x128xbf16>
      %cst_16 = arith.constant dense<0.000000e+00> : vector<128x128xf32>
      %26 = tpu.matmul %25, %5, %cst_16 {dimension_numbers = #tpu.dot_dimension_numbers<[1], [0], [0], [1], [0, 0, 1, 1], [], []>} : vector<128x128xbf16>, vector<128x128xbf16>, vector<128x128xf32> -> vector<128x128xf32>
      %27 = vector.extract_strided_slice %8 {offsets = [2, 0], sizes = [1, 128], strides = [1, 1]} : vector<8x128xf32> to vector<1x128xf32>
      %28 = vector.broadcast %27 : vector<1x128xf32> to vector<128x128xf32>
      %29 = arith.mulf %26, %28 : vector<128x128xf32>
      %30 = vector.extract_strided_slice %8 {offsets = [3, 0], sizes = [1, 128], strides = [1, 1]} : vector<8x128xf32> to vector<1x128xf32>
      %31 = vector.broadcast %30 : vector<1x128xf32> to vector<128x128xf32>
      %32 = arith.addf %29, %31 : vector<128x128xf32>
      %cst_17 = arith.constant 0.000000e+00 : f32
      %33 = vector.broadcast %cst_17 : f32 to vector<128x128xf32>
      %34 = arith.maximumf %32, %33 : vector<128x128xf32>
      %35 = arith.addf %34, %21 : vector<128x128xf32>
      %36 = arith.truncf %35 : vector<128x128xf32> to vector<128x128xbf16>
      %c1 = arith.constant 1 : index
      %37 = arith.index_cast %1 : i32 to index
      %c0_18 = arith.constant 0 : index
      %38 = vector.load %arg9[%c1, %37, %c0_18] : memref<2x128x128xbf16, #tpu.memory_space<vmem>>, vector<1x128x128xbf16>
      %39 = vector.shape_cast %38 : vector<1x128x128xbf16> to vector<128x128xbf16>
      %40 = vector.shape_cast %36 : vector<128x128xbf16> to vector<1x128x128xbf16>
      tpu.vector_store %arg9[%c1, %37, %c0_18], %40 {strides = array<i32>} : memref<2x128x128xbf16, #tpu.memory_space<vmem>>, vector<1x128x128xbf16>,
      %41 = arith.index_cast %1 : i32 to index
      %c0_19 = arith.constant 0 : index
      %42 = vector.load %arg10[%41, %c0_19] : memref<128x128xf32, #tpu.memory_space<vmem>>, vector<128x128xf32>
      %cst_20 = arith.constant dense<0.000000e+00> : vector<128x128xf32>
      %43 = tpu.matmul %36, %7, %cst_20 {dimension_numbers = #tpu.dot_dimension_numbers<[1], [0], [0], [1], [0, 0, 1, 1], [], []>} : vector<128x128xbf16>, vector<128x128xbf16>, vector<128x128xf32> -> vector<128x128xf32>
      %44 = arith.addf %42, %43 : vector<128x128xf32>
      %45 = arith.index_cast %1 : i32 to index
      %c0_21 = arith.constant 0 : index
      %46 = vector.load %arg10[%45, %c0_21] : memref<128x128xf32, #tpu.memory_space<vmem>>, vector<128x128xf32>
      tpu.vector_store %arg10[%45, %c0_21], %44 {strides = array<i32>} : memref<128x128xf32, #tpu.memory_space<vmem>>, vector<128x128xf32>,
      %c0_22 = arith.constant 0 : index
      %c0_23 = arith.constant 0 : index
      %47 = vector.load %arg8[%c0_22, %c0_23] : memref<128x128xf32, #tpu.memory_space<vmem>>, vector<128x128xf32>
      tpu.vector_store %arg8[%c0_22, %c0_23], %44 {strides = array<i32>} : memref<128x128xf32, #tpu.memory_space<vmem>>, vector<128x128xf32>,
    } else {
    }
    %c2_i32 = arith.constant 2 : i32
    %15 = arith.cmpi eq, %arg0, %c2_i32 : i32
    %16 = arith.extui %15 : i1 to i32
    %c0_i32_10 = arith.constant 0 : i32
    %17 = arith.cmpi ne, %16, %c0_i32_10 : i32
    scf.if %17 {
      %c1 = arith.constant 1 : index
      %18 = arith.index_cast %1 : i32 to index
      %c0_11 = arith.constant 0 : index
      %19 = vector.load %arg9[%c1, %18, %c0_11] : memref<2x128x128xbf16, #tpu.memory_space<vmem>>, vector<1x128x128xbf16>
      %20 = vector.shape_cast %19 : vector<1x128x128xbf16> to vector<128x128xbf16>
      %21 = arith.extf %20 : vector<128x128xbf16> to vector<128x128xf32>
      %c1_12 = arith.constant 1 : index
      %c0_13 = arith.constant 0 : index
      %c0_14 = arith.constant 0 : index
      %22 = vector.load %arg9[%c1_12, %c0_13, %c0_14] : memref<2x128x128xbf16, #tpu.memory_space<vmem>>, vector<1x128x128xbf16>
      %23 = vector.shape_cast %22 : vector<1x128x128xbf16> to vector<128x128xbf16>
      %cst = arith.constant dense<0.000000e+00> : vector<128x128xf32>
      %24 = tpu.matmul %3, %23, %cst {dimension_numbers = #tpu.dot_dimension_numbers<[1], [0], [0], [1], [0, 0, 1, 1], [], []>} : vector<128x128xbf16>, vector<128x128xbf16>, vector<128x128xf32> -> vector<128x128xf32>
      %25 = arith.truncf %24 : vector<128x128xf32> to vector<128x128xbf16>
      %cst_15 = arith.constant dense<0.000000e+00> : vector<128x128xf32>
      %26 = tpu.matmul %25, %5, %cst_15 {dimension_numbers = #tpu.dot_dimension_numbers<[1], [0], [0], [1], [0, 0, 1, 1], [], []>} : vector<128x128xbf16>, vector<128x128xbf16>, vector<128x128xf32> -> vector<128x128xf32>
      %27 = vector.extract_strided_slice %8 {offsets = [4, 0], sizes = [1, 128], strides = [1, 1]} : vector<8x128xf32> to vector<1x128xf32>
      %28 = vector.broadcast %27 : vector<1x128xf32> to vector<128x128xf32>
      %29 = arith.addf %26, %28 : vector<128x128xf32>
      %30 = arith.addf %29, %21 : vector<128x128xf32>
      %31 = arith.index_cast %1 : i32 to index
      %c0_16 = arith.constant 0 : index
      %32 = vector.load %arg10[%31, %c0_16] : memref<128x128xf32, #tpu.memory_space<vmem>>, vector<128x128xf32>
      %33 = arith.truncf %30 : vector<128x128xf32> to vector<128x128xbf16>
      %cst_17 = arith.constant dense<0.000000e+00> : vector<128x128xf32>
      %34 = tpu.matmul %33, %7, %cst_17 {dimension_numbers = #tpu.dot_dimension_numbers<[1], [0], [0], [1], [0, 0, 1, 1], [], []>} : vector<128x128xbf16>, vector<128x128xbf16>, vector<128x128xf32> -> vector<128x128xf32>
      %35 = arith.addf %32, %34 : vector<128x128xf32>
      %c0_18 = arith.constant 0 : index
      %c0_19 = arith.constant 0 : index
      %36 = vector.load %arg7[%c0_18, %c0_19] : memref<1x128xf32, #tpu.memory_space<vmem>>, vector<1x128xf32>
      %37 = vector.broadcast %36 : vector<1x128xf32> to vector<128x128xf32>
      %38 = arith.addf %35, %37 : vector<128x128xf32>
      %cst_20 = arith.constant dense<0xFF800000> : vector<128xf32>
      %39 = vector.multi_reduction <maximumf>, %38, %cst_20 [1] : vector<128x128xf32> to vector<128xf32>
      %40 = vector.shape_cast %39 : vector<128xf32> to vector<128x1xf32>
      %41 = vector.broadcast %40 : vector<128x1xf32> to vector<128x128xf32>
      %42 = arith.subf %38, %41 : vector<128x128xf32>
      %43 = math.exp %42 : vector<128x128xf32>
      %cst_21 = arith.constant dense<0.000000e+00> : vector<128xf32>
      %44 = vector.multi_reduction <add>, %43, %cst_21 [1] : vector<128x128xf32> to vector<128xf32>
      %45 = vector.shape_cast %44 : vector<128xf32> to vector<128x1xf32>
      %46 = math.log %45 : vector<128x1xf32>
      %47 = vector.broadcast %46 : vector<128x1xf32> to vector<128x128xf32>
      %48 = arith.subf %42, %47 : vector<128x128xf32>
      %c0_22 = arith.constant 0 : index
      %c0_23 = arith.constant 0 : index
      %49 = vector.load %arg8[%c0_22, %c0_23] : memref<128x128xf32, #tpu.memory_space<vmem>>, vector<128x128xf32>
      tpu.vector_store %arg8[%c0_22, %c0_23], %48 {strides = array<i32>} : memref<128x128xf32, #tpu.memory_space<vmem>>, vector<128x128xf32>,
    } else {
    }
    return
  }
  func.func @transform_0(%arg0: i32, %arg1: i32) -> (i32, i32) {
    %c0_i32 = arith.constant 0 : i32
    %c0_i32_0 = arith.constant 0 : i32
    %c0_i32_1 = arith.constant 0 : i32
    return %c0_i32, %c0_i32_0 : i32, i32
  }
  func.func @transform_1(%arg0: i32, %arg1: i32) -> (i32, i32) {
    %c0_i32 = arith.constant 0 : i32
    %c0_i32_0 = arith.constant 0 : i32
    %c0_i32_1 = arith.constant 0 : i32
    return %c0_i32, %c0_i32_0 : i32, i32
  }
  func.func @transform_2(%arg0: i32, %arg1: i32) -> (i32, i32, i32) {
    %c0_i32 = arith.constant 0 : i32
    %c0_i32_0 = arith.constant 0 : i32
    %c0_i32_1 = arith.constant 0 : i32
    return %arg0, %c0_i32, %c0_i32_0 : i32, i32, i32
  }
  func.func @transform_3(%arg0: i32, %arg1: i32) -> (i32, i32) {
    %c0_i32 = arith.constant 0 : i32
    %c0_i32_0 = arith.constant 0 : i32
    %c0_i32_1 = arith.constant 0 : i32
    return %c0_i32, %c0_i32_0 : i32, i32
  }
  func.func @transform_4(%arg0: i32, %arg1: i32) -> (i32, i32, i32) {
    %c0_i32 = arith.constant 0 : i32
    %c0_i32_0 = arith.constant 0 : i32
    %c0_i32_1 = arith.constant 0 : i32
    return %arg0, %c0_i32, %c0_i32_0 : i32, i32, i32
  }
  func.func @transform_5(%arg0: i32, %arg1: i32) -> (i32, i32) {
    %c0_i32 = arith.constant 0 : i32
    %c0_i32_0 = arith.constant 0 : i32
    %c0_i32_1 = arith.constant 0 : i32
    return %c0_i32, %c0_i32_0 : i32, i32
  }
  func.func @transform_6(%arg0: i32, %arg1: i32) -> (i32, i32) {
    %c0_i32 = arith.constant 0 : i32
    %c0_i32_0 = arith.constant 0 : i32
    return %arg1, %c0_i32 : i32, i32
  }
}

module attributes {stable_mosaic.version = 11 : i64} {
  func.func @ognn_kernel(%arg0: i32, %arg1: i32, %arg2: memref<128x128xbf16, #tpu.memory_space<vmem>>, %arg3: memref<128x128xbf16, #tpu.memory_space<vmem>>, %arg4: memref<1x128x128xbf16, #tpu.memory_space<vmem>>, %arg5: memref<8x128xf32, #tpu.memory_space<vmem>>, %arg6: memref<1x128x128xbf16, #tpu.memory_space<vmem>>, %arg7: memref<1x128xf32, #tpu.memory_space<vmem>>, %arg8: memref<128x128xf32, #tpu.memory_space<vmem>>, %arg9: memref<2x128x128xbf16, #tpu.memory_space<vmem>>, %arg10: memref<128x128xf32, #tpu.memory_space<vmem>>) attributes {dimension_semantics = [#tpu.dimension_semantics<arbitrary>, #tpu.dimension_semantics<arbitrary>], iteration_bounds = array<i64: 3, 1>, scalar_prefetch = 0 : i64, scratch_operands = 2 : i64, tpu.core_type = #tpu.core_type<tc>, window_params = [{pipeline_mode = #tpu.pipeline_mode<synchronous>, transform_indices = @transform_0, window_bounds = array<i64: 128, 128>}, {pipeline_mode = #tpu.pipeline_mode<synchronous>, transform_indices = @transform_1, window_bounds = array<i64: 128, 128>}, {transform_indices = @transform_2, window_bounds = array<i64: 1, 128, 128>}, {pipeline_mode = #tpu.pipeline_mode<synchronous>, transform_indices = @transform_3, window_bounds = array<i64: 8, 128>}, {transform_indices = @transform_4, window_bounds = array<i64: 1, 128, 128>}, {pipeline_mode = #tpu.pipeline_mode<synchronous>, transform_indices = @transform_5, window_bounds = array<i64: 1, 128>}, {transform_indices = @transform_6, window_bounds = array<i64: 128, 128>}]} {
    %c128_i32 = arith.constant 128 : i32
    %0 = arith.muli %arg1, %c128_i32 : i32
    %1 = tpu.assume_multiple %0, 128 : i32
    %2 = arith.index_cast %1 : i32 to index
    %c0 = arith.constant 0 : index
    %3 = vector.load %arg2[%2, %c0] : memref<128x128xbf16, #tpu.memory_space<vmem>>, vector<128x128xbf16>
    %c0_0 = arith.constant 0 : index
    %c0_1 = arith.constant 0 : index
    %c0_2 = arith.constant 0 : index
    %4 = vector.load %arg4[%c0_0, %c0_1, %c0_2] : memref<1x128x128xbf16, #tpu.memory_space<vmem>>, vector<1x128x128xbf16>
    %5 = vector.shape_cast %4 : vector<1x128x128xbf16> to vector<128x128xbf16>
    %c0_3 = arith.constant 0 : index
    %c0_4 = arith.constant 0 : index
    %c0_5 = arith.constant 0 : index
    %6 = vector.load %arg6[%c0_3, %c0_4, %c0_5] : memref<1x128x128xbf16, #tpu.memory_space<vmem>>, vector<1x128x128xbf16>
    %7 = vector.shape_cast %6 : vector<1x128x128xbf16> to vector<128x128xbf16>
    %c0_6 = arith.constant 0 : index
    %c0_7 = arith.constant 0 : index
    %8 = vector.load %arg5[%c0_6, %c0_7] : memref<8x128xf32, #tpu.memory_space<vmem>>, vector<8x128xf32>
    %c0_i32 = arith.constant 0 : i32
    %9 = arith.cmpi eq, %arg0, %c0_i32 : i32
    %10 = arith.extui %9 : i1 to i32
    %c0_i32_8 = arith.constant 0 : i32
    %11 = arith.cmpi ne, %10, %c0_i32_8 : i32
    scf.if %11 {
      %c0_11 = arith.constant 0 : index
      %c0_12 = arith.constant 0 : index
      %18 = vector.load %arg3[%c0_11, %c0_12] : memref<128x128xbf16, #tpu.memory_space<vmem>>, vector<128x128xbf16>
      %cst = arith.constant dense<0.000000e+00> : vector<128x128xf32>
      %19 = tpu.matmul %3, %18, %cst {dimension_numbers = #tpu.dot_dimension_numbers<[1], [0], [0], [1], [0, 0, 1, 1], [], []>} : vector<128x128xbf16>, vector<128x128xbf16>, vector<128x128xf32> -> vector<128x128xf32>
      %20 = arith.truncf %19 : vector<128x128xf32> to vector<128x128xbf16>
      %cst_13 = arith.constant dense<0.000000e+00> : vector<128x128xf32>
      %21 = tpu.matmul %20, %5, %cst_13 {dimension_numbers = #tpu.dot_dimension_numbers<[1], [0], [0], [1], [0, 0, 1, 1], [], []>} : vector<128x128xbf16>, vector<128x128xbf16>, vector<128x128xf32> -> vector<128x128xf32>
      %22 = vector.extract_strided_slice %8 {offsets = [0, 0], sizes = [1, 128], strides = [1, 1]} : vector<8x128xf32> to vector<1x128xf32>
      %23 = vector.broadcast %22 : vector<1x128xf32> to vector<128x128xf32>
      %24 = arith.mulf %21, %23 : vector<128x128xf32>
      %25 = vector.extract_strided_slice %8 {offsets = [1, 0], sizes = [1, 128], strides = [1, 1]} : vector<8x128xf32> to vector<1x128xf32>
      %26 = vector.broadcast %25 : vector<1x128xf32> to vector<128x128xf32>
      %27 = arith.addf %24, %26 : vector<128x128xf32>
      %cst_14 = arith.constant 0.000000e+00 : f32
      %28 = vector.broadcast %cst_14 : f32 to vector<128x128xf32>
      %29 = arith.maximumf %27, %28 : vector<128x128xf32>
      %30 = arith.truncf %29 : vector<128x128xf32> to vector<128x128xbf16>
      %c0_15 = arith.constant 0 : index
      %31 = arith.index_cast %1 : i32 to index
      %c0_16 = arith.constant 0 : index
      %32 = vector.load %arg9[%c0_15, %31, %c0_16] : memref<2x128x128xbf16, #tpu.memory_space<vmem>>, vector<1x128x128xbf16>
      %33 = vector.shape_cast %32 : vector<1x128x128xbf16> to vector<128x128xbf16>
      %34 = vector.shape_cast %30 : vector<128x128xbf16> to vector<1x128x128xbf16>
      tpu.vector_store %arg9[%c0_15, %31, %c0_16], %34 {strides = array<i32>} : memref<2x128x128xbf16, #tpu.memory_space<vmem>>, vector<1x128x128xbf16>,
      %cst_17 = arith.constant dense<0.000000e+00> : vector<128x128xf32>
      %35 = tpu.matmul %30, %7, %cst_17 {dimension_numbers = #tpu.dot_dimension_numbers<[1], [0], [0], [1], [0, 0, 1, 1], [], []>} : vector<128x128xbf16>, vector<128x128xbf16>, vector<128x128xf32> -> vector<128x128xf32>
      %36 = arith.index_cast %1 : i32 to index
      %c0_18 = arith.constant 0 : index
      %37 = vector.load %arg10[%36, %c0_18] : memref<128x128xf32, #tpu.memory_space<vmem>>, vector<128x128xf32>
      tpu.vector_store %arg10[%36, %c0_18], %35 {strides = array<i32>} : memref<128x128xf32, #tpu.memory_space<vmem>>, vector<128x128xf32>,
      %c0_19 = arith.constant 0 : index
      %c0_20 = arith.constant 0 : index
      %38 = vector.load %arg8[%c0_19, %c0_20] : memref<128x128xf32, #tpu.memory_space<vmem>>, vector<128x128xf32>
      tpu.vector_store %arg8[%c0_19, %c0_20], %35 {strides = array<i32>} : memref<128x128xf32, #tpu.memory_space<vmem>>, vector<128x128xf32>,
    } else {
    }
    %c1_i32 = arith.constant 1 : i32
    %12 = arith.cmpi eq, %arg0, %c1_i32 : i32
    %13 = arith.extui %12 : i1 to i32
    %c0_i32_9 = arith.constant 0 : i32
    %14 = arith.cmpi ne, %13, %c0_i32_9 : i32
    scf.if %14 {
      %c0_11 = arith.constant 0 : index
      %18 = arith.index_cast %1 : i32 to index
      %c0_12 = arith.constant 0 : index
      %19 = vector.load %arg9[%c0_11, %18, %c0_12] : memref<2x128x128xbf16, #tpu.memory_space<vmem>>, vector<1x128x128xbf16>
      %20 = vector.shape_cast %19 : vector<1x128x128xbf16> to vector<128x128xbf16>
      %21 = arith.extf %20 : vector<128x128xbf16> to vector<128x128xf32>
      %c0_13 = arith.constant 0 : index
      %c0_14 = arith.constant 0 : index
      %c0_15 = arith.constant 0 : index
      %22 = vector.load %arg9[%c0_13, %c0_14, %c0_15] : memref<2x128x128xbf16, #tpu.memory_space<vmem>>, vector<1x128x128xbf16>
      %23 = vector.shape_cast %22 : vector<1x128x128xbf16> to vector<128x128xbf16>
      %cst = arith.constant dense<0.000000e+00> : vector<128x128xf32>
      %24 = tpu.matmul %3, %23, %cst {dimension_numbers = #tpu.dot_dimension_numbers<[1], [0], [0], [1], [0, 0, 1, 1], [], []>} : vector<128x128xbf16>, vector<128x128xbf16>, vector<128x128xf32> -> vector<128x128xf32>
      %25 = arith.truncf %24 : vector<128x128xf32> to vector<128x128xbf16>
      %cst_16 = arith.constant dense<0.000000e+00> : vector<128x128xf32>
      %26 = tpu.matmul %25, %5, %cst_16 {dimension_numbers = #tpu.dot_dimension_numbers<[1], [0], [0], [1], [0, 0, 1, 1], [], []>} : vector<128x128xbf16>, vector<128x128xbf16>, vector<128x128xf32> -> vector<128x128xf32>
      %27 = vector.extract_strided_slice %8 {offsets = [2, 0], sizes = [1, 128], strides = [1, 1]} : vector<8x128xf32> to vector<1x128xf32>
      %28 = vector.broadcast %27 : vector<1x128xf32> to vector<128x128xf32>
      %29 = arith.mulf %26, %28 : vector<128x128xf32>
      %30 = vector.extract_strided_slice %8 {offsets = [3, 0], sizes = [1, 128], strides = [1, 1]} : vector<8x128xf32> to vector<1x128xf32>
      %31 = vector.broadcast %30 : vector<1x128xf32> to vector<128x128xf32>
      %32 = arith.addf %29, %31 : vector<128x128xf32>
      %cst_17 = arith.constant 0.000000e+00 : f32
      %33 = vector.broadcast %cst_17 : f32 to vector<128x128xf32>
      %34 = arith.maximumf %32, %33 : vector<128x128xf32>
      %35 = arith.addf %34, %21 : vector<128x128xf32>
      %36 = arith.truncf %35 : vector<128x128xf32> to vector<128x128xbf16>
      %c1 = arith.constant 1 : index
      %37 = arith.index_cast %1 : i32 to index
      %c0_18 = arith.constant 0 : index
      %38 = vector.load %arg9[%c1, %37, %c0_18] : memref<2x128x128xbf16, #tpu.memory_space<vmem>>, vector<1x128x128xbf16>
      %39 = vector.shape_cast %38 : vector<1x128x128xbf16> to vector<128x128xbf16>
      %40 = vector.shape_cast %36 : vector<128x128xbf16> to vector<1x128x128xbf16>
      tpu.vector_store %arg9[%c1, %37, %c0_18], %40 {strides = array<i32>} : memref<2x128x128xbf16, #tpu.memory_space<vmem>>, vector<1x128x128xbf16>,
      %41 = arith.index_cast %1 : i32 to index
      %c0_19 = arith.constant 0 : index
      %42 = vector.load %arg10[%41, %c0_19] : memref<128x128xf32, #tpu.memory_space<vmem>>, vector<128x128xf32>
      %cst_20 = arith.constant dense<0.000000e+00> : vector<128x128xf32>
      %43 = tpu.matmul %36, %7, %cst_20 {dimension_numbers = #tpu.dot_dimension_numbers<[1], [0], [0], [1], [0, 0, 1, 1], [], []>} : vector<128x128xbf16>, vector<128x128xbf16>, vector<128x128xf32> -> vector<128x128xf32>
      %44 = arith.addf %42, %43 : vector<128x128xf32>
      %45 = arith.index_cast %1 : i32 to index
      %c0_21 = arith.constant 0 : index
      %46 = vector.load %arg10[%45, %c0_21] : memref<128x128xf32, #tpu.memory_space<vmem>>, vector<128x128xf32>
      tpu.vector_store %arg10[%45, %c0_21], %44 {strides = array<i32>} : memref<128x128xf32, #tpu.memory_space<vmem>>, vector<128x128xf32>,
      %c0_22 = arith.constant 0 : index
      %c0_23 = arith.constant 0 : index
      %47 = vector.load %arg8[%c0_22, %c0_23] : memref<128x128xf32, #tpu.memory_space<vmem>>, vector<128x128xf32>
      tpu.vector_store %arg8[%c0_22, %c0_23], %44 {strides = array<i32>} : memref<128x128xf32, #tpu.memory_space<vmem>>, vector<128x128xf32>,
    } else {
    }
    %c2_i32 = arith.constant 2 : i32
    %15 = arith.cmpi eq, %arg0, %c2_i32 : i32
    %16 = arith.extui %15 : i1 to i32
    %c0_i32_10 = arith.constant 0 : i32
    %17 = arith.cmpi ne, %16, %c0_i32_10 : i32
    scf.if %17 {
      %c1 = arith.constant 1 : index
      %18 = arith.index_cast %1 : i32 to index
      %c0_11 = arith.constant 0 : index
      %19 = vector.load %arg9[%c1, %18, %c0_11] : memref<2x128x128xbf16, #tpu.memory_space<vmem>>, vector<1x128x128xbf16>
      %20 = vector.shape_cast %19 : vector<1x128x128xbf16> to vector<128x128xbf16>
      %21 = arith.extf %20 : vector<128x128xbf16> to vector<128x128xf32>
      %c1_12 = arith.constant 1 : index
      %c0_13 = arith.constant 0 : index
      %c0_14 = arith.constant 0 : index
      %22 = vector.load %arg9[%c1_12, %c0_13, %c0_14] : memref<2x128x128xbf16, #tpu.memory_space<vmem>>, vector<1x128x128xbf16>
      %23 = vector.shape_cast %22 : vector<1x128x128xbf16> to vector<128x128xbf16>
      %cst = arith.constant dense<0.000000e+00> : vector<128x128xf32>
      %24 = tpu.matmul %3, %23, %cst {dimension_numbers = #tpu.dot_dimension_numbers<[1], [0], [0], [1], [0, 0, 1, 1], [], []>} : vector<128x128xbf16>, vector<128x128xbf16>, vector<128x128xf32> -> vector<128x128xf32>
      %25 = arith.truncf %24 : vector<128x128xf32> to vector<128x128xbf16>
      %cst_15 = arith.constant dense<0.000000e+00> : vector<128x128xf32>
      %26 = tpu.matmul %25, %5, %cst_15 {dimension_numbers = #tpu.dot_dimension_numbers<[1], [0], [0], [1], [0, 0, 1, 1], [], []>} : vector<128x128xbf16>, vector<128x128xbf16>, vector<128x128xf32> -> vector<128x128xf32>
      %27 = vector.extract_strided_slice %8 {offsets = [4, 0], sizes = [1, 128], strides = [1, 1]} : vector<8x128xf32> to vector<1x128xf32>
      %28 = vector.broadcast %27 : vector<1x128xf32> to vector<128x128xf32>
      %29 = arith.addf %26, %28 : vector<128x128xf32>
      %30 = arith.addf %29, %21 : vector<128x128xf32>
      %31 = arith.index_cast %1 : i32 to index
      %c0_16 = arith.constant 0 : index
      %32 = vector.load %arg10[%31, %c0_16] : memref<128x128xf32, #tpu.memory_space<vmem>>, vector<128x128xf32>
      %33 = arith.truncf %30 : vector<128x128xf32> to vector<128x128xbf16>
      %cst_17 = arith.constant dense<0.000000e+00> : vector<128x128xf32>
      %34 = tpu.matmul %33, %7, %cst_17 {dimension_numbers = #tpu.dot_dimension_numbers<[1], [0], [0], [1], [0, 0, 1, 1], [], []>} : vector<128x128xbf16>, vector<128x128xbf16>, vector<128x128xf32> -> vector<128x128xf32>
      %35 = arith.addf %32, %34 : vector<128x128xf32>
      %c0_18 = arith.constant 0 : index
      %c0_19 = arith.constant 0 : index
      %36 = vector.load %arg7[%c0_18, %c0_19] : memref<1x128xf32, #tpu.memory_space<vmem>>, vector<1x128xf32>
      %37 = vector.broadcast %36 : vector<1x128xf32> to vector<128x128xf32>
      %38 = arith.addf %35, %37 : vector<128x128xf32>
      %cst_20 = arith.constant dense<0xFF800000> : vector<128xf32>
      %39 = vector.multi_reduction <maximumf>, %38, %cst_20 [1] : vector<128x128xf32> to vector<128xf32>
      %40 = vector.shape_cast %39 : vector<128xf32> to vector<128x1xf32>
      %41 = vector.broadcast %40 : vector<128x1xf32> to vector<128x128xf32>
      %42 = arith.subf %38, %41 : vector<128x128xf32>
      %43 = math.exp %42 : vector<128x128xf32>
      %cst_21 = arith.constant dense<0.000000e+00> : vector<128xf32>
      %44 = vector.multi_reduction <add>, %43, %cst_21 [1] : vector<128x128xf32> to vector<128xf32>
      %45 = vector.shape_cast %44 : vector<128xf32> to vector<128x1xf32>
      %46 = math.log %45 : vector<128x1xf32>
      %47 = vector.broadcast %46 : vector<128x1xf32> to vector<128x128xf32>
      %48 = arith.subf %42, %47 : vector<128x128xf32>
      %c0_22 = arith.constant 0 : index
      %c0_23 = arith.constant 0 : index
      %49 = vector.load %arg8[%c0_22, %c0_23] : memref<128x128xf32, #tpu.memory_space<vmem>>, vector<128x128xf32>
      tpu.vector_store %arg8[%c0_22, %c0_23], %48 {strides = array<i32>} : memref<128x128xf32, #tpu.memory_space<vmem>>, vector<128x128xf32>,
    } else {
    }
    return
  }
  func.func @transform_0(%arg0: i32, %arg1: i32) -> (i32, i32) {
    %c0_i32 = arith.constant 0 : i32
    %c0_i32_0 = arith.constant 0 : i32
    %c0_i32_1 = arith.constant 0 : i32
    return %c0_i32, %c0_i32_0 : i32, i32
  }
  func.func @transform_1(%arg0: i32, %arg1: i32) -> (i32, i32) {
    %c0_i32 = arith.constant 0 : i32
    %c0_i32_0 = arith.constant 0 : i32
    %c0_i32_1 = arith.constant 0 : i32
    return %c0_i32, %c0_i32_0 : i32, i32
  }
  func.func @transform_2(%arg0: i32, %arg1: i32) -> (i32, i32, i32) {
    %c0_i32 = arith.constant 0 : i32
    %c0_i32_0 = arith.constant 0 : i32
    %c0_i32_1 = arith.constant 0 : i32
    return %arg0, %c0_i32, %c0_i32_0 : i32, i32, i32
  }
  func.func @transform_3(%arg0: i32, %arg1: i32) -> (i32, i32) {
    %c0_i32 = arith.constant 0 : i32
    %c0_i32_0 = arith.constant 0 : i32
    %c0_i32_1 = arith.constant 0 : i32
    return %c0_i32, %c0_i32_0 : i32, i32
  }
  func.func @transform_4(%arg0: i32, %arg1: i32) -> (i32, i32, i32) {
    %c0_i32 = arith.constant 0 : i32
    %c0_i32_0 = arith.constant 0 : i32
    %c0_i32_1 = arith.constant 0 : i32
    return %arg0, %c0_i32, %c0_i32_0 : i32, i32, i32
  }
  func.func @transform_5(%arg0: i32, %arg1: i32) -> (i32, i32) {
    %c0_i32 = arith.constant 0 : i32
    %c0_i32_0 = arith.constant 0 : i32
    %c0_i32_1 = arith.constant 0 : i32
    return %c0_i32, %c0_i32_0 : i32, i32
  }
  func.func @transform_6(%arg0: i32, %arg1: i32) -> (i32, i32) {
    %c0_i32 = arith.constant 0 : i32
    %c0_i32_0 = arith.constant 0 : i32
    return %arg1, %c0_i32 : i32, i32
  }
}

</mosaic_0001>

<llo_original>
// kernel: _ognn_forward_impl.1
$region0: #{_ognn_forward_impl.1}
  #allocation0 [shape = 'u32[]', space=smem, size = 0x4, offset = 0x4, fixed_abs, tag = 'smem constant byte address 0x4 - core index']
  #allocation1 [shape = 'u32[144,128]{1,0:T(1,128)}', space=vmem, size = 0x12000, scoped, tag = 'internal scratch']
  #allocation2 [shape = 'bf16[2,128,128]{2,1,0:T(8,128)(2,1)}', space=vmem, size = 0x10000, scoped, tag = 'scratch operand']
  #allocation3 [shape = 'f32[128,128]{1,0:T(8,128)}', space=vmem, size = 0x10000, scoped, tag = 'scratch operand']
  %s0 = inlined_call_operand.vmem [shape: bf16[128,128], index: 0, kind: input, shape index: {}]
  %s1 = inlined_call_operand.vmem [shape: bf16[128,128], index: 1, kind: input, shape index: {}]
  %s2 = inlined_call_operand.vmem [shape: bf16[3,128,128], index: 2, kind: input, shape index: {}]
  %s3 = inlined_call_operand.vmem [shape: f32[8,128], index: 3, kind: input, shape index: {}]
  %s4 = inlined_call_operand.vmem [shape: bf16[3,128,128], index: 4, kind: input, shape index: {}]
  %s5 = inlined_call_operand.vmem [shape: f32[1,128], index: 5, kind: input, shape index: {}]
  %s6 = inlined_call_operand.vmem [shape: f32[128,128], index: 6, kind: output, shape index: {}]
  %s7 = sld [smem:[#allocation0]]
  $region69: #{_ognn_forward_impl.1} parent=0
    _
  %s9 = ssub.s32 1, %s7
  %s10 = scalar_select 0, %s9, %s7
  loop: start=0, step=1, limit=5
  $region2: #{_ognn_forward_impl.1} parent=0 // loop_pre_header
    _
  $region3: #{_ognn_forward_impl.1} parent=0 // loop_header
    %s12 = sphi 0, %s16
    %p13 = scmp.ge.s32.totalorder %s12, 5
    %s19 = sphi 0, %s31
    %s20 = sphi 0, %s27
    %s21 = sphi 0, %s19
    %s22 = sphi 0, %s20
    %s23 = sphi 0, %s21
    %s24 = sphi 0, %s22
    %s32 = sphi 0, %s32
    %s34 = sphi 0, %s32
    %s35 = sphi 0, %s34
    %s49 = sphi 0, %s35
    %s53 = sphi 0, %s53
    %s55 = sphi 0, %s53
    %s56 = sphi 0, %s55
    %s70 = sphi 0, %s56
    %s76 = sphi 0, %s78
    %s79 = sphi 0, %s76
    %s80 = sphi 0, %s79
    %s96 = sphi 0, %s80
    %s100 = sphi 0, %s100
    %s102 = sphi 0, %s100
    %s103 = sphi 0, %s102
    %s117 = sphi 0, %s103
    %s123 = sphi 0, %s125
    %s126 = sphi 0, %s123
    %s127 = sphi 0, %s126
    %s143 = sphi 0, %s127
    %s147 = sphi 0, %s147
    %s149 = sphi 0, %s147
    %s150 = sphi 0, %s149
    %s164 = sphi 0, %s150
    %s170 = sphi 0, %s172
    %s173 = sphi 0, %s170
    %s174 = sphi 0, %s173
    %s190 = sphi 0, %s174
  $region4: #{_ognn_forward_impl.1} parent=0 // loop_header_branch
    %15 = sbr.rel (%p13) target = $region8
  $region5: #{_ognn_forward_impl.1} parent=0 // loop_body
    %s17 = ssub.s32 %s12, 1
    %s18 = ssub.s32 %s12, 2
    %s25 = sadd.s32 1, %s20
    %p26 = scmp.ge.s32.totalorder %s25, 1
    %s27 = scalar_select %p26, 0, %s25
    %s28 = sadd.s32 1, %s19
    %s29 = scalar_select %p26, %s28, %s19
    %p30 = scmp.ge.s32.totalorder %s29, 3
    %s31 = scalar_select %p30, 0, %s29
    %s33 = sadd.s32 %s32, 1
    %p36 = scmp.eq.s32.totalorder %s12, 2
    %p37 = scmp.ne.s32.totalorder %s32, %s34
    %p38 = scmp.eq.s32.totalorder %s12, 0
    %p39 = por %p37, %p38
    %p40 = scmp.ne.s32.totalorder %s32, %s34
    %p41 = scmp.eq.s32.totalorder %s17, 2
    %p42 = por %p40, %p41
    %p43 = scmp.ne.s32.totalorder %s34, %s35
    %p44 = scmp.eq.s32.totalorder %s17, 0
    %p45 = por %p43, %p44
    %p46 = scmp.ne.s32.totalorder %s34, %s35
    %p47 = scmp.eq.s32.totalorder %s18, 2
    %p48 = por %p46, %p47
    %p50 = scmp.ne.s32.totalorder %s35, %s49
    %p51 = scmp.eq.s32.totalorder %s18, 0
    %p52 = por %p50, %p51
    %s54 = sadd.s32 %s53, 1
    %p57 = scmp.eq.s32.totalorder %s12, 2
    %p58 = scmp.ne.s32.totalorder %s53, %s55
    %p59 = scmp.eq.s32.totalorder %s12, 0
    %p60 = por %p58, %p59
    %p61 = scmp.ne.s32.totalorder %s53, %s55
    %p62 = scmp.eq.s32.totalorder %s17, 2
    %p63 = por %p61, %p62
    %p64 = scmp.ne.s32.totalorder %s55, %s56
    %p65 = scmp.eq.s32.totalorder %s17, 0
    %p66 = por %p64, %p65
    %p67 = scmp.ne.s32.totalorder %s55, %s56
    %p68 = scmp.eq.s32.totalorder %s18, 2
    %p69 = por %p67, %p68
    %p71 = scmp.ne.s32.totalorder %s56, %s70
    %p72 = scmp.eq.s32.totalorder %s18, 0
    %p73 = por %p71, %p72
    %s74 = ssub.s32 %s19, %s31
    %p75 = scmp.eq.s32.totalorder %s74, 0
    %s77 = sadd.s32 %s76, 1
    %s78 = scalar_select %p75, %s76, %s77
    %p81 = pneg %p75
    %p82 = scmp.eq.s32.totalorder %s12, 2
    %p83 = por %p81, %p82
    %p84 = scmp.ne.s32.totalorder %s76, %s79
    %p85 = scmp.eq.s32.totalorder %s12, 0
    %p86 = por %p84, %p85
    %p87 = scmp.ne.s32.totalorder %s76, %s79
    %p88 = scmp.eq.s32.totalorder %s17, 2
    %p89 = por %p87, %p88
    %p90 = scmp.ne.s32.totalorder %s79, %s80
    %p91 = scmp.eq.s32.totalorder %s17, 0
    %p92 = por %p90, %p91
    %p93 = scmp.ne.s32.totalorder %s79, %s80
    %p94 = scmp.eq.s32.totalorder %s18, 2
    %p95 = por %p93, %p94
    %p97 = scmp.ne.s32.totalorder %s80, %s96
    %p98 = scmp.eq.s32.totalorder %s18, 0
    %p99 = por %p97, %p98
    %s101 = sadd.s32 %s100, 1
    %p104 = scmp.eq.s32.totalorder %s12, 2
    %p105 = scmp.ne.s32.totalorder %s100, %s102
    %p106 = scmp.eq.s32.totalorder %s12, 0
    %p107 = por %p105, %p106
    %p108 = scmp.ne.s32.totalorder %s100, %s102
    %p109 = scmp.eq.s32.totalorder %s17, 2
    %p110 = por %p108, %p109
    %p111 = scmp.ne.s32.totalorder %s102, %s103
    %p112 = scmp.eq.s32.totalorder %s17, 0
    %p113 = por %p111, %p112
    %p114 = scmp.ne.s32.totalorder %s102, %s103
    %p115 = scmp.eq.s32.totalorder %s18, 2
    %p116 = por %p114, %p115
    %p118 = scmp.ne.s32.totalorder %s103, %s117
    %p119 = scmp.eq.s32.totalorder %s18, 0
    %p120 = por %p118, %p119
    %s121 = ssub.s32 %s19, %s31
    %p122 = scmp.eq.s32.totalorder %s121, 0
    %s124 = sadd.s32 %s123, 1
    %s125 = scalar_select %p122, %s123, %s124
    %p128 = pneg %p122
    %p129 = scmp.eq.s32.totalorder %s12, 2
    %p130 = por %p128, %p129
    %p131 = scmp.ne.s32.totalorder %s123, %s126
    %p132 = scmp.eq.s32.totalorder %s12, 0
    %p133 = por %p131, %p132
    %p134 = scmp.ne.s32.totalorder %s123, %s126
    %p135 = scmp.eq.s32.totalorder %s17, 2
    %p136 = por %p134, %p135
    %p137 = scmp.ne.s32.totalorder %s126, %s127
    %p138 = scmp.eq.s32.totalorder %s17, 0
    %p139 = por %p137, %p138
    %p140 = scmp.ne.s32.totalorder %s126, %s127
    %p141 = scmp.eq.s32.totalorder %s18, 2
    %p142 = por %p140, %p141
    %p144 = scmp.ne.s32.totalorder %s127, %s143
    %p145 = scmp.eq.s32.totalorder %s18, 0
    %p146 = por %p144, %p145
    %s148 = sadd.s32 %s147, 1
    %p151 = scmp.eq.s32.totalorder %s12, 2
    %p152 = scmp.ne.s32.totalorder %s147, %s149
    %p153 = scmp.eq.s32.totalorder %s12, 0
    %p154 = por %p152, %p153
    %p155 = scmp.ne.s32.totalorder %s147, %s149
    %p156 = scmp.eq.s32.totalorder %s17, 2
    %p157 = por %p155, %p156
    %p158 = scmp.ne.s32.totalorder %s149, %s150
    %p159 = scmp.eq.s32.totalorder %s17, 0
    %p160 = por %p158, %p159
    %p161 = scmp.ne.s32.totalorder %s149, %s150
    %p162 = scmp.eq.s32.totalorder %s18, 2
    %p163 = por %p161, %p162
    %p165 = scmp.ne.s32.totalorder %s150, %s164
    %p166 = scmp.eq.s32.totalorder %s18, 0
    %p167 = por %p165, %p166
    %s168 = ssub.s32 %s20, %s27
    %p169 = scmp.eq.s32.totalorder %s168, 0
    %s171 = sadd.s32 %s170, 1
    %s172 = scalar_select %p169, %s170, %s171
    %p175 = pneg %p169
    %p176 = scmp.eq.s32.totalorder %s12, 2
    %p177 = por %p175, %p176
    %p178 = scmp.ne.s32.totalorder %s170, %s173
    %p179 = scmp.eq.s32.totalorder %s12, 0
    %p180 = por %p178, %p179
    %p181 = scmp.ne.s32.totalorder %s170, %s173
    %p182 = scmp.eq.s32.totalorder %s17, 2
    %p183 = por %p181, %p182
    %p184 = scmp.ne.s32.totalorder %s173, %s174
    %p185 = scmp.eq.s32.totalorder %s17, 0
    %p186 = por %p184, %p185
    %p187 = scmp.ne.s32.totalorder %s173, %s174
    %p188 = scmp.eq.s32.totalorder %s18, 2
    %p189 = por %p187, %p188
    %p191 = scmp.ne.s32.totalorder %s174, %s190
    %p192 = scmp.eq.s32.totalorder %s18, 0
    %p193 = por %p191, %p192
    %p194 = scmp.le.s32.totalorder 1, %s12
    %p195 = scmp.lt.s32.totalorder %s12, 4
    %p196 = pnand %p194, %p195
    %p197 = pneg %p196
    // Predicated region
    $region9: #{_ognn_forward_impl.1} parent=5 // pred_check
      _
    $region10: #{_ognn_forward_impl.1} parent=5 // pred_check_branch
      %199 = sbr.rel (%p196) target = $region12
    $region11: #{_ognn_forward_impl.1} parent=5 // pred_region
      %s200 = ssub.s32 %s12, 1
      // Predicated region
      $region13: #{_ognn_forward_impl.1} parent=11 // pred_check
        %p201 = pneg %p45
      $region14: #{_ognn_forward_impl.1} parent=11 // pred_check_branch
        %203 = sbr.rel (%p201) target = $region16
      $region15: #{_ognn_forward_impl.1} parent=11 // pred_region
        _
      $region16: #{_ognn_forward_impl.1} parent=11 // pred_fallthru
        _
      // Predicated region
      $region17: #{_ognn_forward_impl.1} parent=11 // pred_check
        %p204 = pneg %p66
      $region18: #{_ognn_forward_impl.1} parent=11 // pred_check_branch
        %206 = sbr.rel (%p204) target = $region20
      $region19: #{_ognn_forward_impl.1} parent=11 // pred_region
        _
      $region20: #{_ognn_forward_impl.1} parent=11 // pred_fallthru
        _
      // Predicated region
      $region21: #{_ognn_forward_impl.1} parent=11 // pred_check
        %p207 = pneg %p113
      $region22: #{_ognn_forward_impl.1} parent=11 // pred_check_branch
        %209 = sbr.rel (%p207) target = $region24
      $region23: #{_ognn_forward_impl.1} parent=11 // pred_region
        _
      $region24: #{_ognn_forward_impl.1} parent=11 // pred_fallthru
        _
      // Predicated region
      $region25: #{_ognn_forward_impl.1} parent=11 // pred_check
        %p210 = pneg %p160
      $region26: #{_ognn_forward_impl.1} parent=11 // pred_check_branch
        %212 = sbr.rel (%p210) target = $region28
      $region27: #{_ognn_forward_impl.1} parent=11 // pred_region
        _
      $region28: #{_ognn_forward_impl.1} parent=11 // pred_fallthru
        _
    $region12: #{_ognn_forward_impl.1} parent=5 // pred_fallthru
      _
    %p213 = scmp.lt.s32.totalorder %s12, 3
    // Predicated region
    $region29: #{_ognn_forward_impl.1} parent=5 // pred_check
      %p214 = pneg %p213
    $region30: #{_ognn_forward_impl.1} parent=5 // pred_check_branch
      %216 = sbr.rel (%p214) target = $region32
    $region31: #{_ognn_forward_impl.1} parent=5 // pred_region
      // Predicated region
      $region33: #{_ognn_forward_impl.1} parent=31 // pred_check
        %p217 = pneg %p86
      $region34: #{_ognn_forward_impl.1} parent=31 // pred_check_branch
        %219 = sbr.rel (%p217) target = $region36
      $region35: #{_ognn_forward_impl.1} parent=31 // pred_region
        %p220 = scmp.lt.s32.totalorder %s19, 2
        %s221 = scalar_select %p220, %s19, 2
        %s222 = smul.addr %s221, 16
        %s223 = smul.addr %s222, 4
        %s224 = scalar_lea.vmem %s2, %s223
      $region36: #{_ognn_forward_impl.1} parent=31 // pred_fallthru
        _
      // Predicated region
      $region37: #{_ognn_forward_impl.1} parent=31 // pred_check
        %p225 = pneg %p133
      $region38: #{_ognn_forward_impl.1} parent=31 // pred_check_branch
        %227 = sbr.rel (%p225) target = $region40
      $region39: #{_ognn_forward_impl.1} parent=31 // pred_region
        %p228 = scmp.lt.s32.totalorder %s19, 2
        %s229 = scalar_select %p228, %s19, 2
        %s230 = smul.addr %s229, 16
        %s231 = smul.addr %s230, 4
        %s232 = scalar_lea.vmem %s4, %s231
      $region40: #{_ognn_forward_impl.1} parent=31 // pred_fallthru
        _
    $region32: #{_ognn_forward_impl.1} parent=5 // pred_fallthru
      _
    %p233 = scmp.le.s32.totalorder 1, %s12
    %p234 = scmp.lt.s32.totalorder %s12, 4
    %p235 = pnand %p233, %p234
    %p236 = pneg %p235
    // Predicated region
    $region41: #{_ognn_forward_impl.1} parent=5 // pred_check
      _
    $region42: #{_ognn_forward_impl.1} parent=5 // pred_check_branch
      %238 = sbr.rel (%p235) target = $region44
    $region43: #{_ognn_forward_impl.1} parent=5 // pred_region
      %s239 = ssub.s32 %s12, 1
      %p240 = pneg %p45
      %p241 = pneg %p42
      %p242 = pneg %p66
      %p243 = pneg %p63
      %p244 = scmp.lt.s32.totalorder %s21, 2
      %s245 = scalar_select %p244, %s21, 2
      %s246 = smul.addr %s245, 16
      %s247 = smul.addr %s246, 4
      %s248 = scalar_lea.vmem %s2, %s247
      %p249 = pneg %p92
      %p250 = pneg %p89
      %p251 = pneg %p113
      %p252 = pneg %p110
      %p253 = scmp.lt.s32.totalorder %s21, 2
      %s254 = scalar_select %p253, %s21, 2
      %s255 = smul.addr %s254, 16
      %s256 = smul.addr %s255, 4
      %s257 = scalar_lea.vmem %s4, %s256
      %p258 = pneg %p139
      %p259 = pneg %p136
      %p260 = pneg %p160
      %p261 = pneg %p157
      %p262 = pneg %p186
      %p263 = pneg %p183
      %s264 = smul.u32 16, %s22
      %p265 = scmp.lt.s32.totalorder %s264, 15
      %s266 = scalar_select %p265, %s264, 15
      %s267 = smul.addr %s266, 8
      %s268 = scalar_lea.vmem %s6, %s267
      %p269 = scmp.lt.s32.totalorder %s21, 2
      %s270 = scalar_select %p269, %s21, 2
      %s271 = smul.addr %s270, 16
      %s272 = smul.addr %s271, 4
      %s273 = scalar_lea.vmem %s2, %s272
      %p274 = scmp.lt.s32.totalorder %s21, 2
      %s275 = scalar_select %p274, %s21, 2
      %s276 = smul.addr %s275, 16
      %s277 = smul.addr %s276, 4
      %s278 = scalar_lea.vmem %s4, %s277
      %s279 = smul.u32 16, %s22
      %p280 = scmp.lt.s32.totalorder %s279, 15
      %s281 = scalar_select %p280, %s279, 15
      %s282 = smul.addr %s281, 8
      %s283 = scalar_lea.vmem %s6, %s282
      %s284 = smul.u32 16, %s22
      %s286 = smul.u32 %s22, 128
      %s287 = sshra.s32 %s286, 3
      %s288 = sand.u32 %s286, 7
      %s289 = smul.addr %s287, 4
      %s290 = scalar_lea.vmem %s0, %s289
      %v291 = vld [vmem:[%s290] sm:$0xf]
      %v292 = vld [vmem:[%s290 + $0x4] sm:$0xf]
      %v293 = vld [vmem:[%s290 + $0x8] sm:$0xf]
      %v294 = vld [vmem:[%s290 + $0xc] sm:$0xf]
      %v295 = vld [vmem:[%s290 + $0x10] sm:$0xf]
      %v296 = vld [vmem:[%s290 + $0x14] sm:$0xf]
      %v297 = vld [vmem:[%s290 + $0x18] sm:$0xf]
      %v298 = vld [vmem:[%s290 + $0x1c] sm:$0xf]
      %v299 = vld [vmem:[%s290 + $0x20] sm:$0xf]
      %v300 = vld [vmem:[%s290 + $0x24] sm:$0xf]
      %v301 = vld [vmem:[%s290 + $0x28] sm:$0xf]
      %v302 = vld [vmem:[%s290 + $0x2c] sm:$0xf]
      %v303 = vld [vmem:[%s290 + $0x30] sm:$0xf]
      %v304 = vld [vmem:[%s290 + $0x34] sm:$0xf]
      %v305 = vld [vmem:[%s290 + $0x38] sm:$0xf]
      %v306 = vld [vmem:[%s290 + $0x3c] sm:$0xf]
      %v307 = vld [vmem:[%s273] sm:$0xf]
      %v308 = vld [vmem:[%s273 + $0x4] sm:$0xf]
      %v309 = vld [vmem:[%s273 + $0x8] sm:$0xf]
      %v310 = vld [vmem:[%s273 + $0xc] sm:$0xf]
      %v311 = vld [vmem:[%s273 + $0x10] sm:$0xf]
      %v312 = vld [vmem:[%s273 + $0x14] sm:$0xf]
      %v313 = vld [vmem:[%s273 + $0x18] sm:$0xf]
      %v314 = vld [vmem:[%s273 + $0x1c] sm:$0xf]
      %v315 = vld [vmem:[%s273 + $0x20] sm:$0xf]
      %v316 = vld [vmem:[%s273 + $0x24] sm:$0xf]
      %v317 = vld [vmem:[%s273 + $0x28] sm:$0xf]
      %v318 = vld [vmem:[%s273 + $0x2c] sm:$0xf]
      %v319 = vld [vmem:[%s273 + $0x30] sm:$0xf]
      %v320 = vld [vmem:[%s273 + $0x34] sm:$0xf]
      %v321 = vld [vmem:[%s273 + $0x38] sm:$0xf]
      %v322 = vld [vmem:[%s273 + $0x3c] sm:$0xf]
      %v323 = vld [vmem:[%s278] sm:$0xf]
      %v324 = vld [vmem:[%s278 + $0x4] sm:$0xf]
      %v325 = vld [vmem:[%s278 + $0x8] sm:$0xf]
      %v326 = vld [vmem:[%s278 + $0xc] sm:$0xf]
      %v327 = vld [vmem:[%s278 + $0x10] sm:$0xf]
      %v328 = vld [vmem:[%s278 + $0x14] sm:$0xf]
      %v329 = vld [vmem:[%s278 + $0x18] sm:$0xf]
      %v330 = vld [vmem:[%s278 + $0x1c] sm:$0xf]
      %v331 = vld [vmem:[%s278 + $0x20] sm:$0xf]
      %v332 = vld [vmem:[%s278 + $0x24] sm:$0xf]
      %v333 = vld [vmem:[%s278 + $0x28] sm:$0xf]
      %v334 = vld [vmem:[%s278 + $0x2c] sm:$0xf]
      %v335 = vld [vmem:[%s278 + $0x30] sm:$0xf]
      %v336 = vld [vmem:[%s278 + $0x34] sm:$0xf]
      %v337 = vld [vmem:[%s278 + $0x38] sm:$0xf]
      %v338 = vld [vmem:[%s278 + $0x3c] sm:$0xf]
      %v339 = vld [vmem:[%s3] sm:$0xff]
      %p340 = scmp.eq.s32.totalorder %s21, 0
      // Predicated region
      $region45: #{_ognn_forward_impl.1} parent=43 // pred_check
        %p341 = pneg %p340
      $region46: #{_ognn_forward_impl.1} parent=43 // pred_check_branch
        %343 = sbr.rel (%p341) target = $region48
      $region47: #{_ognn_forward_impl.1} parent=43 // pred_region
        %v344 = vld [vmem:[%s1] sm:$0xf]
        %v345 = vld [vmem:[%s1 + $0x4] sm:$0xf]
        %v346 = vld [vmem:[%s1 + $0x8] sm:$0xf]
        %v347 = vld [vmem:[%s1 + $0xc] sm:$0xf]
        %v348 = vld [vmem:[%s1 + $0x10] sm:$0xf]
        %v349 = vld [vmem:[%s1 + $0x14] sm:$0xf]
        %v350 = vld [vmem:[%s1 + $0x18] sm:$0xf]
        %v351 = vld [vmem:[%s1 + $0x1c] sm:$0xf]
        %v352 = vld [vmem:[%s1 + $0x20] sm:$0xf]
        %v353 = vld [vmem:[%s1 + $0x24] sm:$0xf]
        %v354 = vld [vmem:[%s1 + $0x28] sm:$0xf]
        %v355 = vld [vmem:[%s1 + $0x2c] sm:$0xf]
        %v356 = vld [vmem:[%s1 + $0x30] sm:$0xf]
        %v357 = vld [vmem:[%s1 + $0x34] sm:$0xf]
        %v358 = vld [vmem:[%s1 + $0x38] sm:$0xf]
        %v359 = vld [vmem:[%s1 + $0x3c] sm:$0xf]
        %v376 = vunpack.c.l.b16 %v291
        %v377 = vunpack.c.l.b16 %v292
        %v378 = vunpack.c.l.b16 %v293
        %v379 = vunpack.c.l.b16 %v294
        %v380 = vunpack.c.l.b16 %v295
        %v381 = vunpack.c.l.b16 %v296
        %v382 = vunpack.c.l.b16 %v297
        %v383 = vunpack.c.l.b16 %v298
        %v384 = vunpack.c.l.b16 %v299
        %v385 = vunpack.c.l.b16 %v300
        %v386 = vunpack.c.l.b16 %v301
        %v387 = vunpack.c.l.b16 %v302
        %v388 = vunpack.c.l.b16 %v303
        %v389 = vunpack.c.l.b16 %v304
        %v390 = vunpack.c.l.b16 %v305
        %v391 = vunpack.c.l.b16 %v306
        %v392 = vpack.c.b16 %v377, %v376
        %v393 = vpack.c.b16 %v379, %v378
        %v394 = vpack.c.b16 %v381, %v380
        %v395 = vpack.c.b16 %v383, %v382
        %v396 = vpack.c.b16 %v385, %v384
        %v397 = vpack.c.b16 %v387, %v386
        %v398 = vpack.c.b16 %v389, %v388
        %v399 = vpack.c.b16 %v391, %v390
        %v424 = vunpack.c.l.b16 %v344
        %v425 = vunpack.c.l.b16 %v345
        %v426 = vunpack.c.l.b16 %v346
        %v427 = vunpack.c.l.b16 %v347
        %v428 = vunpack.c.l.b16 %v348
        %v429 = vunpack.c.l.b16 %v349
        %v430 = vunpack.c.l.b16 %v350
        %v431 = vunpack.c.l.b16 %v351
        %v432 = vunpack.c.l.b16 %v352
        %v433 = vunpack.c.l.b16 %v353
        %v434 = vunpack.c.l.b16 %v354
        %v435 = vunpack.c.l.b16 %v355
        %v436 = vunpack.c.l.b16 %v356
        %v437 = vunpack.c.l.b16 %v357
        %v438 = vunpack.c.l.b16 %v358
        %v439 = vunpack.c.l.b16 %v359
        %v440 = vpack.c.b16 %v425, %v424
        %v441 = vpack.c.b16 %v427, %v426
        %v442 = vpack.c.b16 %v429, %v428
        %v443 = vpack.c.b16 %v431, %v430
        %v444 = vpack.c.b16 %v433, %v432
        %v445 = vpack.c.b16 %v435, %v434
        %v446 = vpack.c.b16 %v437, %v436
        %v447 = vpack.c.b16 %v439, %v438
        %456 = vmatprep.subr.bf16.mxu0 0
        %457 = vmatpush1.bf16.msra.mxu0 %v447
        %458 = vmatprep.subr.bf16.mxu0 0
        %459 = vmatpush1.bf16.msra.mxu0 %v446
        %460 = vmatprep.subr.bf16.mxu0 0
        %461 = vmatpush1.bf16.msra.mxu0 %v445
        %462 = vmatprep.subr.bf16.mxu0 0
        %463 = vmatpush1.bf16.msra.mxu0 %v444
        %464 = vmatprep.subr.bf16.mxu0 0
        %465 = vmatpush1.bf16.msra.mxu0 %v443
        %466 = vmatprep.subr.bf16.mxu0 0
        %467 = vmatpush1.bf16.msra.mxu0 %v442
        %468 = vmatprep.subr.bf16.mxu0 0
        %469 = vmatpush1.bf16.msra.mxu0 %v441
        %470 = vmatprep.subr.bf16.mxu0 0
        %471 = vmatpush1.bf16.msra.mxu0 %v440
        %472 = vmatprep.subr.bf16.mxu0 0
        %473 = vmatpush2.bf16.msra.mxu0 0
        %474 = vmatprep.subr.bf16.mxu0 0
        %475 = vmatpush2.bf16.msra.mxu0 0
        %476 = vmatprep.subr.bf16.mxu0 0
        %477 = vmatpush2.bf16.msra.mxu0 0
        %478 = vmatprep.subr.bf16.mxu0 0
        %479 = vmatpush2.bf16.msra.mxu0 0
        %480 = vmatprep.subr.bf16.mxu0 0
        %481 = vmatpush2.bf16.msra.mxu0 0
        %482 = vmatprep.subr.bf16.mxu0 0
        %483 = vmatpush2.bf16.msra.mxu0 0
        %484 = vmatprep.subr.bf16.mxu0 0
        %485 = vmatpush2.bf16.msra.mxu0 0
        %486 = vmatprep.subr.bf16.mxu0 0
        %487 = vmatpush2.bf16.msra.mxu0 0
        %488 = vmatprep.mubr.bf16.mxu0 0
        %489 = vmatmul.mubr.bf16.gmra.mxu0 %v392
        %v490 = vpop.f32.mrf.mxu0
        %v491 = vadd.f32 0.0, %v490
        %v492 = vpop.f32.mrf.mxu0
        %v493 = vpop.f32.mrf.mxu0
        %v494 = vadd.f32 0.0, %v493
        %v495 = vpop.f32.mrf.mxu0
        %496 = vmatprep.mubr.bf16.mxu0 0
        %497 = vmatmul.mubr.bf16.gmra.mxu0 %v393
        %v498 = vpop.f32.mrf.mxu0
        %v499 = vadd.f32 0.0, %v498
        %v500 = vpop.f32.mrf.mxu0
        %v501 = vpop.f32.mrf.mxu0
        %v502 = vadd.f32 0.0, %v501
        %v503 = vpop.f32.mrf.mxu0
        %504 = vmatprep.mubr.bf16.mxu0 0
        %505 = vmatmul.mubr.bf16.gmra.mxu0 %v394
        %v506 = vpop.f32.mrf.mxu0
        %v507 = vadd.f32 0.0, %v506
        %v508 = vpop.f32.mrf.mxu0
        %v509 = vpop.f32.mrf.mxu0
        %v510 = vadd.f32 0.0, %v509
        %v511 = vpop.f32.mrf.mxu0
        %512 = vmatprep.mubr.bf16.mxu0 0
        %513 = vmatmul.mubr.bf16.gmra.mxu0 %v395
        %v514 = vpop.f32.mrf.mxu0
        %v515 = vadd.f32 0.0, %v514
        %v516 = vpop.f32.mrf.mxu0
        %v517 = vpop.f32.mrf.mxu0
        %v518 = vadd.f32 0.0, %v517
        %v519 = vpop.f32.mrf.mxu0
        %520 = vmatprep.mubr.bf16.mxu0 0
        %521 = vmatmul.mubr.bf16.gmra.mxu0 %v396
        %v522 = vpop.f32.mrf.mxu0
        %v523 = vadd.f32 0.0, %v522
        %v524 = vpop.f32.mrf.mxu0
        %v525 = vpop.f32.mrf.mxu0
        %v526 = vadd.f32 0.0, %v525
        %v527 = vpop.f32.mrf.mxu0
        %528 = vmatprep.mubr.bf16.mxu0 0
        %529 = vmatmul.mubr.bf16.gmra.mxu0 %v397
        %v530 = vpop.f32.mrf.mxu0
        %v531 = vadd.f32 0.0, %v530
        %v532 = vpop.f32.mrf.mxu0
        %v533 = vpop.f32.mrf.mxu0
        %v534 = vadd.f32 0.0, %v533
        %v535 = vpop.f32.mrf.mxu0
        %536 = vmatprep.mubr.bf16.mxu0 0
        %537 = vmatmul.mubr.bf16.gmra.mxu0 %v398
        %v538 = vpop.f32.mrf.mxu0
        %v539 = vadd.f32 0.0, %v538
        %v540 = vpop.f32.mrf.mxu0
        %v541 = vpop.f32.mrf.mxu0
        %v542 = vadd.f32 0.0, %v541
        %v543 = vpop.f32.mrf.mxu0
        %544 = vmatprep.mubr.bf16.mxu0 0
        %545 = vmatmul.mubr.bf16.gmra.mxu0 %v399
        %v546 = vpop.f32.mrf.mxu0
        %v547 = vadd.f32 0.0, %v546
        %v548 = vpop.f32.mrf.mxu0
        %v549 = vpop.f32.mrf.mxu0
        %v550 = vadd.f32 0.0, %v549
        %v551 = vpop.f32.mrf.mxu0
        %552 = vdwg.mxu0
        %v553 = vpack.c.bf16 %v494, %v491
        %v554 = vpack.c.bf16 %v502, %v499
        %v555 = vpack.c.bf16 %v510, %v507
        %v556 = vpack.c.bf16 %v518, %v515
        %v557 = vpack.c.bf16 %v526, %v523
        %v558 = vpack.c.bf16 %v534, %v531
        %v559 = vpack.c.bf16 %v542, %v539
        %v560 = vpack.c.bf16 %v550, %v547
        %v577 = vunpack.c.l.b16 %v307
        %v578 = vunpack.c.l.b16 %v308
        %v579 = vunpack.c.l.b16 %v309
        %v580 = vunpack.c.l.b16 %v310
        %v581 = vunpack.c.l.b16 %v311
        %v582 = vunpack.c.l.b16 %v312
        %v583 = vunpack.c.l.b16 %v313
        %v584 = vunpack.c.l.b16 %v314
        %v585 = vunpack.c.l.b16 %v315
        %v586 = vunpack.c.l.b16 %v316
        %v587 = vunpack.c.l.b16 %v317
        %v588 = vunpack.c.l.b16 %v318
        %v589 = vunpack.c.l.b16 %v319
        %v590 = vunpack.c.l.b16 %v320
        %v591 = vunpack.c.l.b16 %v321
        %v592 = vunpack.c.l.b16 %v322
        %v593 = vpack.c.b16 %v578, %v577
        %v594 = vpack.c.b16 %v580, %v579
        %v595 = vpack.c.b16 %v582, %v581
        %v596 = vpack.c.b16 %v584, %v583
        %v597 = vpack.c.b16 %v586, %v585
        %v598 = vpack.c.b16 %v588, %v587
        %v599 = vpack.c.b16 %v590, %v589
        %v600 = vpack.c.b16 %v592, %v591
        %609 = vmatprep.subr.bf16.mxu0 0
        %610 = vmatpush1.bf16.msra.mxu0 %v600
        %611 = vmatprep.subr.bf16.mxu0 0
        %612 = vmatpush1.bf16.msra.mxu0 %v599
        %613 = vmatprep.subr.bf16.mxu0 0
        %614 = vmatpush1.bf16.msra.mxu0 %v598
        %615 = vmatprep.subr.bf16.mxu0 0
        %616 = vmatpush1.bf16.msra.mxu0 %v597
        %617 = vmatprep.subr.bf16.mxu0 0
        %618 = vmatpush1.bf16.msra.mxu0 %v596
        %619 = vmatprep.subr.bf16.mxu0 0
        %620 = vmatpush1.bf16.msra.mxu0 %v595
        %621 = vmatprep.subr.bf16.mxu0 0
        %622 = vmatpush1.bf16.msra.mxu0 %v594
        %623 = vmatprep.subr.bf16.mxu0 0
        %624 = vmatpush1.bf16.msra.mxu0 %v593
        %625 = vmatprep.subr.bf16.mxu0 0
        %626 = vmatpush2.bf16.msra.mxu0 0
        %627 = vmatprep.subr.bf16.mxu0 0
        %628 = vmatpush2.bf16.msra.mxu0 0
        %629 = vmatprep.subr.bf16.mxu0 0
        %630 = vmatpush2.bf16.msra.mxu0 0
        %631 = vmatprep.subr.bf16.mxu0 0
        %632 = vmatpush2.bf16.msra.mxu0 0
        %633 = vmatprep.subr.bf16.mxu0 0
        %634 = vmatpush2.bf16.msra.mxu0 0
        %635 = vmatprep.subr.bf16.mxu0 0
        %636 = vmatpush2.bf16.msra.mxu0 0
        %637 = vmatprep.subr.bf16.mxu0 0
        %638 = vmatpush2.bf16.msra.mxu0 0
        %639 = vmatprep.subr.bf16.mxu0 0
        %640 = vmatpush2.bf16.msra.mxu0 0
        %641 = vmatprep.mubr.bf16.mxu0 0
        %642 = vmatmul.mubr.bf16.gmra.mxu0 %v553
        %v643 = vpop.f32.mrf.mxu0
        %v644 = vadd.f32 0.0, %v643
        %v645 = vpop.f32.mrf.mxu0
        %v646 = vpop.f32.mrf.mxu0
        %v647 = vadd.f32 0.0, %v646
        %v648 = vpop.f32.mrf.mxu0
        %649 = vmatprep.mubr.bf16.mxu0 0
        %650 = vmatmul.mubr.bf16.gmra.mxu0 %v554
        %v651 = vpop.f32.mrf.mxu0
        %v652 = vadd.f32 0.0, %v651
        %v653 = vpop.f32.mrf.mxu0
        %v654 = vpop.f32.mrf.mxu0
        %v655 = vadd.f32 0.0, %v654
        %v656 = vpop.f32.mrf.mxu0
        %657 = vmatprep.mubr.bf16.mxu0 0
        %658 = vmatmul.mubr.bf16.gmra.mxu0 %v555
        %v659 = vpop.f32.mrf.mxu0
        %v660 = vadd.f32 0.0, %v659
        %v661 = vpop.f32.mrf.mxu0
        %v662 = vpop.f32.mrf.mxu0
        %v663 = vadd.f32 0.0, %v662
        %v664 = vpop.f32.mrf.mxu0
        %665 = vmatprep.mubr.bf16.mxu0 0
        %666 = vmatmul.mubr.bf16.gmra.mxu0 %v556
        %v667 = vpop.f32.mrf.mxu0
        %v668 = vadd.f32 0.0, %v667
        %v669 = vpop.f32.mrf.mxu0
        %v670 = vpop.f32.mrf.mxu0
        %v671 = vadd.f32 0.0, %v670
        %v672 = vpop.f32.mrf.mxu0
        %673 = vmatprep.mubr.bf16.mxu0 0
        %674 = vmatmul.mubr.bf16.gmra.mxu0 %v557
        %v675 = vpop.f32.mrf.mxu0
        %v676 = vadd.f32 0.0, %v675
        %v677 = vpop.f32.mrf.mxu0
        %v678 = vpop.f32.mrf.mxu0
        %v679 = vadd.f32 0.0, %v678
        %v680 = vpop.f32.mrf.mxu0
        %681 = vmatprep.mubr.bf16.mxu0 0
        %682 = vmatmul.mubr.bf16.gmra.mxu0 %v558
        %v683 = vpop.f32.mrf.mxu0
        %v684 = vadd.f32 0.0, %v683
        %v685 = vpop.f32.mrf.mxu0
        %v686 = vpop.f32.mrf.mxu0
        %v687 = vadd.f32 0.0, %v686
        %v688 = vpop.f32.mrf.mxu0
        %689 = vmatprep.mubr.bf16.mxu0 0
        %690 = vmatmul.mubr.bf16.gmra.mxu0 %v559
        %v691 = vpop.f32.mrf.mxu0
        %v692 = vadd.f32 0.0, %v691
        %v693 = vpop.f32.mrf.mxu0
        %v694 = vpop.f32.mrf.mxu0
        %v695 = vadd.f32 0.0, %v694
        %v696 = vpop.f32.mrf.mxu0
        %697 = vmatprep.mubr.bf16.mxu0 0
        %698 = vmatmul.mubr.bf16.gmra.mxu0 %v560
        %v699 = vpop.f32.mrf.mxu0
        %v700 = vadd.f32 0.0, %v699
        %v701 = vpop.f32.mrf.mxu0
        %v702 = vpop.f32.mrf.mxu0
        %v703 = vadd.f32 0.0, %v702
        %v704 = vpop.f32.mrf.mxu0
        %705 = vdwg.mxu0
        %v706 = vlaneseq
        %v707 = vshrl.u32 %v706, 7
        %v708 = vsub.s32 0, %v707
        %v709 = vrot.slane %v339, %v708
        %v710 = vmul.f32 %v644, %v709
        %v711 = vmul.f32 %v647, %v709
        %v712 = vmul.f32 %v652, %v709
        %v713 = vmul.f32 %v655, %v709
        %v714 = vmul.f32 %v660, %v709
        %v715 = vmul.f32 %v663, %v709
        %v716 = vmul.f32 %v668, %v709
        %v717 = vmul.f32 %v671, %v709
        %v718 = vmul.f32 %v676, %v709
        %v719 = vmul.f32 %v679, %v709
        %v720 = vmul.f32 %v684, %v709
        %v721 = vmul.f32 %v687, %v709
        %v722 = vmul.f32 %v692, %v709
        %v723 = vmul.f32 %v695, %v709
        %v724 = vmul.f32 %v700, %v709
        %v725 = vmul.f32 %v703, %v709
        %v726 = vlaneseq
        %v727 = vshrl.u32 %v726, 7
        %v728 = vsub.s32 1, %v727
        %v729 = vrot.slane %v339, %v728
        %v730 = vadd.f32 %v710, %v729
        %v731 = vadd.f32 %v711, %v729
        %v732 = vadd.f32 %v712, %v729
        %v733 = vadd.f32 %v713, %v729
        %v734 = vadd.f32 %v714, %v729
        %v735 = vadd.f32 %v715, %v729
        %v736 = vadd.f32 %v716, %v729
        %v737 = vadd.f32 %v717, %v729
        %v738 = vadd.f32 %v718, %v729
        %v739 = vadd.f32 %v719, %v729
        %v740 = vadd.f32 %v720, %v729
        %v741 = vadd.f32 %v721, %v729
        %v742 = vadd.f32 %v722, %v729
        %v743 = vadd.f32 %v723, %v729
        %v744 = vadd.f32 %v724, %v729
        %v745 = vadd.f32 %v725, %v729
        %v746 = vmax.f32 %v730, 0.0
        %v747 = vmax.f32 %v731, 0.0
        %v748 = vmax.f32 %v732, 0.0
        %v749 = vmax.f32 %v733, 0.0
        %v750 = vmax.f32 %v734, 0.0
        %v751 = vmax.f32 %v735, 0.0
        %v752 = vmax.f32 %v736, 0.0
        %v753 = vmax.f32 %v737, 0.0
        %v754 = vmax.f32 %v738, 0.0
        %v755 = vmax.f32 %v739, 0.0
        %v756 = vmax.f32 %v740, 0.0
        %v757 = vmax.f32 %v741, 0.0
        %v758 = vmax.f32 %v742, 0.0
        %v759 = vmax.f32 %v743, 0.0
        %v760 = vmax.f32 %v744, 0.0
        %v761 = vmax.f32 %v745, 0.0
        %v762 = vpack.c.bf16 %v747, %v746
        %v763 = vpack.c.bf16 %v749, %v748
        %v764 = vpack.c.bf16 %v751, %v750
        %v765 = vpack.c.bf16 %v753, %v752
        %v766 = vpack.c.bf16 %v755, %v754
        %v767 = vpack.c.bf16 %v757, %v756
        %v768 = vpack.c.bf16 %v759, %v758
        %v769 = vpack.c.bf16 %v761, %v760
        %v778 = vunpack.c.l.b16 %v762
        %v779 = vunpack.c.h.b16 %v762
        %v780 = vunpack.c.l.b16 %v763
        %v781 = vunpack.c.h.b16 %v763
        %v782 = vunpack.c.l.b16 %v764
        %v783 = vunpack.c.h.b16 %v764
        %v784 = vunpack.c.l.b16 %v765
        %v785 = vunpack.c.h.b16 %v765
        %v786 = vunpack.c.l.b16 %v766
        %v787 = vunpack.c.h.b16 %v766
        %v788 = vunpack.c.l.b16 %v767
        %v789 = vunpack.c.h.b16 %v767
        %v790 = vunpack.c.l.b16 %v768
        %v791 = vunpack.c.h.b16 %v768
        %v792 = vunpack.c.l.b16 %v769
        %v793 = vunpack.c.h.b16 %v769
        %v794 = vpack.c.b16 %v778, %v778
        %v795 = vpack.c.b16 %v779, %v779
        %v796 = vpack.c.b16 %v780, %v780
        %v797 = vpack.c.b16 %v781, %v781
        %v798 = vpack.c.b16 %v782, %v782
        %v799 = vpack.c.b16 %v783, %v783
        %v800 = vpack.c.b16 %v784, %v784
        %v801 = vpack.c.b16 %v785, %v785
        %v802 = vpack.c.b16 %v786, %v786
        %v803 = vpack.c.b16 %v787, %v787
        %v804 = vpack.c.b16 %v788, %v788
        %v805 = vpack.c.b16 %v789, %v789
        %v806 = vpack.c.b16 %v790, %v790
        %v807 = vpack.c.b16 %v791, %v791
        %v808 = vpack.c.b16 %v792, %v792
        %v809 = vpack.c.b16 %v793, %v793
        %s826 = smul.addr %s287, 4
        %s827 = scalar_lea.vmem [#allocation2], %s826
        %828 = vst [vmem:[%s827] sm:$0xf] %v794
        %829 = vst [vmem:[%s827 + $0x4] sm:$0xf] %v795
        %830 = vst [vmem:[%s827 + $0x8] sm:$0xf] %v796
        %831 = vst [vmem:[%s827 + $0xc] sm:$0xf] %v797
        %832 = vst [vmem:[%s827 + $0x10] sm:$0xf] %v798
        %833 = vst [vmem:[%s827 + $0x14] sm:$0xf] %v799
        %834 = vst [vmem:[%s827 + $0x18] sm:$0xf] %v800
        %835 = vst [vmem:[%s827 + $0x1c] sm:$0xf] %v801
        %836 = vst [vmem:[%s827 + $0x20] sm:$0xf] %v802
        %837 = vst [vmem:[%s827 + $0x24] sm:$0xf] %v803
        %838 = vst [vmem:[%s827 + $0x28] sm:$0xf] %v804
        %839 = vst [vmem:[%s827 + $0x2c] sm:$0xf] %v805
        %840 = vst [vmem:[%s827 + $0x30] sm:$0xf] %v806
        %841 = vst [vmem:[%s827 + $0x34] sm:$0xf] %v807
        %842 = vst [vmem:[%s827 + $0x38] sm:$0xf] %v808
        %843 = vst [vmem:[%s827 + $0x3c] sm:$0xf] %v809
        %v860 = vunpack.c.l.b16 %v323
        %v861 = vunpack.c.l.b16 %v324
        %v862 = vunpack.c.l.b16 %v325
        %v863 = vunpack.c.l.b16 %v326
        %v864 = vunpack.c.l.b16 %v327
        %v865 = vunpack.c.l.b16 %v328
        %v866 = vunpack.c.l.b16 %v329
        %v867 = vunpack.c.l.b16 %v330
        %v868 = vunpack.c.l.b16 %v331
        %v869 = vunpack.c.l.b16 %v332
        %v870 = vunpack.c.l.b16 %v333
        %v871 = vunpack.c.l.b16 %v334
        %v872 = vunpack.c.l.b16 %v335
        %v873 = vunpack.c.l.b16 %v336
        %v874 = vunpack.c.l.b16 %v337
        %v875 = vunpack.c.l.b16 %v338
        %v876 = vpack.c.b16 %v861, %v860
        %v877 = vpack.c.b16 %v863, %v862
        %v878 = vpack.c.b16 %v865, %v864
        %v879 = vpack.c.b16 %v867, %v866
        %v880 = vpack.c.b16 %v869, %v868
        %v881 = vpack.c.b16 %v871, %v870
        %v882 = vpack.c.b16 %v873, %v872
        %v883 = vpack.c.b16 %v875, %v874
        %892 = vmatprep.subr.bf16.mxu0 0
        %893 = vmatpush1.bf16.msra.mxu0 %v883
        %894 = vmatprep.subr.bf16.mxu0 0
        %895 = vmatpush1.bf16.msra.mxu0 %v882
        %896 = vmatprep.subr.bf16.mxu0 0
        %897 = vmatpush1.bf16.msra.mxu0 %v881
        %898 = vmatprep.subr.bf16.mxu0 0
        %899 = vmatpush1.bf16.msra.mxu0 %v880
        %900 = vmatprep.subr.bf16.mxu0 0
        %901 = vmatpush1.bf16.msra.mxu0 %v879
        %902 = vmatprep.subr.bf16.mxu0 0
        %903 = vmatpush1.bf16.msra.mxu0 %v878
        %904 = vmatprep.subr.bf16.mxu0 0
        %905 = vmatpush1.bf16.msra.mxu0 %v877
        %906 = vmatprep.subr.bf16.mxu0 0
        %907 = vmatpush1.bf16.msra.mxu0 %v876
        %908 = vmatprep.subr.bf16.mxu0 0
        %909 = vmatpush2.bf16.msra.mxu0 0
        %910 = vmatprep.subr.bf16.mxu0 0
        %911 = vmatpush2.bf16.msra.mxu0 0
        %912 = vmatprep.subr.bf16.mxu0 0
        %913 = vmatpush2.bf16.msra.mxu0 0
        %914 = vmatprep.subr.bf16.mxu0 0
        %915 = vmatpush2.bf16.msra.mxu0 0
        %916 = vmatprep.subr.bf16.mxu0 0
        %917 = vmatpush2.bf16.msra.mxu0 0
        %918 = vmatprep.subr.bf16.mxu0 0
        %919 = vmatpush2.bf16.msra.mxu0 0
        %920 = vmatprep.subr.bf16.mxu0 0
        %921 = vmatpush2.bf16.msra.mxu0 0
        %922 = vmatprep.subr.bf16.mxu0 0
        %923 = vmatpush2.bf16.msra.mxu0 0
        %924 = vmatprep.mubr.bf16.mxu0 0
        %925 = vmatmul.mubr.bf16.gmra.mxu0 %v762
        %v926 = vpop.f32.mrf.mxu0
        %v927 = vadd.f32 0.0, %v926
        %v928 = vpop.f32.mrf.mxu0
        %v929 = vpop.f32.mrf.mxu0
        %v930 = vadd.f32 0.0, %v929
        %v931 = vpop.f32.mrf.mxu0
        %932 = vmatprep.mubr.bf16.mxu0 0
        %933 = vmatmul.mubr.bf16.gmra.mxu0 %v763
        %v934 = vpop.f32.mrf.mxu0
        %v935 = vadd.f32 0.0, %v934
        %v936 = vpop.f32.mrf.mxu0
        %v937 = vpop.f32.mrf.mxu0
        %v938 = vadd.f32 0.0, %v937
        %v939 = vpop.f32.mrf.mxu0
        %940 = vmatprep.mubr.bf16.mxu0 0
        %941 = vmatmul.mubr.bf16.gmra.mxu0 %v764
        %v942 = vpop.f32.mrf.mxu0
        %v943 = vadd.f32 0.0, %v942
        %v944 = vpop.f32.mrf.mxu0
        %v945 = vpop.f32.mrf.mxu0
        %v946 = vadd.f32 0.0, %v945
        %v947 = vpop.f32.mrf.mxu0
        %948 = vmatprep.mubr.bf16.mxu0 0
        %949 = vmatmul.mubr.bf16.gmra.mxu0 %v765
        %v950 = vpop.f32.mrf.mxu0
        %v951 = vadd.f32 0.0, %v950
        %v952 = vpop.f32.mrf.mxu0
        %v953 = vpop.f32.mrf.mxu0
        %v954 = vadd.f32 0.0, %v953
        %v955 = vpop.f32.mrf.mxu0
        %956 = vmatprep.mubr.bf16.mxu0 0
        %957 = vmatmul.mubr.bf16.gmra.mxu0 %v766
        %v958 = vpop.f32.mrf.mxu0
        %v959 = vadd.f32 0.0, %v958
        %v960 = vpop.f32.mrf.mxu0
        %v961 = vpop.f32.mrf.mxu0
        %v962 = vadd.f32 0.0, %v961
        %v963 = vpop.f32.mrf.mxu0
        %964 = vmatprep.mubr.bf16.mxu0 0
        %965 = vmatmul.mubr.bf16.gmra.mxu0 %v767
        %v966 = vpop.f32.mrf.mxu0
        %v967 = vadd.f32 0.0, %v966
        %v968 = vpop.f32.mrf.mxu0
        %v969 = vpop.f32.mrf.mxu0
        %v970 = vadd.f32 0.0, %v969
        %v971 = vpop.f32.mrf.mxu0
        %972 = vmatprep.mubr.bf16.mxu0 0
        %973 = vmatmul.mubr.bf16.gmra.mxu0 %v768
        %v974 = vpop.f32.mrf.mxu0
        %v975 = vadd.f32 0.0, %v974
        %v976 = vpop.f32.mrf.mxu0
        %v977 = vpop.f32.mrf.mxu0
        %v978 = vadd.f32 0.0, %v977
        %v979 = vpop.f32.mrf.mxu0
        %980 = vmatprep.mubr.bf16.mxu0 0
        %981 = vmatmul.mubr.bf16.gmra.mxu0 %v769
        %v982 = vpop.f32.mrf.mxu0
        %v983 = vadd.f32 0.0, %v982
        %v984 = vpop.f32.mrf.mxu0
        %v985 = vpop.f32.mrf.mxu0
        %v986 = vadd.f32 0.0, %v985
        %v987 = vpop.f32.mrf.mxu0
        %988 = vdwg.mxu0
        %s989 = scalar_lea.vmem [#allocation3], %s286
        %990 = vst [vmem:[%s989] sm:$0xff] %v927
        %991 = vst [vmem:[%s989 + $0x8] sm:$0xff] %v930
        %992 = vst [vmem:[%s989 + $0x10] sm:$0xff] %v935
        %993 = vst [vmem:[%s989 + $0x18] sm:$0xff] %v938
        %994 = vst [vmem:[%s989 + $0x20] sm:$0xff] %v943
        %995 = vst [vmem:[%s989 + $0x28] sm:$0xff] %v946
        %996 = vst [vmem:[%s989 + $0x30] sm:$0xff] %v951
        %997 = vst [vmem:[%s989 + $0x38] sm:$0xff] %v954
        %998 = vst [vmem:[%s989 + $0x40] sm:$0xff] %v959
        %999 = vst [vmem:[%s989 + $0x48] sm:$0xff] %v962
        %1000 = vst [vmem:[%s989 + $0x50] sm:$0xff] %v967
        %1001 = vst [vmem:[%s989 + $0x58] sm:$0xff] %v970
        %1002 = vst [vmem:[%s989 + $0x60] sm:$0xff] %v975
        %1003 = vst [vmem:[%s989 + $0x68] sm:$0xff] %v978
        %1004 = vst [vmem:[%s989 + $0x70] sm:$0xff] %v983
        %1005 = vst [vmem:[%s989 + $0x78] sm:$0xff] %v986
        %1006 = vst [vmem:[%s283] sm:$0xff] %v927
        %1007 = vst [vmem:[%s283 + $0x8] sm:$0xff] %v930
        %1008 = vst [vmem:[%s283 + $0x10] sm:$0xff] %v935
        %1009 = vst [vmem:[%s283 + $0x18] sm:$0xff] %v938
        %1010 = vst [vmem:[%s283 + $0x20] sm:$0xff] %v943
        %1011 = vst [vmem:[%s283 + $0x28] sm:$0xff] %v946
        %1012 = vst [vmem:[%s283 + $0x30] sm:$0xff] %v951
        %1013 = vst [vmem:[%s283 + $0x38] sm:$0xff] %v954
        %1014 = vst [vmem:[%s283 + $0x40] sm:$0xff] %v959
        %1015 = vst [vmem:[%s283 + $0x48] sm:$0xff] %v962
        %1016 = vst [vmem:[%s283 + $0x50] sm:$0xff] %v967
        %1017 = vst [vmem:[%s283 + $0x58] sm:$0xff] %v970
        %1018 = vst [vmem:[%s283 + $0x60] sm:$0xff] %v975
        %1019 = vst [vmem:[%s283 + $0x68] sm:$0xff] %v978
        %1020 = vst [vmem:[%s283 + $0x70] sm:$0xff] %v983
        %1021 = vst [vmem:[%s283 + $0x78] sm:$0xff] %v986
      $region48: #{_ognn_forward_impl.1} parent=43 // pred_fallthru
        _
      %p1022 = scmp.eq.s32.totalorder %s21, 1
      // Predicated region
      $region49: #{_ognn_forward_impl.1} parent=43 // pred_check
        %p1023 = pneg %p1022
      $region50: #{_ognn_forward_impl.1} parent=43 // pred_check_branch
        %1025 = sbr.rel (%p1023) target = $region52
      $region51: #{_ognn_forward_impl.1} parent=43 // pred_region
        %s1026 = smul.addr %s287, 4
        %s1027 = scalar_lea.vmem [#allocation2], %s1026
        %v1028 = vld [vmem:[%s1027] sm:$0xf]
        %v1029 = vld [vmem:[%s1027 + $0x4] sm:$0xf]
        %v1030 = vld [vmem:[%s1027 + $0x8] sm:$0xf]
        %v1031 = vld [vmem:[%s1027 + $0xc] sm:$0xf]
        %v1032 = vld [vmem:[%s1027 + $0x10] sm:$0xf]
        %v1033 = vld [vmem:[%s1027 + $0x14] sm:$0xf]
        %v1034 = vld [vmem:[%s1027 + $0x18] sm:$0xf]
        %v1035 = vld [vmem:[%s1027 + $0x1c] sm:$0xf]
        %v1036 = vld [vmem:[%s1027 + $0x20] sm:$0xf]
        %v1037 = vld [vmem:[%s1027 + $0x24] sm:$0xf]
        %v1038 = vld [vmem:[%s1027 + $0x28] sm:$0xf]
        %v1039 = vld [vmem:[%s1027 + $0x2c] sm:$0xf]
        %v1040 = vld [vmem:[%s1027 + $0x30] sm:$0xf]
        %v1041 = vld [vmem:[%s1027 + $0x34] sm:$0xf]
        %v1042 = vld [vmem:[%s1027 + $0x38] sm:$0xf]
        %v1043 = vld [vmem:[%s1027 + $0x3c] sm:$0xf]
        %v1044 = vunpack.c.l.bf16 %v1028
        %v1045 = vunpack.c.l.bf16 %v1029
        %v1046 = vunpack.c.l.bf16 %v1030
        %v1047 = vunpack.c.l.bf16 %v1031
        %v1048 = vunpack.c.l.bf16 %v1032
        %v1049 = vunpack.c.l.bf16 %v1033
        %v1050 = vunpack.c.l.bf16 %v1034
        %v1051 = vunpack.c.l.bf16 %v1035
        %v1052 = vunpack.c.l.bf16 %v1036
        %v1053 = vunpack.c.l.bf16 %v1037
        %v1054 = vunpack.c.l.bf16 %v1038
        %v1055 = vunpack.c.l.bf16 %v1039
        %v1056 = vunpack.c.l.bf16 %v1040
        %v1057 = vunpack.c.l.bf16 %v1041
        %v1058 = vunpack.c.l.bf16 %v1042
        %v1059 = vunpack.c.l.bf16 %v1043
        %v1060 = vld [vmem:[#allocation2] sm:$0xf]
        %v1061 = vld [vmem:[#allocation2 + $0x4] sm:$0xf]
        %v1062 = vld [vmem:[#allocation2 + $0x8] sm:$0xf]
        %v1063 = vld [vmem:[#allocation2 + $0xc] sm:$0xf]
        %v1064 = vld [vmem:[#allocation2 + $0x10] sm:$0xf]
        %v1065 = vld [vmem:[#allocation2 + $0x14] sm:$0xf]
        %v1066 = vld [vmem:[#allocation2 + $0x18] sm:$0xf]
        %v1067 = vld [vmem:[#allocation2 + $0x1c] sm:$0xf]
        %v1068 = vld [vmem:[#allocation2 + $0x20] sm:$0xf]
        %v1069 = vld [vmem:[#allocation2 + $0x24] sm:$0xf]
        %v1070 = vld [vmem:[#allocation2 + $0x28] sm:$0xf]
        %v1071 = vld [vmem:[#allocation2 + $0x2c] sm:$0xf]
        %v1072 = vld [vmem:[#allocation2 + $0x30] sm:$0xf]
        %v1073 = vld [vmem:[#allocation2 + $0x34] sm:$0xf]
        %v1074 = vld [vmem:[#allocation2 + $0x38] sm:$0xf]
        %v1075 = vld [vmem:[#allocation2 + $0x3c] sm:$0xf]
        %v1092 = vunpack.c.l.b16 %v291
        %v1093 = vunpack.c.l.b16 %v292
        %v1094 = vunpack.c.l.b16 %v293
        %v1095 = vunpack.c.l.b16 %v294
        %v1096 = vunpack.c.l.b16 %v295
        %v1097 = vunpack.c.l.b16 %v296
        %v1098 = vunpack.c.l.b16 %v297
        %v1099 = vunpack.c.l.b16 %v298
        %v1100 = vunpack.c.l.b16 %v299
        %v1101 = vunpack.c.l.b16 %v300
        %v1102 = vunpack.c.l.b16 %v301
        %v1103 = vunpack.c.l.b16 %v302
        %v1104 = vunpack.c.l.b16 %v303
        %v1105 = vunpack.c.l.b16 %v304
        %v1106 = vunpack.c.l.b16 %v305
        %v1107 = vunpack.c.l.b16 %v306
        %v1108 = vpack.c.b16 %v1093, %v1092
        %v1109 = vpack.c.b16 %v1095, %v1094
        %v1110 = vpack.c.b16 %v1097, %v1096
        %v1111 = vpack.c.b16 %v1099, %v1098
        %v1112 = vpack.c.b16 %v1101, %v1100
        %v1113 = vpack.c.b16 %v1103, %v1102
        %v1114 = vpack.c.b16 %v1105, %v1104
        %v1115 = vpack.c.b16 %v1107, %v1106
        %v1140 = vunpack.c.l.b16 %v1060
        %v1141 = vunpack.c.l.b16 %v1061
        %v1142 = vunpack.c.l.b16 %v1062
        %v1143 = vunpack.c.l.b16 %v1063
        %v1144 = vunpack.c.l.b16 %v1064
        %v1145 = vunpack.c.l.b16 %v1065
        %v1146 = vunpack.c.l.b16 %v1066
        %v1147 = vunpack.c.l.b16 %v1067
        %v1148 = vunpack.c.l.b16 %v1068
        %v1149 = vunpack.c.l.b16 %v1069
        %v1150 = vunpack.c.l.b16 %v1070
        %v1151 = vunpack.c.l.b16 %v1071
        %v1152 = vunpack.c.l.b16 %v1072
        %v1153 = vunpack.c.l.b16 %v1073
        %v1154 = vunpack.c.l.b16 %v1074
        %v1155 = vunpack.c.l.b16 %v1075
        %v1156 = vpack.c.b16 %v1141, %v1140
        %v1157 = vpack.c.b16 %v1143, %v1142
        %v1158 = vpack.c.b16 %v1145, %v1144
        %v1159 = vpack.c.b16 %v1147, %v1146
        %v1160 = vpack.c.b16 %v1149, %v1148
        %v1161 = vpack.c.b16 %v1151, %v1150
        %v1162 = vpack.c.b16 %v1153, %v1152
        %v1163 = vpack.c.b16 %v1155, %v1154
        %1172 = vmatprep.subr.bf16.mxu0 0
        %1173 = vmatpush1.bf16.msra.mxu0 %v1163
        %1174 = vmatprep.subr.bf16.mxu0 0
        %1175 = vmatpush1.bf16.msra.mxu0 %v1162
        %1176 = vmatprep.subr.bf16.mxu0 0
        %1177 = vmatpush1.bf16.msra.mxu0 %v1161
        %1178 = vmatprep.subr.bf16.mxu0 0
        %1179 = vmatpush1.bf16.msra.mxu0 %v1160
        %1180 = vmatprep.subr.bf16.mxu0 0
        %1181 = vmatpush1.bf16.msra.mxu0 %v1159
        %1182 = vmatprep.subr.bf16.mxu0 0
        %1183 = vmatpush1.bf16.msra.mxu0 %v1158
        %1184 = vmatprep.subr.bf16.mxu0 0
        %1185 = vmatpush1.bf16.msra.mxu0 %v1157
        %1186 = vmatprep.subr.bf16.mxu0 0
        %1187 = vmatpush1.bf16.msra.mxu0 %v1156
        %1188 = vmatprep.subr.bf16.mxu0 0
        %1189 = vmatpush2.bf16.msra.mxu0 0
        %1190 = vmatprep.subr.bf16.mxu0 0
        %1191 = vmatpush2.bf16.msra.mxu0 0
        %1192 = vmatprep.subr.bf16.mxu0 0
        %1193 = vmatpush2.bf16.msra.mxu0 0
        %1194 = vmatprep.subr.bf16.mxu0 0
        %1195 = vmatpush2.bf16.msra.mxu0 0
        %1196 = vmatprep.subr.bf16.mxu0 0
        %1197 = vmatpush2.bf16.msra.mxu0 0
        %1198 = vmatprep.subr.bf16.mxu0 0
        %1199 = vmatpush2.bf16.msra.mxu0 0
        %1200 = vmatprep.subr.bf16.mxu0 0
        %1201 = vmatpush2.bf16.msra.mxu0 0
        %1202 = vmatprep.subr.bf16.mxu0 0
        %1203 = vmatpush2.bf16.msra.mxu0 0
        %1204 = vmatprep.mubr.bf16.mxu0 0
        %1205 = vmatmul.mubr.bf16.gmra.mxu0 %v1108
        %v1206 = vpop.f32.mrf.mxu0
        %v1207 = vadd.f32 0.0, %v1206
        %v1208 = vpop.f32.mrf.mxu0
        %v1209 = vpop.f32.mrf.mxu0
        %v1210 = vadd.f32 0.0, %v1209
        %v1211 = vpop.f32.mrf.mxu0
        %1212 = vmatprep.mubr.bf16.mxu0 0
        %1213 = vmatmul.mubr.bf16.gmra.mxu0 %v1109
        %v1214 = vpop.f32.mrf.mxu0
        %v1215 = vadd.f32 0.0, %v1214
        %v1216 = vpop.f32.mrf.mxu0
        %v1217 = vpop.f32.mrf.mxu0
        %v1218 = vadd.f32 0.0, %v1217
        %v1219 = vpop.f32.mrf.mxu0
        %1220 = vmatprep.mubr.bf16.mxu0 0
        %1221 = vmatmul.mubr.bf16.gmra.mxu0 %v1110
        %v1222 = vpop.f32.mrf.mxu0
        %v1223 = vadd.f32 0.0, %v1222
        %v1224 = vpop.f32.mrf.mxu0
        %v1225 = vpop.f32.mrf.mxu0
        %v1226 = vadd.f32 0.0, %v1225
        %v1227 = vpop.f32.mrf.mxu0
        %1228 = vmatprep.mubr.bf16.mxu0 0
        %1229 = vmatmul.mubr.bf16.gmra.mxu0 %v1111
        %v1230 = vpop.f32.mrf.mxu0
        %v1231 = vadd.f32 0.0, %v1230
        %v1232 = vpop.f32.mrf.mxu0
        %v1233 = vpop.f32.mrf.mxu0
        %v1234 = vadd.f32 0.0, %v1233
        %v1235 = vpop.f32.mrf.mxu0
        %1236 = vmatprep.mubr.bf16.mxu0 0
        %1237 = vmatmul.mubr.bf16.gmra.mxu0 %v1112
        %v1238 = vpop.f32.mrf.mxu0
        %v1239 = vadd.f32 0.0, %v1238
        %v1240 = vpop.f32.mrf.mxu0
        %v1241 = vpop.f32.mrf.mxu0
        %v1242 = vadd.f32 0.0, %v1241
        %v1243 = vpop.f32.mrf.mxu0
        %1244 = vmatprep.mubr.bf16.mxu0 0
        %1245 = vmatmul.mubr.bf16.gmra.mxu0 %v1113
        %v1246 = vpop.f32.mrf.mxu0
        %v1247 = vadd.f32 0.0, %v1246
        %v1248 = vpop.f32.mrf.mxu0
        %v1249 = vpop.f32.mrf.mxu0
        %v1250 = vadd.f32 0.0, %v1249
        %v1251 = vpop.f32.mrf.mxu0
        %1252 = vmatprep.mubr.bf16.mxu0 0
        %1253 = vmatmul.mubr.bf16.gmra.mxu0 %v1114
        %v1254 = vpop.f32.mrf.mxu0
        %v1255 = vadd.f32 0.0, %v1254
        %v1256 = vpop.f32.mrf.mxu0
        %v1257 = vpop.f32.mrf.mxu0
        %v1258 = vadd.f32 0.0, %v1257
        %v1259 = vpop.f32.mrf.mxu0
        %1260 = vmatprep.mubr.bf16.mxu0 0
        %1261 = vmatmul.mubr.bf16.gmra.mxu0 %v1115
        %v1262 = vpop.f32.mrf.mxu0
        %v1263 = vadd.f32 0.0, %v1262
        %v1264 = vpop.f32.mrf.mxu0
        %v1265 = vpop.f32.mrf.mxu0
        %v1266 = vadd.f32 0.0, %v1265
        %v1267 = vpop.f32.mrf.mxu0
        %1268 = vdwg.mxu0
        %v1269 = vpack.c.bf16 %v1210, %v1207
        %v1270 = vpack.c.bf16 %v1218, %v1215
        %v1271 = vpack.c.bf16 %v1226, %v1223
        %v1272 = vpack.c.bf16 %v1234, %v1231
        %v1273 = vpack.c.bf16 %v1242, %v1239
        %v1274 = vpack.c.bf16 %v1250, %v1247
        %v1275 = vpack.c.bf16 %v1258, %v1255
        %v1276 = vpack.c.bf16 %v1266, %v1263
        %v1293 = vunpack.c.l.b16 %v307
        %v1294 = vunpack.c.l.b16 %v308
        %v1295 = vunpack.c.l.b16 %v309
        %v1296 = vunpack.c.l.b16 %v310
        %v1297 = vunpack.c.l.b16 %v311
        %v1298 = vunpack.c.l.b16 %v312
        %v1299 = vunpack.c.l.b16 %v313
        %v1300 = vunpack.c.l.b16 %v314
        %v1301 = vunpack.c.l.b16 %v315
        %v1302 = vunpack.c.l.b16 %v316
        %v1303 = vunpack.c.l.b16 %v317
        %v1304 = vunpack.c.l.b16 %v318
        %v1305 = vunpack.c.l.b16 %v319
        %v1306 = vunpack.c.l.b16 %v320
        %v1307 = vunpack.c.l.b16 %v321
        %v1308 = vunpack.c.l.b16 %v322
        %v1309 = vpack.c.b16 %v1294, %v1293
        %v1310 = vpack.c.b16 %v1296, %v1295
        %v1311 = vpack.c.b16 %v1298, %v1297
        %v1312 = vpack.c.b16 %v1300, %v1299
        %v1313 = vpack.c.b16 %v1302, %v1301
        %v1314 = vpack.c.b16 %v1304, %v1303
        %v1315 = vpack.c.b16 %v1306, %v1305
        %v1316 = vpack.c.b16 %v1308, %v1307
        %1325 = vmatprep.subr.bf16.mxu0 0
        %1326 = vmatpush1.bf16.msra.mxu0 %v1316
        %1327 = vmatprep.subr.bf16.mxu0 0
        %1328 = vmatpush1.bf16.msra.mxu0 %v1315
        %1329 = vmatprep.subr.bf16.mxu0 0
        %1330 = vmatpush1.bf16.msra.mxu0 %v1314
        %1331 = vmatprep.subr.bf16.mxu0 0
        %1332 = vmatpush1.bf16.msra.mxu0 %v1313
        %1333 = vmatprep.subr.bf16.mxu0 0
        %1334 = vmatpush1.bf16.msra.mxu0 %v1312
        %1335 = vmatprep.subr.bf16.mxu0 0
        %1336 = vmatpush1.bf16.msra.mxu0 %v1311
        %1337 = vmatprep.subr.bf16.mxu0 0
        %1338 = vmatpush1.bf16.msra.mxu0 %v1310
        %1339 = vmatprep.subr.bf16.mxu0 0
        %1340 = vmatpush1.bf16.msra.mxu0 %v1309
        %1341 = vmatprep.subr.bf16.mxu0 0
        %1342 = vmatpush2.bf16.msra.mxu0 0
        %1343 = vmatprep.subr.bf16.mxu0 0
        %1344 = vmatpush2.bf16.msra.mxu0 0
        %1345 = vmatprep.subr.bf16.mxu0 0
        %1346 = vmatpush2.bf16.msra.mxu0 0
        %1347 = vmatprep.subr.bf16.mxu0 0
        %1348 = vmatpush2.bf16.msra.mxu0 0
        %1349 = vmatprep.subr.bf16.mxu0 0
        %1350 = vmatpush2.bf16.msra.mxu0 0
        %1351 = vmatprep.subr.bf16.mxu0 0
        %1352 = vmatpush2.bf16.msra.mxu0 0
        %1353 = vmatprep.subr.bf16.mxu0 0
        %1354 = vmatpush2.bf16.msra.mxu0 0
        %1355 = vmatprep.subr.bf16.mxu0 0
        %1356 = vmatpush2.bf16.msra.mxu0 0
        %1357 = vmatprep.mubr.bf16.mxu0 0
        %1358 = vmatmul.mubr.bf16.gmra.mxu0 %v1269
        %v1359 = vpop.f32.mrf.mxu0
        %v1360 = vadd.f32 0.0, %v1359
        %v1361 = vpop.f32.mrf.mxu0
        %v1362 = vpop.f32.mrf.mxu0
        %v1363 = vadd.f32 0.0, %v1362
        %v1364 = vpop.f32.mrf.mxu0
        %1365 = vmatprep.mubr.bf16.mxu0 0
        %1366 = vmatmul.mubr.bf16.gmra.mxu0 %v1270
        %v1367 = vpop.f32.mrf.mxu0
        %v1368 = vadd.f32 0.0, %v1367
        %v1369 = vpop.f32.mrf.mxu0
        %v1370 = vpop.f32.mrf.mxu0
        %v1371 = vadd.f32 0.0, %v1370
        %v1372 = vpop.f32.mrf.mxu0
        %1373 = vmatprep.mubr.bf16.mxu0 0
        %1374 = vmatmul.mubr.bf16.gmra.mxu0 %v1271
        %v1375 = vpop.f32.mrf.mxu0
        %v1376 = vadd.f32 0.0, %v1375
        %v1377 = vpop.f32.mrf.mxu0
        %v1378 = vpop.f32.mrf.mxu0
        %v1379 = vadd.f32 0.0, %v1378
        %v1380 = vpop.f32.mrf.mxu0
        %1381 = vmatprep.mubr.bf16.mxu0 0
        %1382 = vmatmul.mubr.bf16.gmra.mxu0 %v1272
        %v1383 = vpop.f32.mrf.mxu0
        %v1384 = vadd.f32 0.0, %v1383
        %v1385 = vpop.f32.mrf.mxu0
        %v1386 = vpop.f32.mrf.mxu0
        %v1387 = vadd.f32 0.0, %v1386
        %v1388 = vpop.f32.mrf.mxu0
        %1389 = vmatprep.mubr.bf16.mxu0 0
        %1390 = vmatmul.mubr.bf16.gmra.mxu0 %v1273
        %v1391 = vpop.f32.mrf.mxu0
        %v1392 = vadd.f32 0.0, %v1391
        %v1393 = vpop.f32.mrf.mxu0
        %v1394 = vpop.f32.mrf.mxu0
        %v1395 = vadd.f32 0.0, %v1394
        %v1396 = vpop.f32.mrf.mxu0
        %1397 = vmatprep.mubr.bf16.mxu0 0
        %1398 = vmatmul.mubr.bf16.gmra.mxu0 %v1274
        %v1399 = vpop.f32.mrf.mxu0
        %v1400 = vadd.f32 0.0, %v1399
        %v1401 = vpop.f32.mrf.mxu0
        %v1402 = vpop.f32.mrf.mxu0
        %v1403 = vadd.f32 0.0, %v1402
        %v1404 = vpop.f32.mrf.mxu0
        %1405 = vmatprep.mubr.bf16.mxu0 0
        %1406 = vmatmul.mubr.bf16.gmra.mxu0 %v1275
        %v1407 = vpop.f32.mrf.mxu0
        %v1408 = vadd.f32 0.0, %v1407
        %v1409 = vpop.f32.mrf.mxu0
        %v1410 = vpop.f32.mrf.mxu0
        %v1411 = vadd.f32 0.0, %v1410
        %v1412 = vpop.f32.mrf.mxu0
        %1413 = vmatprep.mubr.bf16.mxu0 0
        %1414 = vmatmul.mubr.bf16.gmra.mxu0 %v1276
        %v1415 = vpop.f32.mrf.mxu0
        %v1416 = vadd.f32 0.0, %v1415
        %v1417 = vpop.f32.mrf.mxu0
        %v1418 = vpop.f32.mrf.mxu0
        %v1419 = vadd.f32 0.0, %v1418
        %v1420 = vpop.f32.mrf.mxu0
        %1421 = vdwg.mxu0
        %v1422 = vlaneseq
        %v1423 = vshrl.u32 %v1422, 7
        %v1424 = vsub.s32 2, %v1423
        %v1425 = vrot.slane %v339, %v1424
        %v1426 = vmul.f32 %v1360, %v1425
        %v1427 = vmul.f32 %v1363, %v1425
        %v1428 = vmul.f32 %v1368, %v1425
        %v1429 = vmul.f32 %v1371, %v1425
        %v1430 = vmul.f32 %v1376, %v1425
        %v1431 = vmul.f32 %v1379, %v1425
        %v1432 = vmul.f32 %v1384, %v1425
        %v1433 = vmul.f32 %v1387, %v1425
        %v1434 = vmul.f32 %v1392, %v1425
        %v1435 = vmul.f32 %v1395, %v1425
        %v1436 = vmul.f32 %v1400, %v1425
        %v1437 = vmul.f32 %v1403, %v1425
        %v1438 = vmul.f32 %v1408, %v1425
        %v1439 = vmul.f32 %v1411, %v1425
        %v1440 = vmul.f32 %v1416, %v1425
        %v1441 = vmul.f32 %v1419, %v1425
        %v1442 = vlaneseq
        %v1443 = vshrl.u32 %v1442, 7
        %v1444 = vsub.s32 3, %v1443
        %v1445 = vrot.slane %v339, %v1444
        %v1446 = vadd.f32 %v1426, %v1445
        %v1447 = vadd.f32 %v1427, %v1445
        %v1448 = vadd.f32 %v1428, %v1445
        %v1449 = vadd.f32 %v1429, %v1445
        %v1450 = vadd.f32 %v1430, %v1445
        %v1451 = vadd.f32 %v1431, %v1445
        %v1452 = vadd.f32 %v1432, %v1445
        %v1453 = vadd.f32 %v1433, %v1445
        %v1454 = vadd.f32 %v1434, %v1445
        %v1455 = vadd.f32 %v1435, %v1445
        %v1456 = vadd.f32 %v1436, %v1445
        %v1457 = vadd.f32 %v1437, %v1445
        %v1458 = vadd.f32 %v1438, %v1445
        %v1459 = vadd.f32 %v1439, %v1445
        %v1460 = vadd.f32 %v1440, %v1445
        %v1461 = vadd.f32 %v1441, %v1445
        %v1462 = vmax.f32 %v1446, 0.0
        %v1463 = vmax.f32 %v1447, 0.0
        %v1464 = vmax.f32 %v1448, 0.0
        %v1465 = vmax.f32 %v1449, 0.0
        %v1466 = vmax.f32 %v1450, 0.0
        %v1467 = vmax.f32 %v1451, 0.0
        %v1468 = vmax.f32 %v1452, 0.0
        %v1469 = vmax.f32 %v1453, 0.0
        %v1470 = vmax.f32 %v1454, 0.0
        %v1471 = vmax.f32 %v1455, 0.0
        %v1472 = vmax.f32 %v1456, 0.0
        %v1473 = vmax.f32 %v1457, 0.0
        %v1474 = vmax.f32 %v1458, 0.0
        %v1475 = vmax.f32 %v1459, 0.0
        %v1476 = vmax.f32 %v1460, 0.0
        %v1477 = vmax.f32 %v1461, 0.0
        %v1478 = vadd.f32 %v1462, %v1044
        %v1479 = vadd.f32 %v1463, %v1045
        %v1480 = vadd.f32 %v1464, %v1046
        %v1481 = vadd.f32 %v1465, %v1047
        %v1482 = vadd.f32 %v1466, %v1048
        %v1483 = vadd.f32 %v1467, %v1049
        %v1484 = vadd.f32 %v1468, %v1050
        %v1485 = vadd.f32 %v1469, %v1051
        %v1486 = vadd.f32 %v1470, %v1052
        %v1487 = vadd.f32 %v1471, %v1053
        %v1488 = vadd.f32 %v1472, %v1054
        %v1489 = vadd.f32 %v1473, %v1055
        %v1490 = vadd.f32 %v1474, %v1056
        %v1491 = vadd.f32 %v1475, %v1057
        %v1492 = vadd.f32 %v1476, %v1058
        %v1493 = vadd.f32 %v1477, %v1059
        %v1494 = vpack.c.bf16 %v1479, %v1478
        %v1495 = vpack.c.bf16 %v1481, %v1480
        %v1496 = vpack.c.bf16 %v1483, %v1482
        %v1497 = vpack.c.bf16 %v1485, %v1484
        %v1498 = vpack.c.bf16 %v1487, %v1486
        %v1499 = vpack.c.bf16 %v1489, %v1488
        %v1500 = vpack.c.bf16 %v1491, %v1490
        %v1501 = vpack.c.bf16 %v1493, %v1492
        %v1510 = vunpack.c.l.b16 %v1494
        %v1511 = vunpack.c.h.b16 %v1494
        %v1512 = vunpack.c.l.b16 %v1495
        %v1513 = vunpack.c.h.b16 %v1495
        %v1514 = vunpack.c.l.b16 %v1496
        %v1515 = vunpack.c.h.b16 %v1496
        %v1516 = vunpack.c.l.b16 %v1497
        %v1517 = vunpack.c.h.b16 %v1497
        %v1518 = vunpack.c.l.b16 %v1498
        %v1519 = vunpack.c.h.b16 %v1498
        %v1520 = vunpack.c.l.b16 %v1499
        %v1521 = vunpack.c.h.b16 %v1499
        %v1522 = vunpack.c.l.b16 %v1500
        %v1523 = vunpack.c.h.b16 %v1500
        %v1524 = vunpack.c.l.b16 %v1501
        %v1525 = vunpack.c.h.b16 %v1501
        %v1526 = vpack.c.b16 %v1510, %v1510
        %v1527 = vpack.c.b16 %v1511, %v1511
        %v1528 = vpack.c.b16 %v1512, %v1512
        %v1529 = vpack.c.b16 %v1513, %v1513
        %v1530 = vpack.c.b16 %v1514, %v1514
        %v1531 = vpack.c.b16 %v1515, %v1515
        %v1532 = vpack.c.b16 %v1516, %v1516
        %v1533 = vpack.c.b16 %v1517, %v1517
        %v1534 = vpack.c.b16 %v1518, %v1518
        %v1535 = vpack.c.b16 %v1519, %v1519
        %v1536 = vpack.c.b16 %v1520, %v1520
        %v1537 = vpack.c.b16 %v1521, %v1521
        %v1538 = vpack.c.b16 %v1522, %v1522
        %v1539 = vpack.c.b16 %v1523, %v1523
        %v1540 = vpack.c.b16 %v1524, %v1524
        %v1541 = vpack.c.b16 %v1525, %v1525
        %s1558 = sadd.s32 %s287, 16
        %s1559 = smul.addr %s1558, 4
        %s1560 = scalar_lea.vmem [#allocation2], %s1559
        %1561 = vst [vmem:[%s1560] sm:$0xf] %v1526
        %1562 = vst [vmem:[%s1560 + $0x4] sm:$0xf] %v1527
        %1563 = vst [vmem:[%s1560 + $0x8] sm:$0xf] %v1528
        %1564 = vst [vmem:[%s1560 + $0xc] sm:$0xf] %v1529
        %1565 = vst [vmem:[%s1560 + $0x10] sm:$0xf] %v1530
        %1566 = vst [vmem:[%s1560 + $0x14] sm:$0xf] %v1531
        %1567 = vst [vmem:[%s1560 + $0x18] sm:$0xf] %v1532
        %1568 = vst [vmem:[%s1560 + $0x1c] sm:$0xf] %v1533
        %1569 = vst [vmem:[%s1560 + $0x20] sm:$0xf] %v1534
        %1570 = vst [vmem:[%s1560 + $0x24] sm:$0xf] %v1535
        %1571 = vst [vmem:[%s1560 + $0x28] sm:$0xf] %v1536
        %1572 = vst [vmem:[%s1560 + $0x2c] sm:$0xf] %v1537
        %1573 = vst [vmem:[%s1560 + $0x30] sm:$0xf] %v1538
        %1574 = vst [vmem:[%s1560 + $0x34] sm:$0xf] %v1539
        %1575 = vst [vmem:[%s1560 + $0x38] sm:$0xf] %v1540
        %1576 = vst [vmem:[%s1560 + $0x3c] sm:$0xf] %v1541
        %s1577 = scalar_lea.vmem [#allocation3], %s286
        %v1578 = vld [vmem:[%s1577] sm:$0xff]
        %v1579 = vld [vmem:[%s1577 + $0x8] sm:$0xff]
        %v1580 = vld [vmem:[%s1577 + $0x10] sm:$0xff]
        %v1581 = vld [vmem:[%s1577 + $0x18] sm:$0xff]
        %v1582 = vld [vmem:[%s1577 + $0x20] sm:$0xff]
        %v1583 = vld [vmem:[%s1577 + $0x28] sm:$0xff]
        %v1584 = vld [vmem:[%s1577 + $0x30] sm:$0xff]
        %v1585 = vld [vmem:[%s1577 + $0x38] sm:$0xff]
        %v1586 = vld [vmem:[%s1577 + $0x40] sm:$0xff]
        %v1587 = vld [vmem:[%s1577 + $0x48] sm:$0xff]
        %v1588 = vld [vmem:[%s1577 + $0x50] sm:$0xff]
        %v1589 = vld [vmem:[%s1577 + $0x58] sm:$0xff]
        %v1590 = vld [vmem:[%s1577 + $0x60] sm:$0xff]
        %v1591 = vld [vmem:[%s1577 + $0x68] sm:$0xff]
        %v1592 = vld [vmem:[%s1577 + $0x70] sm:$0xff]
        %v1593 = vld [vmem:[%s1577 + $0x78] sm:$0xff]
        %v1610 = vunpack.c.l.b16 %v323
        %v1611 = vunpack.c.l.b16 %v324
        %v1612 = vunpack.c.l.b16 %v325
        %v1613 = vunpack.c.l.b16 %v326
        %v1614 = vunpack.c.l.b16 %v327
        %v1615 = vunpack.c.l.b16 %v328
        %v1616 = vunpack.c.l.b16 %v329
        %v1617 = vunpack.c.l.b16 %v330
        %v1618 = vunpack.c.l.b16 %v331
        %v1619 = vunpack.c.l.b16 %v332
        %v1620 = vunpack.c.l.b16 %v333
        %v1621 = vunpack.c.l.b16 %v334
        %v1622 = vunpack.c.l.b16 %v335
        %v1623 = vunpack.c.l.b16 %v336
        %v1624 = vunpack.c.l.b16 %v337
        %v1625 = vunpack.c.l.b16 %v338
        %v1626 = vpack.c.b16 %v1611, %v1610
        %v1627 = vpack.c.b16 %v1613, %v1612
        %v1628 = vpack.c.b16 %v1615, %v1614
        %v1629 = vpack.c.b16 %v1617, %v1616
        %v1630 = vpack.c.b16 %v1619, %v1618
        %v1631 = vpack.c.b16 %v1621, %v1620
        %v1632 = vpack.c.b16 %v1623, %v1622
        %v1633 = vpack.c.b16 %v1625, %v1624
        %1642 = vmatprep.subr.bf16.mxu0 0
        %1643 = vmatpush1.bf16.msra.mxu0 %v1633
        %1644 = vmatprep.subr.bf16.mxu0 0
        %1645 = vmatpush1.bf16.msra.mxu0 %v1632
        %1646 = vmatprep.subr.bf16.mxu0 0
        %1647 = vmatpush1.bf16.msra.mxu0 %v1631
        %1648 = vmatprep.subr.bf16.mxu0 0
        %1649 = vmatpush1.bf16.msra.mxu0 %v1630
        %1650 = vmatprep.subr.bf16.mxu0 0
        %1651 = vmatpush1.bf16.msra.mxu0 %v1629
        %1652 = vmatprep.subr.bf16.mxu0 0
        %1653 = vmatpush1.bf16.msra.mxu0 %v1628
        %1654 = vmatprep.subr.bf16.mxu0 0
        %1655 = vmatpush1.bf16.msra.mxu0 %v1627
        %1656 = vmatprep.subr.bf16.mxu0 0
        %1657 = vmatpush1.bf16.msra.mxu0 %v1626
        %1658 = vmatprep.subr.bf16.mxu0 0
        %1659 = vmatpush2.bf16.msra.mxu0 0
        %1660 = vmatprep.subr.bf16.mxu0 0
        %1661 = vmatpush2.bf16.msra.mxu0 0
        %1662 = vmatprep.subr.bf16.mxu0 0
        %1663 = vmatpush2.bf16.msra.mxu0 0
        %1664 = vmatprep.subr.bf16.mxu0 0
        %1665 = vmatpush2.bf16.msra.mxu0 0
        %1666 = vmatprep.subr.bf16.mxu0 0
        %1667 = vmatpush2.bf16.msra.mxu0 0
        %1668 = vmatprep.subr.bf16.mxu0 0
        %1669 = vmatpush2.bf16.msra.mxu0 0
        %1670 = vmatprep.subr.bf16.mxu0 0
        %1671 = vmatpush2.bf16.msra.mxu0 0
        %1672 = vmatprep.subr.bf16.mxu0 0
        %1673 = vmatpush2.bf16.msra.mxu0 0
        %1674 = vmatprep.mubr.bf16.mxu0 0
        %1675 = vmatmul.mubr.bf16.gmra.mxu0 %v1494
        %v1676 = vpop.f32.mrf.mxu0
        %v1677 = vadd.f32 0.0, %v1676
        %v1678 = vpop.f32.mrf.mxu0
        %v1679 = vpop.f32.mrf.mxu0
        %v1680 = vadd.f32 0.0, %v1679
        %v1681 = vpop.f32.mrf.mxu0
        %1682 = vmatprep.mubr.bf16.mxu0 0
        %1683 = vmatmul.mubr.bf16.gmra.mxu0 %v1495
        %v1684 = vpop.f32.mrf.mxu0
        %v1685 = vadd.f32 0.0, %v1684
        %v1686 = vpop.f32.mrf.mxu0
        %v1687 = vpop.f32.mrf.mxu0
        %v1688 = vadd.f32 0.0, %v1687
        %v1689 = vpop.f32.mrf.mxu0
        %1690 = vmatprep.mubr.bf16.mxu0 0
        %1691 = vmatmul.mubr.bf16.gmra.mxu0 %v1496
        %v1692 = vpop.f32.mrf.mxu0
        %v1693 = vadd.f32 0.0, %v1692
        %v1694 = vpop.f32.mrf.mxu0
        %v1695 = vpop.f32.mrf.mxu0
        %v1696 = vadd.f32 0.0, %v1695
        %v1697 = vpop.f32.mrf.mxu0
        %1698 = vmatprep.mubr.bf16.mxu0 0
        %1699 = vmatmul.mubr.bf16.gmra.mxu0 %v1497
        %v1700 = vpop.f32.mrf.mxu0
        %v1701 = vadd.f32 0.0, %v1700
        %v1702 = vpop.f32.mrf.mxu0
        %v1703 = vpop.f32.mrf.mxu0
        %v1704 = vadd.f32 0.0, %v1703
        %v1705 = vpop.f32.mrf.mxu0
        %1706 = vmatprep.mubr.bf16.mxu0 0
        %1707 = vmatmul.mubr.bf16.gmra.mxu0 %v1498
        %v1708 = vpop.f32.mrf.mxu0
        %v1709 = vadd.f32 0.0, %v1708
        %v1710 = vpop.f32.mrf.mxu0
        %v1711 = vpop.f32.mrf.mxu0
        %v1712 = vadd.f32 0.0, %v1711
        %v1713 = vpop.f32.mrf.mxu0
        %1714 = vmatprep.mubr.bf16.mxu0 0
        %1715 = vmatmul.mubr.bf16.gmra.mxu0 %v1499
        %v1716 = vpop.f32.mrf.mxu0
        %v1717 = vadd.f32 0.0, %v1716
        %v1718 = vpop.f32.mrf.mxu0
        %v1719 = vpop.f32.mrf.mxu0
        %v1720 = vadd.f32 0.0, %v1719
        %v1721 = vpop.f32.mrf.mxu0
        %1722 = vmatprep.mubr.bf16.mxu0 0
        %1723 = vmatmul.mubr.bf16.gmra.mxu0 %v1500
        %v1724 = vpop.f32.mrf.mxu0
        %v1725 = vadd.f32 0.0, %v1724
        %v1726 = vpop.f32.mrf.mxu0
        %v1727 = vpop.f32.mrf.mxu0
        %v1728 = vadd.f32 0.0, %v1727
        %v1729 = vpop.f32.mrf.mxu0
        %1730 = vmatprep.mubr.bf16.mxu0 0
        %1731 = vmatmul.mubr.bf16.gmra.mxu0 %v1501
        %v1732 = vpop.f32.mrf.mxu0
        %v1733 = vadd.f32 0.0, %v1732
        %v1734 = vpop.f32.mrf.mxu0
        %v1735 = vpop.f32.mrf.mxu0
        %v1736 = vadd.f32 0.0, %v1735
        %v1737 = vpop.f32.mrf.mxu0
        %1738 = vdwg.mxu0
        %v1739 = vadd.f32 %v1578, %v1677
        %v1740 = vadd.f32 %v1579, %v1680
        %v1741 = vadd.f32 %v1580, %v1685
        %v1742 = vadd.f32 %v1581, %v1688
        %v1743 = vadd.f32 %v1582, %v1693
        %v1744 = vadd.f32 %v1583, %v1696
        %v1745 = vadd.f32 %v1584, %v1701
        %v1746 = vadd.f32 %v1585, %v1704
        %v1747 = vadd.f32 %v1586, %v1709
        %v1748 = vadd.f32 %v1587, %v1712
        %v1749 = vadd.f32 %v1588, %v1717
        %v1750 = vadd.f32 %v1589, %v1720
        %v1751 = vadd.f32 %v1590, %v1725
        %v1752 = vadd.f32 %v1591, %v1728
        %v1753 = vadd.f32 %v1592, %v1733
        %v1754 = vadd.f32 %v1593, %v1736
        %1755 = vst [vmem:[%s1577] sm:$0xff] %v1739
        %1756 = vst [vmem:[%s1577 + $0x8] sm:$0xff] %v1740
        %1757 = vst [vmem:[%s1577 + $0x10] sm:$0xff] %v1741
        %1758 = vst [vmem:[%s1577 + $0x18] sm:$0xff] %v1742
        %1759 = vst [vmem:[%s1577 + $0x20] sm:$0xff] %v1743
        %1760 = vst [vmem:[%s1577 + $0x28] sm:$0xff] %v1744
        %1761 = vst [vmem:[%s1577 + $0x30] sm:$0xff] %v1745
        %1762 = vst [vmem:[%s1577 + $0x38] sm:$0xff] %v1746
        %1763 = vst [vmem:[%s1577 + $0x40] sm:$0xff] %v1747
        %1764 = vst [vmem:[%s1577 + $0x48] sm:$0xff] %v1748
        %1765 = vst [vmem:[%s1577 + $0x50] sm:$0xff] %v1749
        %1766 = vst [vmem:[%s1577 + $0x58] sm:$0xff] %v1750
        %1767 = vst [vmem:[%s1577 + $0x60] sm:$0xff] %v1751
        %1768 = vst [vmem:[%s1577 + $0x68] sm:$0xff] %v1752
        %1769 = vst [vmem:[%s1577 + $0x70] sm:$0xff] %v1753
        %1770 = vst [vmem:[%s1577 + $0x78] sm:$0xff] %v1754
        %1771 = vst [vmem:[%s283] sm:$0xff] %v1739
        %1772 = vst [vmem:[%s283 + $0x8] sm:$0xff] %v1740
        %1773 = vst [vmem:[%s283 + $0x10] sm:$0xff] %v1741
        %1774 = vst [vmem:[%s283 + $0x18] sm:$0xff] %v1742
        %1775 = vst [vmem:[%s283 + $0x20] sm:$0xff] %v1743
        %1776 = vst [vmem:[%s283 + $0x28] sm:$0xff] %v1744
        %1777 = vst [vmem:[%s283 + $0x30] sm:$0xff] %v1745
        %1778 = vst [vmem:[%s283 + $0x38] sm:$0xff] %v1746
        %1779 = vst [vmem:[%s283 + $0x40] sm:$0xff] %v1747
        %1780 = vst [vmem:[%s283 + $0x48] sm:$0xff] %v1748
        %1781 = vst [vmem:[%s283 + $0x50] sm:$0xff] %v1749
        %1782 = vst [vmem:[%s283 + $0x58] sm:$0xff] %v1750
        %1783 = vst [vmem:[%s283 + $0x60] sm:$0xff] %v1751
        %1784 = vst [vmem:[%s283 + $0x68] sm:$0xff] %v1752
        %1785 = vst [vmem:[%s283 + $0x70] sm:$0xff] %v1753
        %1786 = vst [vmem:[%s283 + $0x78] sm:$0xff] %v1754
      $region52: #{_ognn_forward_impl.1} parent=43 // pred_fallthru
        _
      %p1787 = scmp.eq.s32.totalorder %s21, 2
      // Predicated region
      $region53: #{_ognn_forward_impl.1} parent=43 // pred_check
        %p1788 = pneg %p1787
      $region54: #{_ognn_forward_impl.1} parent=43 // pred_check_branch
        %1790 = sbr.rel (%p1788) target = $region56
      $region55: #{_ognn_forward_impl.1} parent=43 // pred_region
        %s1791 = sadd.s32 %s287, 16
        %s1792 = smul.addr %s1791, 4
        %s1793 = scalar_lea.vmem [#allocation2], %s1792
        %v1794 = vld [vmem:[%s1793] sm:$0xf]
        %v1795 = vld [vmem:[%s1793 + $0x4] sm:$0xf]
        %v1796 = vld [vmem:[%s1793 + $0x8] sm:$0xf]
        %v1797 = vld [vmem:[%s1793 + $0xc] sm:$0xf]
        %v1798 = vld [vmem:[%s1793 + $0x10] sm:$0xf]
        %v1799 = vld [vmem:[%s1793 + $0x14] sm:$0xf]
        %v1800 = vld [vmem:[%s1793 + $0x18] sm:$0xf]
        %v1801 = vld [vmem:[%s1793 + $0x1c] sm:$0xf]
        %v1802 = vld [vmem:[%s1793 + $0x20] sm:$0xf]
        %v1803 = vld [vmem:[%s1793 + $0x24] sm:$0xf]
        %v1804 = vld [vmem:[%s1793 + $0x28] sm:$0xf]
        %v1805 = vld [vmem:[%s1793 + $0x2c] sm:$0xf]
        %v1806 = vld [vmem:[%s1793 + $0x30] sm:$0xf]
        %v1807 = vld [vmem:[%s1793 + $0x34] sm:$0xf]
        %v1808 = vld [vmem:[%s1793 + $0x38] sm:$0xf]
        %v1809 = vld [vmem:[%s1793 + $0x3c] sm:$0xf]
        %v1810 = vunpack.c.l.bf16 %v1794
        %v1811 = vunpack.c.l.bf16 %v1795
        %v1812 = vunpack.c.l.bf16 %v1796
        %v1813 = vunpack.c.l.bf16 %v1797
        %v1814 = vunpack.c.l.bf16 %v1798
        %v1815 = vunpack.c.l.bf16 %v1799
        %v1816 = vunpack.c.l.bf16 %v1800
        %v1817 = vunpack.c.l.bf16 %v1801
        %v1818 = vunpack.c.l.bf16 %v1802
        %v1819 = vunpack.c.l.bf16 %v1803
        %v1820 = vunpack.c.l.bf16 %v1804
        %v1821 = vunpack.c.l.bf16 %v1805
        %v1822 = vunpack.c.l.bf16 %v1806
        %v1823 = vunpack.c.l.bf16 %v1807
        %v1824 = vunpack.c.l.bf16 %v1808
        %v1825 = vunpack.c.l.bf16 %v1809
        %s1826 = scalar_lea.vmem [#allocation2], 64
        %v1827 = vld [vmem:[%s1826] sm:$0xf]
        %v1828 = vld [vmem:[%s1826 + $0x4] sm:$0xf]
        %v1829 = vld [vmem:[%s1826 + $0x8] sm:$0xf]
        %v1830 = vld [vmem:[%s1826 + $0xc] sm:$0xf]
        %v1831 = vld [vmem:[%s1826 + $0x10] sm:$0xf]
        %v1832 = vld [vmem:[%s1826 + $0x14] sm:$0xf]
        %v1833 = vld [vmem:[%s1826 + $0x18] sm:$0xf]
        %v1834 = vld [vmem:[%s1826 + $0x1c] sm:$0xf]
        %v1835 = vld [vmem:[%s1826 + $0x20] sm:$0xf]
        %v1836 = vld [vmem:[%s1826 + $0x24] sm:$0xf]
        %v1837 = vld [vmem:[%s1826 + $0x28] sm:$0xf]
        %v1838 = vld [vmem:[%s1826 + $0x2c] sm:$0xf]
        %v1839 = vld [vmem:[%s1826 + $0x30] sm:$0xf]
        %v1840 = vld [vmem:[%s1826 + $0x34] sm:$0xf]
        %v1841 = vld [vmem:[%s1826 + $0x38] sm:$0xf]
        %v1842 = vld [vmem:[%s1826 + $0x3c] sm:$0xf]
        %v1859 = vunpack.c.l.b16 %v291
        %v1860 = vunpack.c.l.b16 %v292
        %v1861 = vunpack.c.l.b16 %v293
        %v1862 = vunpack.c.l.b16 %v294
        %v1863 = vunpack.c.l.b16 %v295
        %v1864 = vunpack.c.l.b16 %v296
        %v1865 = vunpack.c.l.b16 %v297
        %v1866 = vunpack.c.l.b16 %v298
        %v1867 = vunpack.c.l.b16 %v299
        %v1868 = vunpack.c.l.b16 %v300
        %v1869 = vunpack.c.l.b16 %v301
        %v1870 = vunpack.c.l.b16 %v302
        %v1871 = vunpack.c.l.b16 %v303
        %v1872 = vunpack.c.l.b16 %v304
        %v1873 = vunpack.c.l.b16 %v305
        %v1874 = vunpack.c.l.b16 %v306
        %v1875 = vpack.c.b16 %v1860, %v1859
        %v1876 = vpack.c.b16 %v1862, %v1861
        %v1877 = vpack.c.b16 %v1864, %v1863
        %v1878 = vpack.c.b16 %v1866, %v1865
        %v1879 = vpack.c.b16 %v1868, %v1867
        %v1880 = vpack.c.b16 %v1870, %v1869
        %v1881 = vpack.c.b16 %v1872, %v1871
        %v1882 = vpack.c.b16 %v1874, %v1873
        %v1907 = vunpack.c.l.b16 %v1827
        %v1908 = vunpack.c.l.b16 %v1828
        %v1909 = vunpack.c.l.b16 %v1829
        %v1910 = vunpack.c.l.b16 %v1830
        %v1911 = vunpack.c.l.b16 %v1831
        %v1912 = vunpack.c.l.b16 %v1832
        %v1913 = vunpack.c.l.b16 %v1833
        %v1914 = vunpack.c.l.b16 %v1834
        %v1915 = vunpack.c.l.b16 %v1835
        %v1916 = vunpack.c.l.b16 %v1836
        %v1917 = vunpack.c.l.b16 %v1837
        %v1918 = vunpack.c.l.b16 %v1838
        %v1919 = vunpack.c.l.b16 %v1839
        %v1920 = vunpack.c.l.b16 %v1840
        %v1921 = vunpack.c.l.b16 %v1841
        %v1922 = vunpack.c.l.b16 %v1842
        %v1923 = vpack.c.b16 %v1908, %v1907
        %v1924 = vpack.c.b16 %v1910, %v1909
        %v1925 = vpack.c.b16 %v1912, %v1911
        %v1926 = vpack.c.b16 %v1914, %v1913
        %v1927 = vpack.c.b16 %v1916, %v1915
        %v1928 = vpack.c.b16 %v1918, %v1917
        %v1929 = vpack.c.b16 %v1920, %v1919
        %v1930 = vpack.c.b16 %v1922, %v1921
        %1939 = vmatprep.subr.bf16.mxu0 0
        %1940 = vmatpush1.bf16.msra.mxu0 %v1930
        %1941 = vmatprep.subr.bf16.mxu0 0
        %1942 = vmatpush1.bf16.msra.mxu0 %v1929
        %1943 = vmatprep.subr.bf16.mxu0 0
        %1944 = vmatpush1.bf16.msra.mxu0 %v1928
        %1945 = vmatprep.subr.bf16.mxu0 0
        %1946 = vmatpush1.bf16.msra.mxu0 %v1927
        %1947 = vmatprep.subr.bf16.mxu0 0
        %1948 = vmatpush1.bf16.msra.mxu0 %v1926
        %1949 = vmatprep.subr.bf16.mxu0 0
        %1950 = vmatpush1.bf16.msra.mxu0 %v1925
        %1951 = vmatprep.subr.bf16.mxu0 0
        %1952 = vmatpush1.bf16.msra.mxu0 %v1924
        %1953 = vmatprep.subr.bf16.mxu0 0
        %1954 = vmatpush1.bf16.msra.mxu0 %v1923
        %1955 = vmatprep.subr.bf16.mxu0 0
        %1956 = vmatpush2.bf16.msra.mxu0 0
        %1957 = vmatprep.subr.bf16.mxu0 0
        %1958 = vmatpush2.bf16.msra.mxu0 0
        %1959 = vmatprep.subr.bf16.mxu0 0
        %1960 = vmatpush2.bf16.msra.mxu0 0
        %1961 = vmatprep.subr.bf16.mxu0 0
        %1962 = vmatpush2.bf16.msra.mxu0 0
        %1963 = vmatprep.subr.bf16.mxu0 0
        %1964 = vmatpush2.bf16.msra.mxu0 0
        %1965 = vmatprep.subr.bf16.mxu0 0
        %1966 = vmatpush2.bf16.msra.mxu0 0
        %1967 = vmatprep.subr.bf16.mxu0 0
        %1968 = vmatpush2.bf16.msra.mxu0 0
        %1969 = vmatprep.subr.bf16.mxu0 0
        %1970 = vmatpush2.bf16.msra.mxu0 0
        %1971 = vmatprep.mubr.bf16.mxu0 0
        %1972 = vmatmul.mubr.bf16.gmra.mxu0 %v1875
        %v1973 = vpop.f32.mrf.mxu0
        %v1974 = vadd.f32 0.0, %v1973
        %v1975 = vpop.f32.mrf.mxu0
        %v1976 = vpop.f32.mrf.mxu0
        %v1977 = vadd.f32 0.0, %v1976
        %v1978 = vpop.f32.mrf.mxu0
        %1979 = vmatprep.mubr.bf16.mxu0 0
        %1980 = vmatmul.mubr.bf16.gmra.mxu0 %v1876
        %v1981 = vpop.f32.mrf.mxu0
        %v1982 = vadd.f32 0.0, %v1981
        %v1983 = vpop.f32.mrf.mxu0
        %v1984 = vpop.f32.mrf.mxu0
        %v1985 = vadd.f32 0.0, %v1984
        %v1986 = vpop.f32.mrf.mxu0
        %1987 = vmatprep.mubr.bf16.mxu0 0
        %1988 = vmatmul.mubr.bf16.gmra.mxu0 %v1877
        %v1989 = vpop.f32.mrf.mxu0
        %v1990 = vadd.f32 0.0, %v1989
        %v1991 = vpop.f32.mrf.mxu0
        %v1992 = vpop.f32.mrf.mxu0
        %v1993 = vadd.f32 0.0, %v1992
        %v1994 = vpop.f32.mrf.mxu0
        %1995 = vmatprep.mubr.bf16.mxu0 0
        %1996 = vmatmul.mubr.bf16.gmra.mxu0 %v1878
        %v1997 = vpop.f32.mrf.mxu0
        %v1998 = vadd.f32 0.0, %v1997
        %v1999 = vpop.f32.mrf.mxu0
        %v2000 = vpop.f32.mrf.mxu0
        %v2001 = vadd.f32 0.0, %v2000
        %v2002 = vpop.f32.mrf.mxu0
        %2003 = vmatprep.mubr.bf16.mxu0 0
        %2004 = vmatmul.mubr.bf16.gmra.mxu0 %v1879
        %v2005 = vpop.f32.mrf.mxu0
        %v2006 = vadd.f32 0.0, %v2005
        %v2007 = vpop.f32.mrf.mxu0
        %v2008 = vpop.f32.mrf.mxu0
        %v2009 = vadd.f32 0.0, %v2008
        %v2010 = vpop.f32.mrf.mxu0
        %2011 = vmatprep.mubr.bf16.mxu0 0
        %2012 = vmatmul.mubr.bf16.gmra.mxu0 %v1880
        %v2013 = vpop.f32.mrf.mxu0
        %v2014 = vadd.f32 0.0, %v2013
        %v2015 = vpop.f32.mrf.mxu0
        %v2016 = vpop.f32.mrf.mxu0
        %v2017 = vadd.f32 0.0, %v2016
        %v2018 = vpop.f32.mrf.mxu0
        %2019 = vmatprep.mubr.bf16.mxu0 0
        %2020 = vmatmul.mubr.bf16.gmra.mxu0 %v1881
        %v2021 = vpop.f32.mrf.mxu0
        %v2022 = vadd.f32 0.0, %v2021
        %v2023 = vpop.f32.mrf.mxu0
        %v2024 = vpop.f32.mrf.mxu0
        %v2025 = vadd.f32 0.0, %v2024
        %v2026 = vpop.f32.mrf.mxu0
        %2027 = vmatprep.mubr.bf16.mxu0 0
        %2028 = vmatmul.mubr.bf16.gmra.mxu0 %v1882
        %v2029 = vpop.f32.mrf.mxu0
        %v2030 = vadd.f32 0.0, %v2029
        %v2031 = vpop.f32.mrf.mxu0
        %v2032 = vpop.f32.mrf.mxu0
        %v2033 = vadd.f32 0.0, %v2032
        %v2034 = vpop.f32.mrf.mxu0
        %2035 = vdwg.mxu0
        %v2036 = vpack.c.bf16 %v1977, %v1974
        %v2037 = vpack.c.bf16 %v1985, %v1982
        %v2038 = vpack.c.bf16 %v1993, %v1990
        %v2039 = vpack.c.bf16 %v2001, %v1998
        %v2040 = vpack.c.bf16 %v2009, %v2006
        %v2041 = vpack.c.bf16 %v2017, %v2014
        %v2042 = vpack.c.bf16 %v2025, %v2022
        %v2043 = vpack.c.bf16 %v2033, %v2030
        %v2044 = vlaneseq
        %v2045 = vshrl.u32 %v2044, 7
        %v2046 = vsub.s32 4, %v2045
        %v2047 = vrot.slane %v339, %v2046
        %v2064 = vunpack.c.l.b16 %v307
        %v2065 = vunpack.c.l.b16 %v308
        %v2066 = vunpack.c.l.b16 %v309
        %v2067 = vunpack.c.l.b16 %v310
        %v2068 = vunpack.c.l.b16 %v311
        %v2069 = vunpack.c.l.b16 %v312
        %v2070 = vunpack.c.l.b16 %v313
        %v2071 = vunpack.c.l.b16 %v314
        %v2072 = vunpack.c.l.b16 %v315
        %v2073 = vunpack.c.l.b16 %v316
        %v2074 = vunpack.c.l.b16 %v317
        %v2075 = vunpack.c.l.b16 %v318
        %v2076 = vunpack.c.l.b16 %v319
        %v2077 = vunpack.c.l.b16 %v320
        %v2078 = vunpack.c.l.b16 %v321
        %v2079 = vunpack.c.l.b16 %v322
        %v2080 = vpack.c.b16 %v2065, %v2064
        %v2081 = vpack.c.b16 %v2067, %v2066
        %v2082 = vpack.c.b16 %v2069, %v2068
        %v2083 = vpack.c.b16 %v2071, %v2070
        %v2084 = vpack.c.b16 %v2073, %v2072
        %v2085 = vpack.c.b16 %v2075, %v2074
        %v2086 = vpack.c.b16 %v2077, %v2076
        %v2087 = vpack.c.b16 %v2079, %v2078
        %2096 = vmatprep.subr.bf16.mxu0 0
        %2097 = vmatpush1.bf16.msra.mxu0 %v2087
        %2098 = vmatprep.subr.bf16.mxu0 0
        %2099 = vmatpush1.bf16.msra.mxu0 %v2086
        %2100 = vmatprep.subr.bf16.mxu0 0
        %2101 = vmatpush1.bf16.msra.mxu0 %v2085
        %2102 = vmatprep.subr.bf16.mxu0 0
        %2103 = vmatpush1.bf16.msra.mxu0 %v2084
        %2104 = vmatprep.subr.bf16.mxu0 0
        %2105 = vmatpush1.bf16.msra.mxu0 %v2083
        %2106 = vmatprep.subr.bf16.mxu0 0
        %2107 = vmatpush1.bf16.msra.mxu0 %v2082
        %2108 = vmatprep.subr.bf16.mxu0 0
        %2109 = vmatpush1.bf16.msra.mxu0 %v2081
        %2110 = vmatprep.subr.bf16.mxu0 0
        %2111 = vmatpush1.bf16.msra.mxu0 %v2080
        %2112 = vmatprep.subr.bf16.mxu0 0
        %2113 = vmatpush2.bf16.msra.mxu0 0
        %2114 = vmatprep.subr.bf16.mxu0 0
        %2115 = vmatpush2.bf16.msra.mxu0 0
        %2116 = vmatprep.subr.bf16.mxu0 0
        %2117 = vmatpush2.bf16.msra.mxu0 0
        %2118 = vmatprep.subr.bf16.mxu0 0
        %2119 = vmatpush2.bf16.msra.mxu0 0
        %2120 = vmatprep.subr.bf16.mxu0 0
        %2121 = vmatpush2.bf16.msra.mxu0 0
        %2122 = vmatprep.subr.bf16.mxu0 0
        %2123 = vmatpush2.bf16.msra.mxu0 0
        %2124 = vmatprep.subr.bf16.mxu0 0
        %2125 = vmatpush2.bf16.msra.mxu0 0
        %2126 = vmatprep.subr.bf16.mxu0 0
        %2127 = vmatpush2.bf16.msra.mxu0 0
        %2128 = vmatprep.mubr.bf16.mxu0 0
        %2129 = vmatmul.mubr.bf16.gmra.mxu0 %v2036
        %v2130 = vpop.f32.mrf.mxu0
        %v2131 = vadd.f32 %v2047, %v2130
        %v2132 = vpop.f32.mrf.mxu0
        %v2133 = vpop.f32.mrf.mxu0
        %v2134 = vadd.f32 %v2047, %v2133
        %v2135 = vpop.f32.mrf.mxu0
        %2136 = vmatprep.mubr.bf16.mxu0 0
        %2137 = vmatmul.mubr.bf16.gmra.mxu0 %v2037
        %v2138 = vpop.f32.mrf.mxu0
        %v2139 = vadd.f32 %v2047, %v2138
        %v2140 = vpop.f32.mrf.mxu0
        %v2141 = vpop.f32.mrf.mxu0
        %v2142 = vadd.f32 %v2047, %v2141
        %v2143 = vpop.f32.mrf.mxu0
        %2144 = vmatprep.mubr.bf16.mxu0 0
        %2145 = vmatmul.mubr.bf16.gmra.mxu0 %v2038
        %v2146 = vpop.f32.mrf.mxu0
        %v2147 = vadd.f32 %v2047, %v2146
        %v2148 = vpop.f32.mrf.mxu0
        %v2149 = vpop.f32.mrf.mxu0
        %v2150 = vadd.f32 %v2047, %v2149
        %v2151 = vpop.f32.mrf.mxu0
        %2152 = vmatprep.mubr.bf16.mxu0 0
        %2153 = vmatmul.mubr.bf16.gmra.mxu0 %v2039
        %v2154 = vpop.f32.mrf.mxu0
        %v2155 = vadd.f32 %v2047, %v2154
        %v2156 = vpop.f32.mrf.mxu0
        %v2157 = vpop.f32.mrf.mxu0
        %v2158 = vadd.f32 %v2047, %v2157
        %v2159 = vpop.f32.mrf.mxu0
        %2160 = vmatprep.mubr.bf16.mxu0 0
        %2161 = vmatmul.mubr.bf16.gmra.mxu0 %v2040
        %v2162 = vpop.f32.mrf.mxu0
        %v2163 = vadd.f32 %v2047, %v2162
        %v2164 = vpop.f32.mrf.mxu0
        %v2165 = vpop.f32.mrf.mxu0
        %v2166 = vadd.f32 %v2047, %v2165
        %v2167 = vpop.f32.mrf.mxu0
        %2168 = vmatprep.mubr.bf16.mxu0 0
        %2169 = vmatmul.mubr.bf16.gmra.mxu0 %v2041
        %v2170 = vpop.f32.mrf.mxu0
        %v2171 = vadd.f32 %v2047, %v2170
        %v2172 = vpop.f32.mrf.mxu0
        %v2173 = vpop.f32.mrf.mxu0
        %v2174 = vadd.f32 %v2047, %v2173
        %v2175 = vpop.f32.mrf.mxu0
        %2176 = vmatprep.mubr.bf16.mxu0 0
        %2177 = vmatmul.mubr.bf16.gmra.mxu0 %v2042
        %v2178 = vpop.f32.mrf.mxu0
        %v2179 = vadd.f32 %v2047, %v2178
        %v2180 = vpop.f32.mrf.mxu0
        %v2181 = vpop.f32.mrf.mxu0
        %v2182 = vadd.f32 %v2047, %v2181
        %v2183 = vpop.f32.mrf.mxu0
        %2184 = vmatprep.mubr.bf16.mxu0 0
        %2185 = vmatmul.mubr.bf16.gmra.mxu0 %v2043
        %v2186 = vpop.f32.mrf.mxu0
        %v2187 = vadd.f32 %v2047, %v2186
        %v2188 = vpop.f32.mrf.mxu0
        %v2189 = vpop.f32.mrf.mxu0
        %v2190 = vadd.f32 %v2047, %v2189
        %v2191 = vpop.f32.mrf.mxu0
        %2192 = vdwg.mxu0
        %v2193 = vadd.f32 %v2131, %v1810
        %v2194 = vadd.f32 %v2134, %v1811
        %v2195 = vadd.f32 %v2139, %v1812
        %v2196 = vadd.f32 %v2142, %v1813
        %v2197 = vadd.f32 %v2147, %v1814
        %v2198 = vadd.f32 %v2150, %v1815
        %v2199 = vadd.f32 %v2155, %v1816
        %v2200 = vadd.f32 %v2158, %v1817
        %v2201 = vadd.f32 %v2163, %v1818
        %v2202 = vadd.f32 %v2166, %v1819
        %v2203 = vadd.f32 %v2171, %v1820
        %v2204 = vadd.f32 %v2174, %v1821
        %v2205 = vadd.f32 %v2179, %v1822
        %v2206 = vadd.f32 %v2182, %v1823
        %v2207 = vadd.f32 %v2187, %v1824
        %v2208 = vadd.f32 %v2190, %v1825
        %s2209 = scalar_lea.vmem [#allocation3], %s286
        %v2210 = vld [vmem:[%s2209] sm:$0xff]
        %v2211 = vld [vmem:[%s2209 + $0x8] sm:$0xff]
        %v2212 = vld [vmem:[%s2209 + $0x10] sm:$0xff]
        %v2213 = vld [vmem:[%s2209 + $0x18] sm:$0xff]
        %v2214 = vld [vmem:[%s2209 + $0x20] sm:$0xff]
        %v2215 = vld [vmem:[%s2209 + $0x28] sm:$0xff]
        %v2216 = vld [vmem:[%s2209 + $0x30] sm:$0xff]
        %v2217 = vld [vmem:[%s2209 + $0x38] sm:$0xff]
        %v2218 = vld [vmem:[%s2209 + $0x40] sm:$0xff]
        %v2219 = vld [vmem:[%s2209 + $0x48] sm:$0xff]
        %v2220 = vld [vmem:[%s2209 + $0x50] sm:$0xff]
        %v2221 = vld [vmem:[%s2209 + $0x58] sm:$0xff]
        %v2222 = vld [vmem:[%s2209 + $0x60] sm:$0xff]
        %v2223 = vld [vmem:[%s2209 + $0x68] sm:$0xff]
        %v2224 = vld [vmem:[%s2209 + $0x70] sm:$0xff]
        %v2225 = vld [vmem:[%s2209 + $0x78] sm:$0xff]
        %v2226 = vpack.c.bf16 %v2194, %v2193
        %v2227 = vpack.c.bf16 %v2196, %v2195
        %v2228 = vpack.c.bf16 %v2198, %v2197
        %v2229 = vpack.c.bf16 %v2200, %v2199
        %v2230 = vpack.c.bf16 %v2202, %v2201
        %v2231 = vpack.c.bf16 %v2204, %v2203
        %v2232 = vpack.c.bf16 %v2206, %v2205
        %v2233 = vpack.c.bf16 %v2208, %v2207
        %v2250 = vunpack.c.l.b16 %v323
        %v2251 = vunpack.c.l.b16 %v324
        %v2252 = vunpack.c.l.b16 %v325
        %v2253 = vunpack.c.l.b16 %v326
        %v2254 = vunpack.c.l.b16 %v327
        %v2255 = vunpack.c.l.b16 %v328
        %v2256 = vunpack.c.l.b16 %v329
        %v2257 = vunpack.c.l.b16 %v330
        %v2258 = vunpack.c.l.b16 %v331
        %v2259 = vunpack.c.l.b16 %v332
        %v2260 = vunpack.c.l.b16 %v333
        %v2261 = vunpack.c.l.b16 %v334
        %v2262 = vunpack.c.l.b16 %v335
        %v2263 = vunpack.c.l.b16 %v336
        %v2264 = vunpack.c.l.b16 %v337
        %v2265 = vunpack.c.l.b16 %v338
        %v2266 = vpack.c.b16 %v2251, %v2250
        %v2267 = vpack.c.b16 %v2253, %v2252
        %v2268 = vpack.c.b16 %v2255, %v2254
        %v2269 = vpack.c.b16 %v2257, %v2256
        %v2270 = vpack.c.b16 %v2259, %v2258
        %v2271 = vpack.c.b16 %v2261, %v2260
        %v2272 = vpack.c.b16 %v2263, %v2262
        %v2273 = vpack.c.b16 %v2265, %v2264
        %2282 = vmatprep.subr.bf16.mxu0 0
        %2283 = vmatpush1.bf16.msra.mxu0 %v2273
        %2284 = vmatprep.subr.bf16.mxu0 0
        %2285 = vmatpush1.bf16.msra.mxu0 %v2272
        %2286 = vmatprep.subr.bf16.mxu0 0
        %2287 = vmatpush1.bf16.msra.mxu0 %v2271
        %2288 = vmatprep.subr.bf16.mxu0 0
        %2289 = vmatpush1.bf16.msra.mxu0 %v2270
        %2290 = vmatprep.subr.bf16.mxu0 0
        %2291 = vmatpush1.bf16.msra.mxu0 %v2269
        %2292 = vmatprep.subr.bf16.mxu0 0
        %2293 = vmatpush1.bf16.msra.mxu0 %v2268
        %2294 = vmatprep.subr.bf16.mxu0 0
        %2295 = vmatpush1.bf16.msra.mxu0 %v2267
        %2296 = vmatprep.subr.bf16.mxu0 0
        %2297 = vmatpush1.bf16.msra.mxu0 %v2266
        %2298 = vmatprep.subr.bf16.mxu0 0
        %2299 = vmatpush2.bf16.msra.mxu0 0
        %2300 = vmatprep.subr.bf16.mxu0 0
        %2301 = vmatpush2.bf16.msra.mxu0 0
        %2302 = vmatprep.subr.bf16.mxu0 0
        %2303 = vmatpush2.bf16.msra.mxu0 0
        %2304 = vmatprep.subr.bf16.mxu0 0
        %2305 = vmatpush2.bf16.msra.mxu0 0
        %2306 = vmatprep.subr.bf16.mxu0 0
        %2307 = vmatpush2.bf16.msra.mxu0 0
        %2308 = vmatprep.subr.bf16.mxu0 0
        %2309 = vmatpush2.bf16.msra.mxu0 0
        %2310 = vmatprep.subr.bf16.mxu0 0
        %2311 = vmatpush2.bf16.msra.mxu0 0
        %2312 = vmatprep.subr.bf16.mxu0 0
        %2313 = vmatpush2.bf16.msra.mxu0 0
        %2314 = vmatprep.mubr.bf16.mxu0 0
        %2315 = vmatmul.mubr.bf16.gmra.mxu0 %v2226
        %v2316 = vpop.f32.mrf.mxu0
        %v2317 = vadd.f32 0.0, %v2316
        %v2318 = vpop.f32.mrf.mxu0
        %v2319 = vpop.f32.mrf.mxu0
        %v2320 = vadd.f32 0.0, %v2319
        %v2321 = vpop.f32.mrf.mxu0
        %2322 = vmatprep.mubr.bf16.mxu0 0
        %2323 = vmatmul.mubr.bf16.gmra.mxu0 %v2227
        %v2324 = vpop.f32.mrf.mxu0
        %v2325 = vadd.f32 0.0, %v2324
        %v2326 = vpop.f32.mrf.mxu0
        %v2327 = vpop.f32.mrf.mxu0
        %v2328 = vadd.f32 0.0, %v2327
        %v2329 = vpop.f32.mrf.mxu0
        %2330 = vmatprep.mubr.bf16.mxu0 0
        %2331 = vmatmul.mubr.bf16.gmra.mxu0 %v2228
        %v2332 = vpop.f32.mrf.mxu0
        %v2333 = vadd.f32 0.0, %v2332
        %v2334 = vpop.f32.mrf.mxu0
        %v2335 = vpop.f32.mrf.mxu0
        %v2336 = vadd.f32 0.0, %v2335
        %v2337 = vpop.f32.mrf.mxu0
        %2338 = vmatprep.mubr.bf16.mxu0 0
        %2339 = vmatmul.mubr.bf16.gmra.mxu0 %v2229
        %v2340 = vpop.f32.mrf.mxu0
        %v2341 = vadd.f32 0.0, %v2340
        %v2342 = vpop.f32.mrf.mxu0
        %v2343 = vpop.f32.mrf.mxu0
        %v2344 = vadd.f32 0.0, %v2343
        %v2345 = vpop.f32.mrf.mxu0
        %2346 = vmatprep.mubr.bf16.mxu0 0
        %2347 = vmatmul.mubr.bf16.gmra.mxu0 %v2230
        %v2348 = vpop.f32.mrf.mxu0
        %v2349 = vadd.f32 0.0, %v2348
        %v2350 = vpop.f32.mrf.mxu0
        %v2351 = vpop.f32.mrf.mxu0
        %v2352 = vadd.f32 0.0, %v2351
        %v2353 = vpop.f32.mrf.mxu0
        %2354 = vmatprep.mubr.bf16.mxu0 0
        %2355 = vmatmul.mubr.bf16.gmra.mxu0 %v2231
        %v2356 = vpop.f32.mrf.mxu0
        %v2357 = vadd.f32 0.0, %v2356
        %v2358 = vpop.f32.mrf.mxu0
        %v2359 = vpop.f32.mrf.mxu0
        %v2360 = vadd.f32 0.0, %v2359
        %v2361 = vpop.f32.mrf.mxu0
        %2362 = vmatprep.mubr.bf16.mxu0 0
        %2363 = vmatmul.mubr.bf16.gmra.mxu0 %v2232
        %v2364 = vpop.f32.mrf.mxu0
        %v2365 = vadd.f32 0.0, %v2364
        %v2366 = vpop.f32.mrf.mxu0
        %v2367 = vpop.f32.mrf.mxu0
        %v2368 = vadd.f32 0.0, %v2367
        %v2369 = vpop.f32.mrf.mxu0
        %2370 = vmatprep.mubr.bf16.mxu0 0
        %2371 = vmatmul.mubr.bf16.gmra.mxu0 %v2233
        %v2372 = vpop.f32.mrf.mxu0
        %v2373 = vadd.f32 0.0, %v2372
        %v2374 = vpop.f32.mrf.mxu0
        %v2375 = vpop.f32.mrf.mxu0
        %v2376 = vadd.f32 0.0, %v2375
        %v2377 = vpop.f32.mrf.mxu0
        %2378 = vdwg.mxu0
        %v2379 = vadd.f32 %v2210, %v2317
        %v2380 = vadd.f32 %v2211, %v2320
        %v2381 = vadd.f32 %v2212, %v2325
        %v2382 = vadd.f32 %v2213, %v2328
        %v2383 = vadd.f32 %v2214, %v2333
        %v2384 = vadd.f32 %v2215, %v2336
        %v2385 = vadd.f32 %v2216, %v2341
        %v2386 = vadd.f32 %v2217, %v2344
        %v2387 = vadd.f32 %v2218, %v2349
        %v2388 = vadd.f32 %v2219, %v2352
        %v2389 = vadd.f32 %v2220, %v2357
        %v2390 = vadd.f32 %v2221, %v2360
        %v2391 = vadd.f32 %v2222, %v2365
        %v2392 = vadd.f32 %v2223, %v2368
        %v2393 = vadd.f32 %v2224, %v2373
        %v2394 = vadd.f32 %v2225, %v2376
        %v2395 = vld [vmem:[%s5] sm:$0x1]
        %v2397 = vlaneseq
        %v2398 = vshrl.u32 %v2397, 7
        %v2399 = vsub.s32 0, %v2398
        %v2400 = vrot.slane %v2395, %v2399
        %v2402 = vadd.f32 %v2379, %v2400
        %v2403 = vadd.f32 %v2380, %v2400
        %v2404 = vadd.f32 %v2381, %v2400
        %v2405 = vadd.f32 %v2382, %v2400
        %v2406 = vadd.f32 %v2383, %v2400
        %v2407 = vadd.f32 %v2384, %v2400
        %v2408 = vadd.f32 %v2385, %v2400
        %v2409 = vadd.f32 %v2386, %v2400
        %v2410 = vadd.f32 %v2387, %v2400
        %v2411 = vadd.f32 %v2388, %v2400
        %v2412 = vadd.f32 %v2389, %v2400
        %v2413 = vadd.f32 %v2390, %v2400
        %v2414 = vadd.f32 %v2391, %v2400
        %v2415 = vadd.f32 %v2392, %v2400
        %v2416 = vadd.f32 %v2393, %v2400
        %v2417 = vadd.f32 %v2394, %v2400
        %2418 = vmax.xlane.f32.xlu0 %v2402
        %v2419 = vpop.xlane.xlu0 %2418
        %2420 = vmax.xlane.f32.xlu0 %v2403
        %v2421 = vpop.xlane.xlu0 %2420
        %2422 = vmax.xlane.f32.xlu0 %v2404
        %v2423 = vpop.xlane.xlu0 %2422
        %2424 = vmax.xlane.f32.xlu0 %v2405
        %v2425 = vpop.xlane.xlu0 %2424
        %2426 = vmax.xlane.f32.xlu0 %v2406
        %v2427 = vpop.xlane.xlu0 %2426
        %2428 = vmax.xlane.f32.xlu0 %v2407
        %v2429 = vpop.xlane.xlu0 %2428
        %2430 = vmax.xlane.f32.xlu0 %v2408
        %v2431 = vpop.xlane.xlu0 %2430
        %2432 = vmax.xlane.f32.xlu0 %v2409
        %v2433 = vpop.xlane.xlu0 %2432
        %2434 = vmax.xlane.f32.xlu0 %v2410
        %v2435 = vpop.xlane.xlu0 %2434
        %2436 = vmax.xlane.f32.xlu0 %v2411
        %v2437 = vpop.xlane.xlu0 %2436
        %2438 = vmax.xlane.f32.xlu0 %v2412
        %v2439 = vpop.xlane.xlu0 %2438
        %2440 = vmax.xlane.f32.xlu0 %v2413
        %v2441 = vpop.xlane.xlu0 %2440
        %2442 = vmax.xlane.f32.xlu0 %v2414
        %v2443 = vpop.xlane.xlu0 %2442
        %2444 = vmax.xlane.f32.xlu0 %v2415
        %v2445 = vpop.xlane.xlu0 %2444
        %2446 = vmax.xlane.f32.xlu0 %v2416
        %v2447 = vpop.xlane.xlu0 %2446
        %2448 = vmax.xlane.f32.xlu0 %v2417
        %v2449 = vpop.xlane.xlu0 %2448
        %v2450 = vsub.f32 %v2402, %v2419
        %v2451 = vsub.f32 %v2403, %v2421
        %v2452 = vsub.f32 %v2404, %v2423
        %v2453 = vsub.f32 %v2405, %v2425
        %v2454 = vsub.f32 %v2406, %v2427
        %v2455 = vsub.f32 %v2407, %v2429
        %v2456 = vsub.f32 %v2408, %v2431
        %v2457 = vsub.f32 %v2409, %v2433
        %v2458 = vsub.f32 %v2410, %v2435
        %v2459 = vsub.f32 %v2411, %v2437
        %v2460 = vsub.f32 %v2412, %v2439
        %v2461 = vsub.f32 %v2413, %v2441
        %v2462 = vsub.f32 %v2414, %v2443
        %v2463 = vsub.f32 %v2415, %v2445
        %v2464 = vsub.f32 %v2416, %v2447
        %v2465 = vsub.f32 %v2417, %v2449
        %v2466 = vmul.f32 %v2450, 1.442695
        %v2467 = vpow.pop %v2466
        %v2468 = vmul.f32 %v2451, 1.442695
        %v2469 = vpow.pop %v2468
        %v2470 = vmul.f32 %v2452, 1.442695
        %v2471 = vpow.pop %v2470
        %v2472 = vmul.f32 %v2453, 1.442695
        %v2473 = vpow.pop %v2472
        %v2474 = vmul.f32 %v2454, 1.442695
        %v2475 = vpow.pop %v2474
        %v2476 = vmul.f32 %v2455, 1.442695
        %v2477 = vpow.pop %v2476
        %v2478 = vmul.f32 %v2456, 1.442695
        %v2479 = vpow.pop %v2478
        %v2480 = vmul.f32 %v2457, 1.442695
        %v2481 = vpow.pop %v2480
        %v2482 = vmul.f32 %v2458, 1.442695
        %v2483 = vpow.pop %v2482
        %v2484 = vmul.f32 %v2459, 1.442695
        %v2485 = vpow.pop %v2484
        %v2486 = vmul.f32 %v2460, 1.442695
        %v2487 = vpow.pop %v2486
        %v2488 = vmul.f32 %v2461, 1.442695
        %v2489 = vpow.pop %v2488
        %v2490 = vmul.f32 %v2462, 1.442695
        %v2491 = vpow.pop %v2490
        %v2492 = vmul.f32 %v2463, 1.442695
        %v2493 = vpow.pop %v2492
        %v2494 = vmul.f32 %v2464, 1.442695
        %v2495 = vpow.pop %v2494
        %v2496 = vmul.f32 %v2465, 1.442695
        %v2497 = vpow.pop %v2496
        %2498 = vadd.xlane.f32.xlu0 %v2467
        %v2499 = vpop.xlane.xlu0 %2498
        %2500 = vadd.xlane.f32.xlu0 %v2469
        %v2501 = vpop.xlane.xlu0 %2500
        %2502 = vadd.xlane.f32.xlu0 %v2471
        %v2503 = vpop.xlane.xlu0 %2502
        %2504 = vadd.xlane.f32.xlu0 %v2473
        %v2505 = vpop.xlane.xlu0 %2504
        %2506 = vadd.xlane.f32.xlu0 %v2475
        %v2507 = vpop.xlane.xlu0 %2506
        %2508 = vadd.xlane.f32.xlu0 %v2477
        %v2509 = vpop.xlane.xlu0 %2508
        %2510 = vadd.xlane.f32.xlu0 %v2479
        %v2511 = vpop.xlane.xlu0 %2510
        %2512 = vadd.xlane.f32.xlu0 %v2481
        %v2513 = vpop.xlane.xlu0 %2512
        %2514 = vadd.xlane.f32.xlu0 %v2483
        %v2515 = vpop.xlane.xlu0 %2514
        %2516 = vadd.xlane.f32.xlu0 %v2485
        %v2517 = vpop.xlane.xlu0 %2516
        %2518 = vadd.xlane.f32.xlu0 %v2487
        %v2519 = vpop.xlane.xlu0 %2518
        %2520 = vadd.xlane.f32.xlu0 %v2489
        %v2521 = vpop.xlane.xlu0 %2520
        %2522 = vadd.xlane.f32.xlu0 %v2491
        %v2523 = vpop.xlane.xlu0 %2522
        %2524 = vadd.xlane.f32.xlu0 %v2493
        %v2525 = vpop.xlane.xlu0 %2524
        %2526 = vadd.xlane.f32.xlu0 %v2495
        %v2527 = vpop.xlane.xlu0 %2526
        %2528 = vadd.xlane.f32.xlu0 %v2497
        %v2529 = vpop.xlane.xlu0 %2528
        %v2530 = vlog2.pop %v2499
        %v2531 = vmul.f32 %v2530, 0.6931472
        %v2532 = vlog2.pop %v2501
        %v2533 = vmul.f32 %v2532, 0.6931472
        %v2534 = vlog2.pop %v2503
        %v2535 = vmul.f32 %v2534, 0.6931472
        %v2536 = vlog2.pop %v2505
        %v2537 = vmul.f32 %v2536, 0.6931472
        %v2538 = vlog2.pop %v2507
        %v2539 = vmul.f32 %v2538, 0.6931472
        %v2540 = vlog2.pop %v2509
        %v2541 = vmul.f32 %v2540, 0.6931472
        %v2542 = vlog2.pop %v2511
        %v2543 = vmul.f32 %v2542, 0.6931472
        %v2544 = vlog2.pop %v2513
        %v2545 = vmul.f32 %v2544, 0.6931472
        %v2546 = vlog2.pop %v2515
        %v2547 = vmul.f32 %v2546, 0.6931472
        %v2548 = vlog2.pop %v2517
        %v2549 = vmul.f32 %v2548, 0.6931472
        %v2550 = vlog2.pop %v2519
        %v2551 = vmul.f32 %v2550, 0.6931472
        %v2552 = vlog2.pop %v2521
        %v2553 = vmul.f32 %v2552, 0.6931472
        %v2554 = vlog2.pop %v2523
        %v2555 = vmul.f32 %v2554, 0.6931472
        %v2556 = vlog2.pop %v2525
        %v2557 = vmul.f32 %v2556, 0.6931472
        %v2558 = vlog2.pop %v2527
        %v2559 = vmul.f32 %v2558, 0.6931472
        %v2560 = vlog2.pop %v2529
        %v2561 = vmul.f32 %v2560, 0.6931472
        %v2562 = vsub.f32 %v2450, %v2531
        %v2563 = vsub.f32 %v2451, %v2533
        %v2564 = vsub.f32 %v2452, %v2535
        %v2565 = vsub.f32 %v2453, %v2537
        %v2566 = vsub.f32 %v2454, %v2539
        %v2567 = vsub.f32 %v2455, %v2541
        %v2568 = vsub.f32 %v2456, %v2543
        %v2569 = vsub.f32 %v2457, %v2545
        %v2570 = vsub.f32 %v2458, %v2547
        %v2571 = vsub.f32 %v2459, %v2549
        %v2572 = vsub.f32 %v2460, %v2551
        %v2573 = vsub.f32 %v2461, %v2553
        %v2574 = vsub.f32 %v2462, %v2555
        %v2575 = vsub.f32 %v2463, %v2557
        %v2576 = vsub.f32 %v2464, %v2559
        %v2577 = vsub.f32 %v2465, %v2561
        %2578 = vst [vmem:[%s283] sm:$0xff] %v2562
        %2579 = vst [vmem:[%s283 + $0x8] sm:$0xff] %v2563
        %2580 = vst [vmem:[%s283 + $0x10] sm:$0xff] %v2564
        %2581 = vst [vmem:[%s283 + $0x18] sm:$0xff] %v2565
        %2582 = vst [vmem:[%s283 + $0x20] sm:$0xff] %v2566
        %2583 = vst [vmem:[%s283 + $0x28] sm:$0xff] %v2567
        %2584 = vst [vmem:[%s283 + $0x30] sm:$0xff] %v2568
        %2585 = vst [vmem:[%s283 + $0x38] sm:$0xff] %v2569
        %2586 = vst [vmem:[%s283 + $0x40] sm:$0xff] %v2570
        %2587 = vst [vmem:[%s283 + $0x48] sm:$0xff] %v2571
        %2588 = vst [vmem:[%s283 + $0x50] sm:$0xff] %v2572
        %2589 = vst [vmem:[%s283 + $0x58] sm:$0xff] %v2573
        %2590 = vst [vmem:[%s283 + $0x60] sm:$0xff] %v2574
        %2591 = vst [vmem:[%s283 + $0x68] sm:$0xff] %v2575
        %2592 = vst [vmem:[%s283 + $0x70] sm:$0xff] %v2576
        %2593 = vst [vmem:[%s283 + $0x78] sm:$0xff] %v2577
      $region56: #{_ognn_forward_impl.1} parent=43 // pred_fallthru
        _
      %s2594 = smul.u32 16, %s22
      %p2595 = scmp.lt.s32.totalorder %s2594, 15
      %s2596 = scalar_select %p2595, %s2594, 15
      %s2597 = smul.addr %s2596, 8
      %s2598 = scalar_lea.vmem %s6, %s2597
      // Predicated region
      $region57: #{_ognn_forward_impl.1} parent=43 // pred_check
        %p2599 = pneg %p183
      $region58: #{_ognn_forward_impl.1} parent=43 // pred_check_branch
        %2601 = sbr.rel (%p2599) target = $region60
      $region59: #{_ognn_forward_impl.1} parent=43 // pred_region
        %s2602 = smul.u32 16, %s22
      $region60: #{_ognn_forward_impl.1} parent=43 // pred_fallthru
        _
      // Predicated region
      $region61: #{_ognn_forward_impl.1} parent=43 // pred_check
        %p2603 = pneg %p183
      $region62: #{_ognn_forward_impl.1} parent=43 // pred_check_branch
        %2605 = sbr.rel (%p2603) target = $region64
      $region63: #{_ognn_forward_impl.1} parent=43 // pred_region
        %s2606 = smul.u32 16, %s22
        %p2607 = scmp.lt.s32.totalorder %s2606, 15
        %s2608 = scalar_select %p2607, %s2606, 15
        %s2609 = smul.addr %s2608, 8
        %s2610 = scalar_lea.vmem %s6, %s2609
      $region64: #{_ognn_forward_impl.1} parent=43 // pred_fallthru
        _
    $region44: #{_ognn_forward_impl.1} parent=5 // pred_fallthru
      _
    %p2611 = scmp.le.s32.totalorder 2, %s12
    // Predicated region
    $region65: #{_ognn_forward_impl.1} parent=5 // pred_check
      %p2612 = pneg %p2611
    $region66: #{_ognn_forward_impl.1} parent=5 // pred_check_branch
      %2614 = sbr.rel (%p2612) target = $region68
    $region67: #{_ognn_forward_impl.1} parent=5 // pred_region
      %s2615 = ssub.s32 %s12, 2
    $region68: #{_ognn_forward_impl.1} parent=5 // pred_fallthru
      _
  $region6: #{_ognn_forward_impl.1} parent=0 // loop_footer
    %s16 = sadd.s32 1, %s12
  $region7: #{_ognn_forward_impl.1} parent=0 // loop_footer_branch
    %11 = sbr.rel target = $region3
  $region8: #{_ognn_forward_impl.1} parent=0 // loop_exit
    _

// kernel: _ognn_forward_impl.1
$region0: #{_ognn_forward_impl.1}
  #allocation0 [shape = 'u32[]', space=smem, size = 0x4, offset = 0x4, fixed_abs, tag = 'smem constant byte address 0x4 - core index']
  #allocation1 [shape = 'u32[144,128]{1,0:T(1,128)}', space=vmem, size = 0x12000, scoped, tag = 'internal scratch']
  #allocation2 [shape = 'bf16[2,128,128]{2,1,0:T(8,128)(2,1)}', space=vmem, size = 0x10000, scoped, tag = 'scratch operand']
  #allocation3 [shape = 'f32[128,128]{1,0:T(8,128)}', space=vmem, size = 0x10000, scoped, tag = 'scratch operand']
  %s0 = inlined_call_operand.vmem [shape: bf16[128,128], index: 0, kind: input, shape index: {}]
  %s1 = inlined_call_operand.vmem [shape: bf16[128,128], index: 1, kind: input, shape index: {}]
  %s2 = inlined_call_operand.vmem [shape: bf16[3,128,128], index: 2, kind: input, shape index: {}]
  %s3 = inlined_call_operand.vmem [shape: f32[8,128], index: 3, kind: input, shape index: {}]
  %s4 = inlined_call_operand.vmem [shape: bf16[3,128,128], index: 4, kind: input, shape index: {}]
  %s5 = inlined_call_operand.vmem [shape: f32[1,128], index: 5, kind: input, shape index: {}]
  %s6 = inlined_call_operand.vmem [shape: f32[128,128], index: 6, kind: output, shape index: {}]
  %s7 = sld [smem:[#allocation0]]
  $region69: #{_ognn_forward_impl.1} parent=0
    _
  %s9 = ssub.s32 1, %s7
  %s10 = scalar_select 0, %s9, %s7
  loop: start=0, step=1, limit=5
  $region2: #{_ognn_forward_impl.1} parent=0 // loop_pre_header
    _
  $region3: #{_ognn_forward_impl.1} parent=0 // loop_header
    %s12 = sphi 0, %s16
    %p13 = scmp.ge.s32.totalorder %s12, 5
    %s19 = sphi 0, %s31
    %s20 = sphi 0, %s27
    %s21 = sphi 0, %s19
    %s22 = sphi 0, %s20
    %s23 = sphi 0, %s21
    %s24 = sphi 0, %s22
    %s32 = sphi 0, %s32
    %s34 = sphi 0, %s32
    %s35 = sphi 0, %s34
    %s49 = sphi 0, %s35
    %s53 = sphi 0, %s53
    %s55 = sphi 0, %s53
    %s56 = sphi 0, %s55
    %s70 = sphi 0, %s56
    %s76 = sphi 0, %s78
    %s79 = sphi 0, %s76
    %s80 = sphi 0, %s79
    %s96 = sphi 0, %s80
    %s100 = sphi 0, %s100
    %s102 = sphi 0, %s100
    %s103 = sphi 0, %s102
    %s117 = sphi 0, %s103
    %s123 = sphi 0, %s125
    %s126 = sphi 0, %s123
    %s127 = sphi 0, %s126
    %s143 = sphi 0, %s127
    %s147 = sphi 0, %s147
    %s149 = sphi 0, %s147
    %s150 = sphi 0, %s149
    %s164 = sphi 0, %s150
    %s170 = sphi 0, %s172
    %s173 = sphi 0, %s170
    %s174 = sphi 0, %s173
    %s190 = sphi 0, %s174
  $region4: #{_ognn_forward_impl.1} parent=0 // loop_header_branch
    %15 = sbr.rel (%p13) target = $region8
  $region5: #{_ognn_forward_impl.1} parent=0 // loop_body
    %s17 = ssub.s32 %s12, 1
    %s18 = ssub.s32 %s12, 2
    %s25 = sadd.s32 1, %s20
    %p26 = scmp.ge.s32.totalorder %s25, 1
    %s27 = scalar_select %p26, 0, %s25
    %s28 = sadd.s32 1, %s19
    %s29 = scalar_select %p26, %s28, %s19
    %p30 = scmp.ge.s32.totalorder %s29, 3
    %s31 = scalar_select %p30, 0, %s29
    %s33 = sadd.s32 %s32, 1
    %p36 = scmp.eq.s32.totalorder %s12, 2
    %p37 = scmp.ne.s32.totalorder %s32, %s34
    %p38 = scmp.eq.s32.totalorder %s12, 0
    %p39 = por %p37, %p38
    %p40 = scmp.ne.s32.totalorder %s32, %s34
    %p41 = scmp.eq.s32.totalorder %s17, 2
    %p42 = por %p40, %p41
    %p43 = scmp.ne.s32.totalorder %s34, %s35
    %p44 = scmp.eq.s32.totalorder %s17, 0
    %p45 = por %p43, %p44
    %p46 = scmp.ne.s32.totalorder %s34, %s35
    %p47 = scmp.eq.s32.totalorder %s18, 2
    %p48 = por %p46, %p47
    %p50 = scmp.ne.s32.totalorder %s35, %s49
    %p51 = scmp.eq.s32.totalorder %s18, 0
    %p52 = por %p50, %p51
    %s54 = sadd.s32 %s53, 1
    %p57 = scmp.eq.s32.totalorder %s12, 2
    %p58 = scmp.ne.s32.totalorder %s53, %s55
    %p59 = scmp.eq.s32.totalorder %s12, 0
    %p60 = por %p58, %p59
    %p61 = scmp.ne.s32.totalorder %s53, %s55
    %p62 = scmp.eq.s32.totalorder %s17, 2
    %p63 = por %p61, %p62
    %p64 = scmp.ne.s32.totalorder %s55, %s56
    %p65 = scmp.eq.s32.totalorder %s17, 0
    %p66 = por %p64, %p65
    %p67 = scmp.ne.s32.totalorder %s55, %s56
    %p68 = scmp.eq.s32.totalorder %s18, 2
    %p69 = por %p67, %p68
    %p71 = scmp.ne.s32.totalorder %s56, %s70
    %p72 = scmp.eq.s32.totalorder %s18, 0
    %p73 = por %p71, %p72
    %s74 = ssub.s32 %s19, %s31
    %p75 = scmp.eq.s32.totalorder %s74, 0
    %s77 = sadd.s32 %s76, 1
    %s78 = scalar_select %p75, %s76, %s77
    %p81 = pneg %p75
    %p82 = scmp.eq.s32.totalorder %s12, 2
    %p83 = por %p81, %p82
    %p84 = scmp.ne.s32.totalorder %s76, %s79
    %p85 = scmp.eq.s32.totalorder %s12, 0
    %p86 = por %p84, %p85
    %p87 = scmp.ne.s32.totalorder %s76, %s79
    %p88 = scmp.eq.s32.totalorder %s17, 2
    %p89 = por %p87, %p88
    %p90 = scmp.ne.s32.totalorder %s79, %s80
    %p91 = scmp.eq.s32.totalorder %s17, 0
    %p92 = por %p90, %p91
    %p93 = scmp.ne.s32.totalorder %s79, %s80
    %p94 = scmp.eq.s32.totalorder %s18, 2
    %p95 = por %p93, %p94
    %p97 = scmp.ne.s32.totalorder %s80, %s96
    %p98 = scmp.eq.s32.totalorder %s18, 0
    %p99 = por %p97, %p98
    %s101 = sadd.s32 %s100, 1
    %p104 = scmp.eq.s32.totalorder %s12, 2
    %p105 = scmp.ne.s32.totalorder %s100, %s102
    %p106 = scmp.eq.s32.totalorder %s12, 0
    %p107 = por %p105, %p106
    %p108 = scmp.ne.s32.totalorder %s100, %s102
    %p109 = scmp.eq.s32.totalorder %s17, 2
    %p110 = por %p108, %p109
    %p111 = scmp.ne.s32.totalorder %s102, %s103
    %p112 = scmp.eq.s32.totalorder %s17, 0
    %p113 = por %p111, %p112
    %p114 = scmp.ne.s32.totalorder %s102, %s103
    %p115 = scmp.eq.s32.totalorder %s18, 2
    %p116 = por %p114, %p115
    %p118 = scmp.ne.s32.totalorder %s103, %s117
    %p119 = scmp.eq.s32.totalorder %s18, 0
    %p120 = por %p118, %p119
    %s121 = ssub.s32 %s19, %s31
    %p122 = scmp.eq.s32.totalorder %s121, 0
    %s124 = sadd.s32 %s123, 1
    %s125 = scalar_select %p122, %s123, %s124
    %p128 = pneg %p122
    %p129 = scmp.eq.s32.totalorder %s12, 2
    %p130 = por %p128, %p129
    %p131 = scmp.ne.s32.totalorder %s123, %s126
    %p132 = scmp.eq.s32.totalorder %s12, 0
    %p133 = por %p131, %p132
    %p134 = scmp.ne.s32.totalorder %s123, %s126
    %p135 = scmp.eq.s32.totalorder %s17, 2
    %p136 = por %p134, %p135
    %p137 = scmp.ne.s32.totalorder %s126, %s127
    %p138 = scmp.eq.s32.totalorder %s17, 0
    %p139 = por %p137, %p138
    %p140 = scmp.ne.s32.totalorder %s126, %s127
    %p141 = scmp.eq.s32.totalorder %s18, 2
    %p142 = por %p140, %p141
    %p144 = scmp.ne.s32.totalorder %s127, %s143
    %p145 = scmp.eq.s32.totalorder %s18, 0
    %p146 = por %p144, %p145
    %s148 = sadd.s32 %s147, 1
    %p151 = scmp.eq.s32.totalorder %s12, 2
    %p152 = scmp.ne.s32.totalorder %s147, %s149
    %p153 = scmp.eq.s32.totalorder %s12, 0
    %p154 = por %p152, %p153
    %p155 = scmp.ne.s32.totalorder %s147, %s149
    %p156 = scmp.eq.s32.totalorder %s17, 2
    %p157 = por %p155, %p156
    %p158 = scmp.ne.s32.totalorder %s149, %s150
    %p159 = scmp.eq.s32.totalorder %s17, 0
    %p160 = por %p158, %p159
    %p161 = scmp.ne.s32.totalorder %s149, %s150
    %p162 = scmp.eq.s32.totalorder %s18, 2
    %p163 = por %p161, %p162
    %p165 = scmp.ne.s32.totalorder %s150, %s164
    %p166 = scmp.eq.s32.totalorder %s18, 0
    %p167 = por %p165, %p166
    %s168 = ssub.s32 %s20, %s27
    %p169 = scmp.eq.s32.totalorder %s168, 0
    %s171 = sadd.s32 %s170, 1
    %s172 = scalar_select %p169, %s170, %s171
    %p175 = pneg %p169
    %p176 = scmp.eq.s32.totalorder %s12, 2
    %p177 = por %p175, %p176
    %p178 = scmp.ne.s32.totalorder %s170, %s173
    %p179 = scmp.eq.s32.totalorder %s12, 0
    %p180 = por %p178, %p179
    %p181 = scmp.ne.s32.totalorder %s170, %s173
    %p182 = scmp.eq.s32.totalorder %s17, 2
    %p183 = por %p181, %p182
    %p184 = scmp.ne.s32.totalorder %s173, %s174
    %p185 = scmp.eq.s32.totalorder %s17, 0
    %p186 = por %p184, %p185
    %p187 = scmp.ne.s32.totalorder %s173, %s174
    %p188 = scmp.eq.s32.totalorder %s18, 2
    %p189 = por %p187, %p188
    %p191 = scmp.ne.s32.totalorder %s174, %s190
    %p192 = scmp.eq.s32.totalorder %s18, 0
    %p193 = por %p191, %p192
    %p194 = scmp.le.s32.totalorder 1, %s12
    %p195 = scmp.lt.s32.totalorder %s12, 4
    %p196 = pnand %p194, %p195
    %p197 = pneg %p196
    // Predicated region
    $region9: #{_ognn_forward_impl.1} parent=5 // pred_check
      _
    $region10: #{_ognn_forward_impl.1} parent=5 // pred_check_branch
      %199 = sbr.rel (%p196) target = $region12
    $region11: #{_ognn_forward_impl.1} parent=5 // pred_region
      %s200 = ssub.s32 %s12, 1
      // Predicated region
      $region13: #{_ognn_forward_impl.1} parent=11 // pred_check
        %p201 = pneg %p45
      $region14: #{_ognn_forward_impl.1} parent=11 // pred_check_branch
        %203 = sbr.rel (%p201) target = $region16
      $region15: #{_ognn_forward_impl.1} parent=11 // pred_region
        _
      $region16: #{_ognn_forward_impl.1} parent=11 // pred_fallthru
        _
      // Predicated region
      $region17: #{_ognn_forward_impl.1} parent=11 // pred_check
        %p204 = pneg %p66
      $region18: #{_ognn_forward_impl.1} parent=11 // pred_check_branch
        %206 = sbr.rel (%p204) target = $region20
      $region19: #{_ognn_forward_impl.1} parent=11 // pred_region
        _
      $region20: #{_ognn_forward_impl.1} parent=11 // pred_fallthru
        _
      // Predicated region
      $region21: #{_ognn_forward_impl.1} parent=11 // pred_check
        %p207 = pneg %p113
      $region22: #{_ognn_forward_impl.1} parent=11 // pred_check_branch
        %209 = sbr.rel (%p207) target = $region24
      $region23: #{_ognn_forward_impl.1} parent=11 // pred_region
        _
      $region24: #{_ognn_forward_impl.1} parent=11 // pred_fallthru
        _
      // Predicated region
      $region25: #{_ognn_forward_impl.1} parent=11 // pred_check
        %p210 = pneg %p160
      $region26: #{_ognn_forward_impl.1} parent=11 // pred_check_branch
        %212 = sbr.rel (%p210) target = $region28
      $region27: #{_ognn_forward_impl.1} parent=11 // pred_region
        _
      $region28: #{_ognn_forward_impl.1} parent=11 // pred_fallthru
        _
    $region12: #{_ognn_forward_impl.1} parent=5 // pred_fallthru
      _
    %p213 = scmp.lt.s32.totalorder %s12, 3
    // Predicated region
    $region29: #{_ognn_forward_impl.1} parent=5 // pred_check
      %p214 = pneg %p213
    $region30: #{_ognn_forward_impl.1} parent=5 // pred_check_branch
      %216 = sbr.rel (%p214) target = $region32
    $region31: #{_ognn_forward_impl.1} parent=5 // pred_region
      // Predicated region
      $region33: #{_ognn_forward_impl.1} parent=31 // pred_check
        %p217 = pneg %p86
      $region34: #{_ognn_forward_impl.1} parent=31 // pred_check_branch
        %219 = sbr.rel (%p217) target = $region36
      $region35: #{_ognn_forward_impl.1} parent=31 // pred_region
        %p220 = scmp.lt.s32.totalorder %s19, 2
        %s221 = scalar_select %p220, %s19, 2
        %s222 = smul.addr %s221, 16
        %s223 = smul.addr %s222, 4
        %s224 = scalar_lea.vmem %s2, %s223
      $region36: #{_ognn_forward_impl.1} parent=31 // pred_fallthru
        _
      // Predicated region
      $region37: #{_ognn_forward_impl.1} parent=31 // pred_check
        %p225 = pneg %p133
      $region38: #{_ognn_forward_impl.1} parent=31 // pred_check_branch
        %227 = sbr.rel (%p225) target = $region40
      $region39: #{_ognn_forward_impl.1} parent=31 // pred_region
        %p228 = scmp.lt.s32.totalorder %s19, 2
        %s229 = scalar_select %p228, %s19, 2
        %s230 = smul.addr %s229, 16
        %s231 = smul.addr %s230, 4
        %s232 = scalar_lea.vmem %s4, %s231
      $region40: #{_ognn_forward_impl.1} parent=31 // pred_fallthru
        _
    $region32: #{_ognn_forward_impl.1} parent=5 // pred_fallthru
      _
    %p233 = scmp.le.s32.totalorder 1, %s12
    %p234 = scmp.lt.s32.totalorder %s12, 4
    %p235 = pnand %p233, %p234
    %p236 = pneg %p235
    // Predicated region
    $region41: #{_ognn_forward_impl.1} parent=5 // pred_check
      _
    $region42: #{_ognn_forward_impl.1} parent=5 // pred_check_branch
      %238 = sbr.rel (%p235) target = $region44
    $region43: #{_ognn_forward_impl.1} parent=5 // pred_region
      %s239 = ssub.s32 %s12, 1
      %p240 = pneg %p45
      %p241 = pneg %p42
      %p242 = pneg %p66
      %p243 = pneg %p63
      %p244 = scmp.lt.s32.totalorder %s21, 2
      %s245 = scalar_select %p244, %s21, 2
      %s246 = smul.addr %s245, 16
      %s247 = smul.addr %s246, 4
      %s248 = scalar_lea.vmem %s2, %s247
      %p249 = pneg %p92
      %p250 = pneg %p89
      %p251 = pneg %p113
      %p252 = pneg %p110
      %p253 = scmp.lt.s32.totalorder %s21, 2
      %s254 = scalar_select %p253, %s21, 2
      %s255 = smul.addr %s254, 16
      %s256 = smul.addr %s255, 4
      %s257 = scalar_lea.vmem %s4, %s256
      %p258 = pneg %p139
      %p259 = pneg %p136
      %p260 = pneg %p160
      %p261 = pneg %p157
      %p262 = pneg %p186
      %p263 = pneg %p183
      %s264 = smul.u32 16, %s22
      %p265 = scmp.lt.s32.totalorder %s264, 15
      %s266 = scalar_select %p265, %s264, 15
      %s267 = smul.addr %s266, 8
      %s268 = scalar_lea.vmem %s6, %s267
      %p269 = scmp.lt.s32.totalorder %s21, 2
      %s270 = scalar_select %p269, %s21, 2
      %s271 = smul.addr %s270, 16
      %s272 = smul.addr %s271, 4
      %s273 = scalar_lea.vmem %s2, %s272
      %p274 = scmp.lt.s32.totalorder %s21, 2
      %s275 = scalar_select %p274, %s21, 2
      %s276 = smul.addr %s275, 16
      %s277 = smul.addr %s276, 4
      %s278 = scalar_lea.vmem %s4, %s277
      %s279 = smul.u32 16, %s22
      %p280 = scmp.lt.s32.totalorder %s279, 15
      %s281 = scalar_select %p280, %s279, 15
      %s282 = smul.addr %s281, 8
      %s283 = scalar_lea.vmem %s6, %s282
      %s284 = smul.u32 16, %s22
      %s286 = smul.u32 %s22, 128
      %s287 = sshra.s32 %s286, 3
      %s288 = sand.u32 %s286, 7
      %s289 = smul.addr %s287, 4
      %s290 = scalar_lea.vmem %s0, %s289
      %v291 = vld [vmem:[%s290] sm:$0xf]
      %v292 = vld [vmem:[%s290 + $0x4] sm:$0xf]
      %v293 = vld [vmem:[%s290 + $0x8] sm:$0xf]
      %v294 = vld [vmem:[%s290 + $0xc] sm:$0xf]
      %v295 = vld [vmem:[%s290 + $0x10] sm:$0xf]
      %v296 = vld [vmem:[%s290 + $0x14] sm:$0xf]
      %v297 = vld [vmem:[%s290 + $0x18] sm:$0xf]
      %v298 = vld [vmem:[%s290 + $0x1c] sm:$0xf]
      %v299 = vld [vmem:[%s290 + $0x20] sm:$0xf]
      %v300 = vld [vmem:[%s290 + $0x24] sm:$0xf]
      %v301 = vld [vmem:[%s290 + $0x28] sm:$0xf]
      %v302 = vld [vmem:[%s290 + $0x2c] sm:$0xf]
      %v303 = vld [vmem:[%s290 + $0x30] sm:$0xf]
      %v304 = vld [vmem:[%s290 + $0x34] sm:$0xf]
      %v305 = vld [vmem:[%s290 + $0x38] sm:$0xf]
      %v306 = vld [vmem:[%s290 + $0x3c] sm:$0xf]
      %v307 = vld [vmem:[%s273] sm:$0xf]
      %v308 = vld [vmem:[%s273 + $0x4] sm:$0xf]
      %v309 = vld [vmem:[%s273 + $0x8] sm:$0xf]
      %v310 = vld [vmem:[%s273 + $0xc] sm:$0xf]
      %v311 = vld [vmem:[%s273 + $0x10] sm:$0xf]
      %v312 = vld [vmem:[%s273 + $0x14] sm:$0xf]
      %v313 = vld [vmem:[%s273 + $0x18] sm:$0xf]
      %v314 = vld [vmem:[%s273 + $0x1c] sm:$0xf]
      %v315 = vld [vmem:[%s273 + $0x20] sm:$0xf]
      %v316 = vld [vmem:[%s273 + $0x24] sm:$0xf]
      %v317 = vld [vmem:[%s273 + $0x28] sm:$0xf]
      %v318 = vld [vmem:[%s273 + $0x2c] sm:$0xf]
      %v319 = vld [vmem:[%s273 + $0x30] sm:$0xf]
      %v320 = vld [vmem:[%s273 + $0x34] sm:$0xf]
      %v321 = vld [vmem:[%s273 + $0x38] sm:$0xf]
      %v322 = vld [vmem:[%s273 + $0x3c] sm:$0xf]
      %v323 = vld [vmem:[%s278] sm:$0xf]
      %v324 = vld [vmem:[%s278 + $0x4] sm:$0xf]
      %v325 = vld [vmem:[%s278 + $0x8] sm:$0xf]
      %v326 = vld [vmem:[%s278 + $0xc] sm:$0xf]
      %v327 = vld [vmem:[%s278 + $0x10] sm:$0xf]
      %v328 = vld [vmem:[%s278 + $0x14] sm:$0xf]
      %v329 = vld [vmem:[%s278 + $0x18] sm:$0xf]
      %v330 = vld [vmem:[%s278 + $0x1c] sm:$0xf]
      %v331 = vld [vmem:[%s278 + $0x20] sm:$0xf]
      %v332 = vld [vmem:[%s278 + $0x24] sm:$0xf]
      %v333 = vld [vmem:[%s278 + $0x28] sm:$0xf]
      %v334 = vld [vmem:[%s278 + $0x2c] sm:$0xf]
      %v335 = vld [vmem:[%s278 + $0x30] sm:$0xf]
      %v336 = vld [vmem:[%s278 + $0x34] sm:$0xf]
      %v337 = vld [vmem:[%s278 + $0x38] sm:$0xf]
      %v338 = vld [vmem:[%s278 + $0x3c] sm:$0xf]
      %v339 = vld [vmem:[%s3] sm:$0xff]
      %p340 = scmp.eq.s32.totalorder %s21, 0
      // Predicated region
      $region45: #{_ognn_forward_impl.1} parent=43 // pred_check
        %p341 = pneg %p340
      $region46: #{_ognn_forward_impl.1} parent=43 // pred_check_branch
        %343 = sbr.rel (%p341) target = $region48
      $region47: #{_ognn_forward_impl.1} parent=43 // pred_region
        %v344 = vld [vmem:[%s1] sm:$0xf]
        %v345 = vld [vmem:[%s1 + $0x4] sm:$0xf]
        %v346 = vld [vmem:[%s1 + $0x8] sm:$0xf]
        %v347 = vld [vmem:[%s1 + $0xc] sm:$0xf]
        %v348 = vld [vmem:[%s1 + $0x10] sm:$0xf]
        %v349 = vld [vmem:[%s1 + $0x14] sm:$0xf]
        %v350 = vld [vmem:[%s1 + $0x18] sm:$0xf]
        %v351 = vld [vmem:[%s1 + $0x1c] sm:$0xf]
        %v352 = vld [vmem:[%s1 + $0x20] sm:$0xf]
        %v353 = vld [vmem:[%s1 + $0x24] sm:$0xf]
        %v354 = vld [vmem:[%s1 + $0x28] sm:$0xf]
        %v355 = vld [vmem:[%s1 + $0x2c] sm:$0xf]
        %v356 = vld [vmem:[%s1 + $0x30] sm:$0xf]
        %v357 = vld [vmem:[%s1 + $0x34] sm:$0xf]
        %v358 = vld [vmem:[%s1 + $0x38] sm:$0xf]
        %v359 = vld [vmem:[%s1 + $0x3c] sm:$0xf]
        %v376 = vunpack.c.l.b16 %v291
        %v377 = vunpack.c.l.b16 %v292
        %v378 = vunpack.c.l.b16 %v293
        %v379 = vunpack.c.l.b16 %v294
        %v380 = vunpack.c.l.b16 %v295
        %v381 = vunpack.c.l.b16 %v296
        %v382 = vunpack.c.l.b16 %v297
        %v383 = vunpack.c.l.b16 %v298
        %v384 = vunpack.c.l.b16 %v299
        %v385 = vunpack.c.l.b16 %v300
        %v386 = vunpack.c.l.b16 %v301
        %v387 = vunpack.c.l.b16 %v302
        %v388 = vunpack.c.l.b16 %v303
        %v389 = vunpack.c.l.b16 %v304
        %v390 = vunpack.c.l.b16 %v305
        %v391 = vunpack.c.l.b16 %v306
        %v392 = vpack.c.b16 %v377, %v376
        %v393 = vpack.c.b16 %v379, %v378
        %v394 = vpack.c.b16 %v381, %v380
        %v395 = vpack.c.b16 %v383, %v382
        %v396 = vpack.c.b16 %v385, %v384
        %v397 = vpack.c.b16 %v387, %v386
        %v398 = vpack.c.b16 %v389, %v388
        %v399 = vpack.c.b16 %v391, %v390
        %v424 = vunpack.c.l.b16 %v344
        %v425 = vunpack.c.l.b16 %v345
        %v426 = vunpack.c.l.b16 %v346
        %v427 = vunpack.c.l.b16 %v347
        %v428 = vunpack.c.l.b16 %v348
        %v429 = vunpack.c.l.b16 %v349
        %v430 = vunpack.c.l.b16 %v350
        %v431 = vunpack.c.l.b16 %v351
        %v432 = vunpack.c.l.b16 %v352
        %v433 = vunpack.c.l.b16 %v353
        %v434 = vunpack.c.l.b16 %v354
        %v435 = vunpack.c.l.b16 %v355
        %v436 = vunpack.c.l.b16 %v356
        %v437 = vunpack.c.l.b16 %v357
        %v438 = vunpack.c.l.b16 %v358
        %v439 = vunpack.c.l.b16 %v359
        %v440 = vpack.c.b16 %v425, %v424
        %v441 = vpack.c.b16 %v427, %v426
        %v442 = vpack.c.b16 %v429, %v428
        %v443 = vpack.c.b16 %v431, %v430
        %v444 = vpack.c.b16 %v433, %v432
        %v445 = vpack.c.b16 %v435, %v434
        %v446 = vpack.c.b16 %v437, %v436
        %v447 = vpack.c.b16 %v439, %v438
        %456 = vmatprep.subr.bf16.mxu0 0
        %457 = vmatpush1.bf16.msra.mxu0 %v447
        %458 = vmatprep.subr.bf16.mxu0 0
        %459 = vmatpush1.bf16.msra.mxu0 %v446
        %460 = vmatprep.subr.bf16.mxu0 0
        %461 = vmatpush1.bf16.msra.mxu0 %v445
        %462 = vmatprep.subr.bf16.mxu0 0
        %463 = vmatpush1.bf16.msra.mxu0 %v444
        %464 = vmatprep.subr.bf16.mxu0 0
        %465 = vmatpush1.bf16.msra.mxu0 %v443
        %466 = vmatprep.subr.bf16.mxu0 0
        %467 = vmatpush1.bf16.msra.mxu0 %v442
        %468 = vmatprep.subr.bf16.mxu0 0
        %469 = vmatpush1.bf16.msra.mxu0 %v441
        %470 = vmatprep.subr.bf16.mxu0 0
        %471 = vmatpush1.bf16.msra.mxu0 %v440
        %472 = vmatprep.subr.bf16.mxu0 0
        %473 = vmatpush2.bf16.msra.mxu0 0
        %474 = vmatprep.subr.bf16.mxu0 0
        %475 = vmatpush2.bf16.msra.mxu0 0
        %476 = vmatprep.subr.bf16.mxu0 0
        %477 = vmatpush2.bf16.msra.mxu0 0
        %478 = vmatprep.subr.bf16.mxu0 0
        %479 = vmatpush2.bf16.msra.mxu0 0
        %480 = vmatprep.subr.bf16.mxu0 0
        %481 = vmatpush2.bf16.msra.mxu0 0
        %482 = vmatprep.subr.bf16.mxu0 0
        %483 = vmatpush2.bf16.msra.mxu0 0
        %484 = vmatprep.subr.bf16.mxu0 0
        %485 = vmatpush2.bf16.msra.mxu0 0
        %486 = vmatprep.subr.bf16.mxu0 0
        %487 = vmatpush2.bf16.msra.mxu0 0
        %488 = vmatprep.mubr.bf16.mxu0 0
        %489 = vmatmul.mubr.bf16.gmra.mxu0 %v392
        %v490 = vpop.f32.mrf.mxu0
        %v491 = vadd.f32 0.0, %v490
        %v492 = vpop.f32.mrf.mxu0
        %v493 = vpop.f32.mrf.mxu0
        %v494 = vadd.f32 0.0, %v493
        %v495 = vpop.f32.mrf.mxu0
        %496 = vmatprep.mubr.bf16.mxu0 0
        %497 = vmatmul.mubr.bf16.gmra.mxu0 %v393
        %v498 = vpop.f32.mrf.mxu0
        %v499 = vadd.f32 0.0, %v498
        %v500 = vpop.f32.mrf.mxu0
        %v501 = vpop.f32.mrf.mxu0
        %v502 = vadd.f32 0.0, %v501
        %v503 = vpop.f32.mrf.mxu0
        %504 = vmatprep.mubr.bf16.mxu0 0
        %505 = vmatmul.mubr.bf16.gmra.mxu0 %v394
        %v506 = vpop.f32.mrf.mxu0
        %v507 = vadd.f32 0.0, %v506
        %v508 = vpop.f32.mrf.mxu0
        %v509 = vpop.f32.mrf.mxu0
        %v510 = vadd.f32 0.0, %v509
        %v511 = vpop.f32.mrf.mxu0
        %512 = vmatprep.mubr.bf16.mxu0 0
        %513 = vmatmul.mubr.bf16.gmra.mxu0 %v395
        %v514 = vpop.f32.mrf.mxu0
        %v515 = vadd.f32 0.0, %v514
        %v516 = vpop.f32.mrf.mxu0
        %v517 = vpop.f32.mrf.mxu0
        %v518 = vadd.f32 0.0, %v517
        %v519 = vpop.f32.mrf.mxu0
        %520 = vmatprep.mubr.bf16.mxu0 0
        %521 = vmatmul.mubr.bf16.gmra.mxu0 %v396
        %v522 = vpop.f32.mrf.mxu0
        %v523 = vadd.f32 0.0, %v522
        %v524 = vpop.f32.mrf.mxu0
        %v525 = vpop.f32.mrf.mxu0
        %v526 = vadd.f32 0.0, %v525
        %v527 = vpop.f32.mrf.mxu0
        %528 = vmatprep.mubr.bf16.mxu0 0
        %529 = vmatmul.mubr.bf16.gmra.mxu0 %v397
        %v530 = vpop.f32.mrf.mxu0
        %v531 = vadd.f32 0.0, %v530
        %v532 = vpop.f32.mrf.mxu0
        %v533 = vpop.f32.mrf.mxu0
        %v534 = vadd.f32 0.0, %v533
        %v535 = vpop.f32.mrf.mxu0
        %536 = vmatprep.mubr.bf16.mxu0 0
        %537 = vmatmul.mubr.bf16.gmra.mxu0 %v398
        %v538 = vpop.f32.mrf.mxu0
        %v539 = vadd.f32 0.0, %v538
        %v540 = vpop.f32.mrf.mxu0
        %v541 = vpop.f32.mrf.mxu0
        %v542 = vadd.f32 0.0, %v541
        %v543 = vpop.f32.mrf.mxu0
        %544 = vmatprep.mubr.bf16.mxu0 0
        %545 = vmatmul.mubr.bf16.gmra.mxu0 %v399
        %v546 = vpop.f32.mrf.mxu0
        %v547 = vadd.f32 0.0, %v546
        %v548 = vpop.f32.mrf.mxu0
        %v549 = vpop.f32.mrf.mxu0
        %v550 = vadd.f32 0.0, %v549
        %v551 = vpop.f32.mrf.mxu0
        %552 = vdwg.mxu0
        %v553 = vpack.c.bf16 %v494, %v491
        %v554 = vpack.c.bf16 %v502, %v499
        %v555 = vpack.c.bf16 %v510, %v507
        %v556 = vpack.c.bf16 %v518, %v515
        %v557 = vpack.c.bf16 %v526, %v523
        %v558 = vpack.c.bf16 %v534, %v531
        %v559 = vpack.c.bf16 %v542, %v539
        %v560 = vpack.c.bf16 %v550, %v547
        %v577 = vunpack.c.l.b16 %v307
        %v578 = vunpack.c.l.b16 %v308
        %v579 = vunpack.c.l.b16 %v309
        %v580 = vunpack.c.l.b16 %v310
        %v581 = vunpack.c.l.b16 %v311
        %v582 = vunpack.c.l.b16 %v312
        %v583 = vunpack.c.l.b16 %v313
        %v584 = vunpack.c.l.b16 %v314
        %v585 = vunpack.c.l.b16 %v315
        %v586 = vunpack.c.l.b16 %v316
        %v587 = vunpack.c.l.b16 %v317
        %v588 = vunpack.c.l.b16 %v318
        %v589 = vunpack.c.l.b16 %v319
        %v590 = vunpack.c.l.b16 %v320
        %v591 = vunpack.c.l.b16 %v321
        %v592 = vunpack.c.l.b16 %v322
        %v593 = vpack.c.b16 %v578, %v577
        %v594 = vpack.c.b16 %v580, %v579
        %v595 = vpack.c.b16 %v582, %v581
        %v596 = vpack.c.b16 %v584, %v583
        %v597 = vpack.c.b16 %v586, %v585
        %v598 = vpack.c.b16 %v588, %v587
        %v599 = vpack.c.b16 %v590, %v589
        %v600 = vpack.c.b16 %v592, %v591
        %609 = vmatprep.subr.bf16.mxu0 0
        %610 = vmatpush1.bf16.msra.mxu0 %v600
        %611 = vmatprep.subr.bf16.mxu0 0
        %612 = vmatpush1.bf16.msra.mxu0 %v599
        %613 = vmatprep.subr.bf16.mxu0 0
        %614 = vmatpush1.bf16.msra.mxu0 %v598
        %615 = vmatprep.subr.bf16.mxu0 0
        %616 = vmatpush1.bf16.msra.mxu0 %v597
        %617 = vmatprep.subr.bf16.mxu0 0
        %618 = vmatpush1.bf16.msra.mxu0 %v596
        %619 = vmatprep.subr.bf16.mxu0 0
        %620 = vmatpush1.bf16.msra.mxu0 %v595
        %621 = vmatprep.subr.bf16.mxu0 0
        %622 = vmatpush1.bf16.msra.mxu0 %v594
        %623 = vmatprep.subr.bf16.mxu0 0
        %624 = vmatpush1.bf16.msra.mxu0 %v593
        %625 = vmatprep.subr.bf16.mxu0 0
        %626 = vmatpush2.bf16.msra.mxu0 0
        %627 = vmatprep.subr.bf16.mxu0 0
        %628 = vmatpush2.bf16.msra.mxu0 0
        %629 = vmatprep.subr.bf16.mxu0 0
        %630 = vmatpush2.bf16.msra.mxu0 0
        %631 = vmatprep.subr.bf16.mxu0 0
        %632 = vmatpush2.bf16.msra.mxu0 0
        %633 = vmatprep.subr.bf16.mxu0 0
        %634 = vmatpush2.bf16.msra.mxu0 0
        %635 = vmatprep.subr.bf16.mxu0 0
        %636 = vmatpush2.bf16.msra.mxu0 0
        %637 = vmatprep.subr.bf16.mxu0 0
        %638 = vmatpush2.bf16.msra.mxu0 0
        %639 = vmatprep.subr.bf16.mxu0 0
        %640 = vmatpush2.bf16.msra.mxu0 0
        %641 = vmatprep.mubr.bf16.mxu0 0
        %642 = vmatmul.mubr.bf16.gmra.mxu0 %v553
        %v643 = vpop.f32.mrf.mxu0
        %v644 = vadd.f32 0.0, %v643
        %v645 = vpop.f32.mrf.mxu0
        %v646 = vpop.f32.mrf.mxu0
        %v647 = vadd.f32 0.0, %v646
        %v648 = vpop.f32.mrf.mxu0
        %649 = vmatprep.mubr.bf16.mxu0 0
        %650 = vmatmul.mubr.bf16.gmra.mxu0 %v554
        %v651 = vpop.f32.mrf.mxu0
        %v652 = vadd.f32 0.0, %v651
        %v653 = vpop.f32.mrf.mxu0
        %v654 = vpop.f32.mrf.mxu0
        %v655 = vadd.f32 0.0, %v654
        %v656 = vpop.f32.mrf.mxu0
        %657 = vmatprep.mubr.bf16.mxu0 0
        %658 = vmatmul.mubr.bf16.gmra.mxu0 %v555
        %v659 = vpop.f32.mrf.mxu0
        %v660 = vadd.f32 0.0, %v659
        %v661 = vpop.f32.mrf.mxu0
        %v662 = vpop.f32.mrf.mxu0
        %v663 = vadd.f32 0.0, %v662
        %v664 = vpop.f32.mrf.mxu0
        %665 = vmatprep.mubr.bf16.mxu0 0
        %666 = vmatmul.mubr.bf16.gmra.mxu0 %v556
        %v667 = vpop.f32.mrf.mxu0
        %v668 = vadd.f32 0.0, %v667
        %v669 = vpop.f32.mrf.mxu0
        %v670 = vpop.f32.mrf.mxu0
        %v671 = vadd.f32 0.0, %v670
        %v672 = vpop.f32.mrf.mxu0
        %673 = vmatprep.mubr.bf16.mxu0 0
        %674 = vmatmul.mubr.bf16.gmra.mxu0 %v557
        %v675 = vpop.f32.mrf.mxu0
        %v676 = vadd.f32 0.0, %v675
        %v677 = vpop.f32.mrf.mxu0
        %v678 = vpop.f32.mrf.mxu0
        %v679 = vadd.f32 0.0, %v678
        %v680 = vpop.f32.mrf.mxu0
        %681 = vmatprep.mubr.bf16.mxu0 0
        %682 = vmatmul.mubr.bf16.gmra.mxu0 %v558
        %v683 = vpop.f32.mrf.mxu0
        %v684 = vadd.f32 0.0, %v683
        %v685 = vpop.f32.mrf.mxu0
        %v686 = vpop.f32.mrf.mxu0
        %v687 = vadd.f32 0.0, %v686
        %v688 = vpop.f32.mrf.mxu0
        %689 = vmatprep.mubr.bf16.mxu0 0
        %690 = vmatmul.mubr.bf16.gmra.mxu0 %v559
        %v691 = vpop.f32.mrf.mxu0
        %v692 = vadd.f32 0.0, %v691
        %v693 = vpop.f32.mrf.mxu0
        %v694 = vpop.f32.mrf.mxu0
        %v695 = vadd.f32 0.0, %v694
        %v696 = vpop.f32.mrf.mxu0
        %697 = vmatprep.mubr.bf16.mxu0 0
        %698 = vmatmul.mubr.bf16.gmra.mxu0 %v560
        %v699 = vpop.f32.mrf.mxu0
        %v700 = vadd.f32 0.0, %v699
        %v701 = vpop.f32.mrf.mxu0
        %v702 = vpop.f32.mrf.mxu0
        %v703 = vadd.f32 0.0, %v702
        %v704 = vpop.f32.mrf.mxu0
        %705 = vdwg.mxu0
        %v706 = vlaneseq
        %v707 = vshrl.u32 %v706, 7
        %v708 = vsub.s32 0, %v707
        %v709 = vrot.slane %v339, %v708
        %v710 = vmul.f32 %v644, %v709
        %v711 = vmul.f32 %v647, %v709
        %v712 = vmul.f32 %v652, %v709
        %v713 = vmul.f32 %v655, %v709
        %v714 = vmul.f32 %v660, %v709
        %v715 = vmul.f32 %v663, %v709
        %v716 = vmul.f32 %v668, %v709
        %v717 = vmul.f32 %v671, %v709
        %v718 = vmul.f32 %v676, %v709
        %v719 = vmul.f32 %v679, %v709
        %v720 = vmul.f32 %v684, %v709
        %v721 = vmul.f32 %v687, %v709
        %v722 = vmul.f32 %v692, %v709
        %v723 = vmul.f32 %v695, %v709
        %v724 = vmul.f32 %v700, %v709
        %v725 = vmul.f32 %v703, %v709
        %v726 = vlaneseq
        %v727 = vshrl.u32 %v726, 7
        %v728 = vsub.s32 1, %v727
        %v729 = vrot.slane %v339, %v728
        %v730 = vadd.f32 %v710, %v729
        %v731 = vadd.f32 %v711, %v729
        %v732 = vadd.f32 %v712, %v729
        %v733 = vadd.f32 %v713, %v729
        %v734 = vadd.f32 %v714, %v729
        %v735 = vadd.f32 %v715, %v729
        %v736 = vadd.f32 %v716, %v729
        %v737 = vadd.f32 %v717, %v729
        %v738 = vadd.f32 %v718, %v729
        %v739 = vadd.f32 %v719, %v729
        %v740 = vadd.f32 %v720, %v729
        %v741 = vadd.f32 %v721, %v729
        %v742 = vadd.f32 %v722, %v729
        %v743 = vadd.f32 %v723, %v729
        %v744 = vadd.f32 %v724, %v729
        %v745 = vadd.f32 %v725, %v729
        %v746 = vmax.f32 %v730, 0.0
        %v747 = vmax.f32 %v731, 0.0
        %v748 = vmax.f32 %v732, 0.0
        %v749 = vmax.f32 %v733, 0.0
        %v750 = vmax.f32 %v734, 0.0
        %v751 = vmax.f32 %v735, 0.0
        %v752 = vmax.f32 %v736, 0.0
        %v753 = vmax.f32 %v737, 0.0
        %v754 = vmax.f32 %v738, 0.0
        %v755 = vmax.f32 %v739, 0.0
        %v756 = vmax.f32 %v740, 0.0
        %v757 = vmax.f32 %v741, 0.0
        %v758 = vmax.f32 %v742, 0.0
        %v759 = vmax.f32 %v743, 0.0
        %v760 = vmax.f32 %v744, 0.0
        %v761 = vmax.f32 %v745, 0.0
        %v762 = vpack.c.bf16 %v747, %v746
        %v763 = vpack.c.bf16 %v749, %v748
        %v764 = vpack.c.bf16 %v751, %v750
        %v765 = vpack.c.bf16 %v753, %v752
        %v766 = vpack.c.bf16 %v755, %v754
        %v767 = vpack.c.bf16 %v757, %v756
        %v768 = vpack.c.bf16 %v759, %v758
        %v769 = vpack.c.bf16 %v761, %v760
        %v778 = vunpack.c.l.b16 %v762
        %v779 = vunpack.c.h.b16 %v762
        %v780 = vunpack.c.l.b16 %v763
        %v781 = vunpack.c.h.b16 %v763
        %v782 = vunpack.c.l.b16 %v764
        %v783 = vunpack.c.h.b16 %v764
        %v784 = vunpack.c.l.b16 %v765
        %v785 = vunpack.c.h.b16 %v765
        %v786 = vunpack.c.l.b16 %v766
        %v787 = vunpack.c.h.b16 %v766
        %v788 = vunpack.c.l.b16 %v767
        %v789 = vunpack.c.h.b16 %v767
        %v790 = vunpack.c.l.b16 %v768
        %v791 = vunpack.c.h.b16 %v768
        %v792 = vunpack.c.l.b16 %v769
        %v793 = vunpack.c.h.b16 %v769
        %v794 = vpack.c.b16 %v778, %v778
        %v795 = vpack.c.b16 %v779, %v779
        %v796 = vpack.c.b16 %v780, %v780
        %v797 = vpack.c.b16 %v781, %v781
        %v798 = vpack.c.b16 %v782, %v782
        %v799 = vpack.c.b16 %v783, %v783
        %v800 = vpack.c.b16 %v784, %v784
        %v801 = vpack.c.b16 %v785, %v785
        %v802 = vpack.c.b16 %v786, %v786
        %v803 = vpack.c.b16 %v787, %v787
        %v804 = vpack.c.b16 %v788, %v788
        %v805 = vpack.c.b16 %v789, %v789
        %v806 = vpack.c.b16 %v790, %v790
        %v807 = vpack.c.b16 %v791, %v791
        %v808 = vpack.c.b16 %v792, %v792
        %v809 = vpack.c.b16 %v793, %v793
        %s826 = smul.addr %s287, 4
        %s827 = scalar_lea.vmem [#allocation2], %s826
        %828 = vst [vmem:[%s827] sm:$0xf] %v794
        %829 = vst [vmem:[%s827 + $0x4] sm:$0xf] %v795
        %830 = vst [vmem:[%s827 + $0x8] sm:$0xf] %v796
        %831 = vst [vmem:[%s827 + $0xc] sm:$0xf] %v797
        %832 = vst [vmem:[%s827 + $0x10] sm:$0xf] %v798
        %833 = vst [vmem:[%s827 + $0x14] sm:$0xf] %v799
        %834 = vst [vmem:[%s827 + $0x18] sm:$0xf] %v800
        %835 = vst [vmem:[%s827 + $0x1c] sm:$0xf] %v801
        %836 = vst [vmem:[%s827 + $0x20] sm:$0xf] %v802
        %837 = vst [vmem:[%s827 + $0x24] sm:$0xf] %v803
        %838 = vst [vmem:[%s827 + $0x28] sm:$0xf] %v804
        %839 = vst [vmem:[%s827 + $0x2c] sm:$0xf] %v805
        %840 = vst [vmem:[%s827 + $0x30] sm:$0xf] %v806
        %841 = vst [vmem:[%s827 + $0x34] sm:$0xf] %v807
        %842 = vst [vmem:[%s827 + $0x38] sm:$0xf] %v808
        %843 = vst [vmem:[%s827 + $0x3c] sm:$0xf] %v809
        %v860 = vunpack.c.l.b16 %v323
        %v861 = vunpack.c.l.b16 %v324
        %v862 = vunpack.c.l.b16 %v325
        %v863 = vunpack.c.l.b16 %v326
        %v864 = vunpack.c.l.b16 %v327
        %v865 = vunpack.c.l.b16 %v328
        %v866 = vunpack.c.l.b16 %v329
        %v867 = vunpack.c.l.b16 %v330
        %v868 = vunpack.c.l.b16 %v331
        %v869 = vunpack.c.l.b16 %v332
        %v870 = vunpack.c.l.b16 %v333
        %v871 = vunpack.c.l.b16 %v334
        %v872 = vunpack.c.l.b16 %v335
        %v873 = vunpack.c.l.b16 %v336
        %v874 = vunpack.c.l.b16 %v337
        %v875 = vunpack.c.l.b16 %v338
        %v876 = vpack.c.b16 %v861, %v860
        %v877 = vpack.c.b16 %v863, %v862
        %v878 = vpack.c.b16 %v865, %v864
        %v879 = vpack.c.b16 %v867, %v866
        %v880 = vpack.c.b16 %v869, %v868
        %v881 = vpack.c.b16 %v871, %v870
        %v882 = vpack.c.b16 %v873, %v872
        %v883 = vpack.c.b16 %v875, %v874
        %892 = vmatprep.subr.bf16.mxu0 0
        %893 = vmatpush1.bf16.msra.mxu0 %v883
        %894 = vmatprep.subr.bf16.mxu0 0
        %895 = vmatpush1.bf16.msra.mxu0 %v882
        %896 = vmatprep.subr.bf16.mxu0 0
        %897 = vmatpush1.bf16.msra.mxu0 %v881
        %898 = vmatprep.subr.bf16.mxu0 0
        %899 = vmatpush1.bf16.msra.mxu0 %v880
        %900 = vmatprep.subr.bf16.mxu0 0
        %901 = vmatpush1.bf16.msra.mxu0 %v879
        %902 = vmatprep.subr.bf16.mxu0 0
        %903 = vmatpush1.bf16.msra.mxu0 %v878
        %904 = vmatprep.subr.bf16.mxu0 0
        %905 = vmatpush1.bf16.msra.mxu0 %v877
        %906 = vmatprep.subr.bf16.mxu0 0
        %907 = vmatpush1.bf16.msra.mxu0 %v876
        %908 = vmatprep.subr.bf16.mxu0 0
        %909 = vmatpush2.bf16.msra.mxu0 0
        %910 = vmatprep.subr.bf16.mxu0 0
        %911 = vmatpush2.bf16.msra.mxu0 0
        %912 = vmatprep.subr.bf16.mxu0 0
        %913 = vmatpush2.bf16.msra.mxu0 0
        %914 = vmatprep.subr.bf16.mxu0 0
        %915 = vmatpush2.bf16.msra.mxu0 0
        %916 = vmatprep.subr.bf16.mxu0 0
        %917 = vmatpush2.bf16.msra.mxu0 0
        %918 = vmatprep.subr.bf16.mxu0 0
        %919 = vmatpush2.bf16.msra.mxu0 0
        %920 = vmatprep.subr.bf16.mxu0 0
        %921 = vmatpush2.bf16.msra.mxu0 0
        %922 = vmatprep.subr.bf16.mxu0 0
        %923 = vmatpush2.bf16.msra.mxu0 0
        %924 = vmatprep.mubr.bf16.mxu0 0
        %925 = vmatmul.mubr.bf16.gmra.mxu0 %v762
        %v926 = vpop.f32.mrf.mxu0
        %v927 = vadd.f32 0.0, %v926
        %v928 = vpop.f32.mrf.mxu0
        %v929 = vpop.f32.mrf.mxu0
        %v930 = vadd.f32 0.0, %v929
        %v931 = vpop.f32.mrf.mxu0
        %932 = vmatprep.mubr.bf16.mxu0 0
        %933 = vmatmul.mubr.bf16.gmra.mxu0 %v763
        %v934 = vpop.f32.mrf.mxu0
        %v935 = vadd.f32 0.0, %v934
        %v936 = vpop.f32.mrf.mxu0
        %v937 = vpop.f32.mrf.mxu0
        %v938 = vadd.f32 0.0, %v937
        %v939 = vpop.f32.mrf.mxu0
        %940 = vmatprep.mubr.bf16.mxu0 0
        %941 = vmatmul.mubr.bf16.gmra.mxu0 %v764
        %v942 = vpop.f32.mrf.mxu0
        %v943 = vadd.f32 0.0, %v942
        %v944 = vpop.f32.mrf.mxu0
        %v945 = vpop.f32.mrf.mxu0
        %v946 = vadd.f32 0.0, %v945
        %v947 = vpop.f32.mrf.mxu0
        %948 = vmatprep.mubr.bf16.mxu0 0
        %949 = vmatmul.mubr.bf16.gmra.mxu0 %v765
        %v950 = vpop.f32.mrf.mxu0
        %v951 = vadd.f32 0.0, %v950
        %v952 = vpop.f32.mrf.mxu0
        %v953 = vpop.f32.mrf.mxu0
        %v954 = vadd.f32 0.0, %v953
        %v955 = vpop.f32.mrf.mxu0
        %956 = vmatprep.mubr.bf16.mxu0 0
        %957 = vmatmul.mubr.bf16.gmra.mxu0 %v766
        %v958 = vpop.f32.mrf.mxu0
        %v959 = vadd.f32 0.0, %v958
        %v960 = vpop.f32.mrf.mxu0
        %v961 = vpop.f32.mrf.mxu0
        %v962 = vadd.f32 0.0, %v961
        %v963 = vpop.f32.mrf.mxu0
        %964 = vmatprep.mubr.bf16.mxu0 0
        %965 = vmatmul.mubr.bf16.gmra.mxu0 %v767
        %v966 = vpop.f32.mrf.mxu0
        %v967 = vadd.f32 0.0, %v966
        %v968 = vpop.f32.mrf.mxu0
        %v969 = vpop.f32.mrf.mxu0
        %v970 = vadd.f32 0.0, %v969
        %v971 = vpop.f32.mrf.mxu0
        %972 = vmatprep.mubr.bf16.mxu0 0
        %973 = vmatmul.mubr.bf16.gmra.mxu0 %v768
        %v974 = vpop.f32.mrf.mxu0
        %v975 = vadd.f32 0.0, %v974
        %v976 = vpop.f32.mrf.mxu0
        %v977 = vpop.f32.mrf.mxu0
        %v978 = vadd.f32 0.0, %v977
        %v979 = vpop.f32.mrf.mxu0
        %980 = vmatprep.mubr.bf16.mxu0 0
        %981 = vmatmul.mubr.bf16.gmra.mxu0 %v769
        %v982 = vpop.f32.mrf.mxu0
        %v983 = vadd.f32 0.0, %v982
        %v984 = vpop.f32.mrf.mxu0
        %v985 = vpop.f32.mrf.mxu0
        %v986 = vadd.f32 0.0, %v985
        %v987 = vpop.f32.mrf.mxu0
        %988 = vdwg.mxu0
        %s989 = scalar_lea.vmem [#allocation3], %s286
        %990 = vst [vmem:[%s989] sm:$0xff] %v927
        %991 = vst [vmem:[%s989 + $0x8] sm:$0xff] %v930
        %992 = vst [vmem:[%s989 + $0x10] sm:$0xff] %v935
        %993 = vst [vmem:[%s989 + $0x18] sm:$0xff] %v938
        %994 = vst [vmem:[%s989 + $0x20] sm:$0xff] %v943
        %995 = vst [vmem:[%s989 + $0x28] sm:$0xff] %v946
        %996 = vst [vmem:[%s989 + $0x30] sm:$0xff] %v951
        %997 = vst [vmem:[%s989 + $0x38] sm:$0xff] %v954
        %998 = vst [vmem:[%s989 + $0x40] sm:$0xff] %v959
        %999 = vst [vmem:[%s989 + $0x48] sm:$0xff] %v962
        %1000 = vst [vmem:[%s989 + $0x50] sm:$0xff] %v967
        %1001 = vst [vmem:[%s989 + $0x58] sm:$0xff] %v970
        %1002 = vst [vmem:[%s989 + $0x60] sm:$0xff] %v975
        %1003 = vst [vmem:[%s989 + $0x68] sm:$0xff] %v978
        %1004 = vst [vmem:[%s989 + $0x70] sm:$0xff] %v983
        %1005 = vst [vmem:[%s989 + $0x78] sm:$0xff] %v986
        %1006 = vst [vmem:[%s283] sm:$0xff] %v927
        %1007 = vst [vmem:[%s283 + $0x8] sm:$0xff] %v930
        %1008 = vst [vmem:[%s283 + $0x10] sm:$0xff] %v935
        %1009 = vst [vmem:[%s283 + $0x18] sm:$0xff] %v938
        %1010 = vst [vmem:[%s283 + $0x20] sm:$0xff] %v943
        %1011 = vst [vmem:[%s283 + $0x28] sm:$0xff] %v946
        %1012 = vst [vmem:[%s283 + $0x30] sm:$0xff] %v951
        %1013 = vst [vmem:[%s283 + $0x38] sm:$0xff] %v954
        %1014 = vst [vmem:[%s283 + $0x40] sm:$0xff] %v959
        %1015 = vst [vmem:[%s283 + $0x48] sm:$0xff] %v962
        %1016 = vst [vmem:[%s283 + $0x50] sm:$0xff] %v967
        %1017 = vst [vmem:[%s283 + $0x58] sm:$0xff] %v970
        %1018 = vst [vmem:[%s283 + $0x60] sm:$0xff] %v975
        %1019 = vst [vmem:[%s283 + $0x68] sm:$0xff] %v978
        %1020 = vst [vmem:[%s283 + $0x70] sm:$0xff] %v983
        %1021 = vst [vmem:[%s283 + $0x78] sm:$0xff] %v986
      $region48: #{_ognn_forward_impl.1} parent=43 // pred_fallthru
        _
      %p1022 = scmp.eq.s32.totalorder %s21, 1
      // Predicated region
      $region49: #{_ognn_forward_impl.1} parent=43 // pred_check
        %p1023 = pneg %p1022
      $region50: #{_ognn_forward_impl.1} parent=43 // pred_check_branch
        %1025 = sbr.rel (%p1023) target = $region52
      $region51: #{_ognn_forward_impl.1} parent=43 // pred_region
        %s1026 = smul.addr %s287, 4
        %s1027 = scalar_lea.vmem [#allocation2], %s1026
        %v1028 = vld [vmem:[%s1027] sm:$0xf]
        %v1029 = vld [vmem:[%s1027 + $0x4] sm:$0xf]
        %v1030 = vld [vmem:[%s1027 + $0x8] sm:$0xf]
        %v1031 = vld [vmem:[%s1027 + $0xc] sm:$0xf]
        %v1032 = vld [vmem:[%s1027 + $0x10] sm:$0xf]
        %v1033 = vld [vmem:[%s1027 + $0x14] sm:$0xf]
        %v1034 = vld [vmem:[%s1027 + $0x18] sm:$0xf]
        %v1035 = vld [vmem:[%s1027 + $0x1c] sm:$0xf]
        %v1036 = vld [vmem:[%s1027 + $0x20] sm:$0xf]
        %v1037 = vld [vmem:[%s1027 + $0x24] sm:$0xf]
        %v1038 = vld [vmem:[%s1027 + $0x28] sm:$0xf]
        %v1039 = vld [vmem:[%s1027 + $0x2c] sm:$0xf]
        %v1040 = vld [vmem:[%s1027 + $0x30] sm:$0xf]
        %v1041 = vld [vmem:[%s1027 + $0x34] sm:$0xf]
        %v1042 = vld [vmem:[%s1027 + $0x38] sm:$0xf]
        %v1043 = vld [vmem:[%s1027 + $0x3c] sm:$0xf]
        %v1044 = vunpack.c.l.bf16 %v1028
        %v1045 = vunpack.c.l.bf16 %v1029
        %v1046 = vunpack.c.l.bf16 %v1030
        %v1047 = vunpack.c.l.bf16 %v1031
        %v1048 = vunpack.c.l.bf16 %v1032
        %v1049 = vunpack.c.l.bf16 %v1033
        %v1050 = vunpack.c.l.bf16 %v1034
        %v1051 = vunpack.c.l.bf16 %v1035
        %v1052 = vunpack.c.l.bf16 %v1036
        %v1053 = vunpack.c.l.bf16 %v1037
        %v1054 = vunpack.c.l.bf16 %v1038
        %v1055 = vunpack.c.l.bf16 %v1039
        %v1056 = vunpack.c.l.bf16 %v1040
        %v1057 = vunpack.c.l.bf16 %v1041
        %v1058 = vunpack.c.l.bf16 %v1042
        %v1059 = vunpack.c.l.bf16 %v1043
        %v1060 = vld [vmem:[#allocation2] sm:$0xf]
        %v1061 = vld [vmem:[#allocation2 + $0x4] sm:$0xf]
        %v1062 = vld [vmem:[#allocation2 + $0x8] sm:$0xf]
        %v1063 = vld [vmem:[#allocation2 + $0xc] sm:$0xf]
        %v1064 = vld [vmem:[#allocation2 + $0x10] sm:$0xf]
        %v1065 = vld [vmem:[#allocation2 + $0x14] sm:$0xf]
        %v1066 = vld [vmem:[#allocation2 + $0x18] sm:$0xf]
        %v1067 = vld [vmem:[#allocation2 + $0x1c] sm:$0xf]
        %v1068 = vld [vmem:[#allocation2 + $0x20] sm:$0xf]
        %v1069 = vld [vmem:[#allocation2 + $0x24] sm:$0xf]
        %v1070 = vld [vmem:[#allocation2 + $0x28] sm:$0xf]
        %v1071 = vld [vmem:[#allocation2 + $0x2c] sm:$0xf]
        %v1072 = vld [vmem:[#allocation2 + $0x30] sm:$0xf]
        %v1073 = vld [vmem:[#allocation2 + $0x34] sm:$0xf]
        %v1074 = vld [vmem:[#allocation2 + $0x38] sm:$0xf]
        %v1075 = vld [vmem:[#allocation2 + $0x3c] sm:$0xf]
        %v1092 = vunpack.c.l.b16 %v291
        %v1093 = vunpack.c.l.b16 %v292
        %v1094 = vunpack.c.l.b16 %v293
        %v1095 = vunpack.c.l.b16 %v294
        %v1096 = vunpack.c.l.b16 %v295
        %v1097 = vunpack.c.l.b16 %v296
        %v1098 = vunpack.c.l.b16 %v297
        %v1099 = vunpack.c.l.b16 %v298
        %v1100 = vunpack.c.l.b16 %v299
        %v1101 = vunpack.c.l.b16 %v300
        %v1102 = vunpack.c.l.b16 %v301
        %v1103 = vunpack.c.l.b16 %v302
        %v1104 = vunpack.c.l.b16 %v303
        %v1105 = vunpack.c.l.b16 %v304
        %v1106 = vunpack.c.l.b16 %v305
        %v1107 = vunpack.c.l.b16 %v306
        %v1108 = vpack.c.b16 %v1093, %v1092
        %v1109 = vpack.c.b16 %v1095, %v1094
        %v1110 = vpack.c.b16 %v1097, %v1096
        %v1111 = vpack.c.b16 %v1099, %v1098
        %v1112 = vpack.c.b16 %v1101, %v1100
        %v1113 = vpack.c.b16 %v1103, %v1102
        %v1114 = vpack.c.b16 %v1105, %v1104
        %v1115 = vpack.c.b16 %v1107, %v1106
        %v1140 = vunpack.c.l.b16 %v1060
        %v1141 = vunpack.c.l.b16 %v1061
        %v1142 = vunpack.c.l.b16 %v1062
        %v1143 = vunpack.c.l.b16 %v1063
        %v1144 = vunpack.c.l.b16 %v1064
        %v1145 = vunpack.c.l.b16 %v1065
        %v1146 = vunpack.c.l.b16 %v1066
        %v1147 = vunpack.c.l.b16 %v1067
        %v1148 = vunpack.c.l.b16 %v1068
        %v1149 = vunpack.c.l.b16 %v1069
        %v1150 = vunpack.c.l.b16 %v1070
        %v1151 = vunpack.c.l.b16 %v1071
        %v1152 = vunpack.c.l.b16 %v1072
        %v1153 = vunpack.c.l.b16 %v1073
        %v1154 = vunpack.c.l.b16 %v1074
        %v1155 = vunpack.c.l.b16 %v1075
        %v1156 = vpack.c.b16 %v1141, %v1140
        %v1157 = vpack.c.b16 %v1143, %v1142
        %v1158 = vpack.c.b16 %v1145, %v1144
        %v1159 = vpack.c.b16 %v1147, %v1146
        %v1160 = vpack.c.b16 %v1149, %v1148
        %v1161 = vpack.c.b16 %v1151, %v1150
        %v1162 = vpack.c.b16 %v1153, %v1152
        %v1163 = vpack.c.b16 %v1155, %v1154
        %1172 = vmatprep.subr.bf16.mxu0 0
        %1173 = vmatpush1.bf16.msra.mxu0 %v1163
        %1174 = vmatprep.subr.bf16.mxu0 0
        %1175 = vmatpush1.bf16.msra.mxu0 %v1162
        %1176 = vmatprep.subr.bf16.mxu0 0
        %1177 = vmatpush1.bf16.msra.mxu0 %v1161
        %1178 = vmatprep.subr.bf16.mxu0 0
        %1179 = vmatpush1.bf16.msra.mxu0 %v1160
        %1180 = vmatprep.subr.bf16.mxu0 0
        %1181 = vmatpush1.bf16.msra.mxu0 %v1159
        %1182 = vmatprep.subr.bf16.mxu0 0
        %1183 = vmatpush1.bf16.msra.mxu0 %v1158
        %1184 = vmatprep.subr.bf16.mxu0 0
        %1185 = vmatpush1.bf16.msra.mxu0 %v1157
        %1186 = vmatprep.subr.bf16.mxu0 0
        %1187 = vmatpush1.bf16.msra.mxu0 %v1156
        %1188 = vmatprep.subr.bf16.mxu0 0
        %1189 = vmatpush2.bf16.msra.mxu0 0
        %1190 = vmatprep.subr.bf16.mxu0 0
        %1191 = vmatpush2.bf16.msra.mxu0 0
        %1192 = vmatprep.subr.bf16.mxu0 0
        %1193 = vmatpush2.bf16.msra.mxu0 0
        %1194 = vmatprep.subr.bf16.mxu0 0
        %1195 = vmatpush2.bf16.msra.mxu0 0
        %1196 = vmatprep.subr.bf16.mxu0 0
        %1197 = vmatpush2.bf16.msra.mxu0 0
        %1198 = vmatprep.subr.bf16.mxu0 0
        %1199 = vmatpush2.bf16.msra.mxu0 0
        %1200 = vmatprep.subr.bf16.mxu0 0
        %1201 = vmatpush2.bf16.msra.mxu0 0
        %1202 = vmatprep.subr.bf16.mxu0 0
        %1203 = vmatpush2.bf16.msra.mxu0 0
        %1204 = vmatprep.mubr.bf16.mxu0 0
        %1205 = vmatmul.mubr.bf16.gmra.mxu0 %v1108
        %v1206 = vpop.f32.mrf.mxu0
        %v1207 = vadd.f32 0.0, %v1206
        %v1208 = vpop.f32.mrf.mxu0
        %v1209 = vpop.f32.mrf.mxu0
        %v1210 = vadd.f32 0.0, %v1209
        %v1211 = vpop.f32.mrf.mxu0
        %1212 = vmatprep.mubr.bf16.mxu0 0
        %1213 = vmatmul.mubr.bf16.gmra.mxu0 %v1109
        %v1214 = vpop.f32.mrf.mxu0
        %v1215 = vadd.f32 0.0, %v1214
        %v1216 = vpop.f32.mrf.mxu0
        %v1217 = vpop.f32.mrf.mxu0
        %v1218 = vadd.f32 0.0, %v1217
        %v1219 = vpop.f32.mrf.mxu0
        %1220 = vmatprep.mubr.bf16.mxu0 0
        %1221 = vmatmul.mubr.bf16.gmra.mxu0 %v1110
        %v1222 = vpop.f32.mrf.mxu0
        %v1223 = vadd.f32 0.0, %v1222
        %v1224 = vpop.f32.mrf.mxu0
        %v1225 = vpop.f32.mrf.mxu0
        %v1226 = vadd.f32 0.0, %v1225
        %v1227 = vpop.f32.mrf.mxu0
        %1228 = vmatprep.mubr.bf16.mxu0 0
        %1229 = vmatmul.mubr.bf16.gmra.mxu0 %v1111
        %v1230 = vpop.f32.mrf.mxu0
        %v1231 = vadd.f32 0.0, %v1230
        %v1232 = vpop.f32.mrf.mxu0
        %v1233 = vpop.f32.mrf.mxu0
        %v1234 = vadd.f32 0.0, %v1233
        %v1235 = vpop.f32.mrf.mxu0
        %1236 = vmatprep.mubr.bf16.mxu0 0
        %1237 = vmatmul.mubr.bf16.gmra.mxu0 %v1112
        %v1238 = vpop.f32.mrf.mxu0
        %v1239 = vadd.f32 0.0, %v1238
        %v1240 = vpop.f32.mrf.mxu0
        %v1241 = vpop.f32.mrf.mxu0
        %v1242 = vadd.f32 0.0, %v1241
        %v1243 = vpop.f32.mrf.mxu0
        %1244 = vmatprep.mubr.bf16.mxu0 0
        %1245 = vmatmul.mubr.bf16.gmra.mxu0 %v1113
        %v1246 = vpop.f32.mrf.mxu0
        %v1247 = vadd.f32 0.0, %v1246
        %v1248 = vpop.f32.mrf.mxu0
        %v1249 = vpop.f32.mrf.mxu0
        %v1250 = vadd.f32 0.0, %v1249
        %v1251 = vpop.f32.mrf.mxu0
        %1252 = vmatprep.mubr.bf16.mxu0 0
        %1253 = vmatmul.mubr.bf16.gmra.mxu0 %v1114
        %v1254 = vpop.f32.mrf.mxu0
        %v1255 = vadd.f32 0.0, %v1254
        %v1256 = vpop.f32.mrf.mxu0
        %v1257 = vpop.f32.mrf.mxu0
        %v1258 = vadd.f32 0.0, %v1257
        %v1259 = vpop.f32.mrf.mxu0
        %1260 = vmatprep.mubr.bf16.mxu0 0
        %1261 = vmatmul.mubr.bf16.gmra.mxu0 %v1115
        %v1262 = vpop.f32.mrf.mxu0
        %v1263 = vadd.f32 0.0, %v1262
        %v1264 = vpop.f32.mrf.mxu0
        %v1265 = vpop.f32.mrf.mxu0
        %v1266 = vadd.f32 0.0, %v1265
        %v1267 = vpop.f32.mrf.mxu0
        %1268 = vdwg.mxu0
        %v1269 = vpack.c.bf16 %v1210, %v1207
        %v1270 = vpack.c.bf16 %v1218, %v1215
        %v1271 = vpack.c.bf16 %v1226, %v1223
        %v1272 = vpack.c.bf16 %v1234, %v1231
        %v1273 = vpack.c.bf16 %v1242, %v1239
        %v1274 = vpack.c.bf16 %v1250, %v1247
        %v1275 = vpack.c.bf16 %v1258, %v1255
        %v1276 = vpack.c.bf16 %v1266, %v1263
        %v1293 = vunpack.c.l.b16 %v307
        %v1294 = vunpack.c.l.b16 %v308
        %v1295 = vunpack.c.l.b16 %v309
        %v1296 = vunpack.c.l.b16 %v310
        %v1297 = vunpack.c.l.b16 %v311
        %v1298 = vunpack.c.l.b16 %v312
        %v1299 = vunpack.c.l.b16 %v313
        %v1300 = vunpack.c.l.b16 %v314
        %v1301 = vunpack.c.l.b16 %v315
        %v1302 = vunpack.c.l.b16 %v316
        %v1303 = vunpack.c.l.b16 %v317
        %v1304 = vunpack.c.l.b16 %v318
        %v1305 = vunpack.c.l.b16 %v319
        %v1306 = vunpack.c.l.b16 %v320
        %v1307 = vunpack.c.l.b16 %v321
        %v1308 = vunpack.c.l.b16 %v322
        %v1309 = vpack.c.b16 %v1294, %v1293
        %v1310 = vpack.c.b16 %v1296, %v1295
        %v1311 = vpack.c.b16 %v1298, %v1297
        %v1312 = vpack.c.b16 %v1300, %v1299
        %v1313 = vpack.c.b16 %v1302, %v1301
        %v1314 = vpack.c.b16 %v1304, %v1303
        %v1315 = vpack.c.b16 %v1306, %v1305
        %v1316 = vpack.c.b16 %v1308, %v1307
        %1325 = vmatprep.subr.bf16.mxu0 0
        %1326 = vmatpush1.bf16.msra.mxu0 %v1316
        %1327 = vmatprep.subr.bf16.mxu0 0
        %1328 = vmatpush1.bf16.msra.mxu0 %v1315
        %1329 = vmatprep.subr.bf16.mxu0 0
        %1330 = vmatpush1.bf16.msra.mxu0 %v1314
        %1331 = vmatprep.subr.bf16.mxu0 0
        %1332 = vmatpush1.bf16.msra.mxu0 %v1313
        %1333 = vmatprep.subr.bf16.mxu0 0
        %1334 = vmatpush1.bf16.msra.mxu0 %v1312
        %1335 = vmatprep.subr.bf16.mxu0 0
        %1336 = vmatpush1.bf16.msra.mxu0 %v1311
        %1337 = vmatprep.subr.bf16.mxu0 0
        %1338 = vmatpush1.bf16.msra.mxu0 %v1310
        %1339 = vmatprep.subr.bf16.mxu0 0
        %1340 = vmatpush1.bf16.msra.mxu0 %v1309
        %1341 = vmatprep.subr.bf16.mxu0 0
        %1342 = vmatpush2.bf16.msra.mxu0 0
        %1343 = vmatprep.subr.bf16.mxu0 0
        %1344 = vmatpush2.bf16.msra.mxu0 0
        %1345 = vmatprep.subr.bf16.mxu0 0
        %1346 = vmatpush2.bf16.msra.mxu0 0
        %1347 = vmatprep.subr.bf16.mxu0 0
        %1348 = vmatpush2.bf16.msra.mxu0 0
        %1349 = vmatprep.subr.bf16.mxu0 0
        %1350 = vmatpush2.bf16.msra.mxu0 0
        %1351 = vmatprep.subr.bf16.mxu0 0
        %1352 = vmatpush2.bf16.msra.mxu0 0
        %1353 = vmatprep.subr.bf16.mxu0 0
        %1354 = vmatpush2.bf16.msra.mxu0 0
        %1355 = vmatprep.subr.bf16.mxu0 0
        %1356 = vmatpush2.bf16.msra.mxu0 0
        %1357 = vmatprep.mubr.bf16.mxu0 0
        %1358 = vmatmul.mubr.bf16.gmra.mxu0 %v1269
        %v1359 = vpop.f32.mrf.mxu0
        %v1360 = vadd.f32 0.0, %v1359
        %v1361 = vpop.f32.mrf.mxu0
        %v1362 = vpop.f32.mrf.mxu0
        %v1363 = vadd.f32 0.0, %v1362
        %v1364 = vpop.f32.mrf.mxu0
        %1365 = vmatprep.mubr.bf16.mxu0 0
        %1366 = vmatmul.mubr.bf16.gmra.mxu0 %v1270
        %v1367 = vpop.f32.mrf.mxu0
        %v1368 = vadd.f32 0.0, %v1367
        %v1369 = vpop.f32.mrf.mxu0
        %v1370 = vpop.f32.mrf.mxu0
        %v1371 = vadd.f32 0.0, %v1370
        %v1372 = vpop.f32.mrf.mxu0
        %1373 = vmatprep.mubr.bf16.mxu0 0
        %1374 = vmatmul.mubr.bf16.gmra.mxu0 %v1271
        %v1375 = vpop.f32.mrf.mxu0
        %v1376 = vadd.f32 0.0, %v1375
        %v1377 = vpop.f32.mrf.mxu0
        %v1378 = vpop.f32.mrf.mxu0
        %v1379 = vadd.f32 0.0, %v1378
        %v1380 = vpop.f32.mrf.mxu0
        %1381 = vmatprep.mubr.bf16.mxu0 0
        %1382 = vmatmul.mubr.bf16.gmra.mxu0 %v1272
        %v1383 = vpop.f32.mrf.mxu0
        %v1384 = vadd.f32 0.0, %v1383
        %v1385 = vpop.f32.mrf.mxu0
        %v1386 = vpop.f32.mrf.mxu0
        %v1387 = vadd.f32 0.0, %v1386
        %v1388 = vpop.f32.mrf.mxu0
        %1389 = vmatprep.mubr.bf16.mxu0 0
        %1390 = vmatmul.mubr.bf16.gmra.mxu0 %v1273
        %v1391 = vpop.f32.mrf.mxu0
        %v1392 = vadd.f32 0.0, %v1391
        %v1393 = vpop.f32.mrf.mxu0
        %v1394 = vpop.f32.mrf.mxu0
        %v1395 = vadd.f32 0.0, %v1394
        %v1396 = vpop.f32.mrf.mxu0
        %1397 = vmatprep.mubr.bf16.mxu0 0
        %1398 = vmatmul.mubr.bf16.gmra.mxu0 %v1274
        %v1399 = vpop.f32.mrf.mxu0
        %v1400 = vadd.f32 0.0, %v1399
        %v1401 = vpop.f32.mrf.mxu0
        %v1402 = vpop.f32.mrf.mxu0
        %v1403 = vadd.f32 0.0, %v1402
        %v1404 = vpop.f32.mrf.mxu0
        %1405 = vmatprep.mubr.bf16.mxu0 0
        %1406 = vmatmul.mubr.bf16.gmra.mxu0 %v1275
        %v1407 = vpop.f32.mrf.mxu0
        %v1408 = vadd.f32 0.0, %v1407
        %v1409 = vpop.f32.mrf.mxu0
        %v1410 = vpop.f32.mrf.mxu0
        %v1411 = vadd.f32 0.0, %v1410
        %v1412 = vpop.f32.mrf.mxu0
        %1413 = vmatprep.mubr.bf16.mxu0 0
        %1414 = vmatmul.mubr.bf16.gmra.mxu0 %v1276
        %v1415 = vpop.f32.mrf.mxu0
        %v1416 = vadd.f32 0.0, %v1415
        %v1417 = vpop.f32.mrf.mxu0
        %v1418 = vpop.f32.mrf.mxu0
        %v1419 = vadd.f32 0.0, %v1418
        %v1420 = vpop.f32.mrf.mxu0
        %1421 = vdwg.mxu0
        %v1422 = vlaneseq
        %v1423 = vshrl.u32 %v1422, 7
        %v1424 = vsub.s32 2, %v1423
        %v1425 = vrot.slane %v339, %v1424
        %v1426 = vmul.f32 %v1360, %v1425
        %v1427 = vmul.f32 %v1363, %v1425
        %v1428 = vmul.f32 %v1368, %v1425
        %v1429 = vmul.f32 %v1371, %v1425
        %v1430 = vmul.f32 %v1376, %v1425
        %v1431 = vmul.f32 %v1379, %v1425
        %v1432 = vmul.f32 %v1384, %v1425
        %v1433 = vmul.f32 %v1387, %v1425
        %v1434 = vmul.f32 %v1392, %v1425
        %v1435 = vmul.f32 %v1395, %v1425
        %v1436 = vmul.f32 %v1400, %v1425
        %v1437 = vmul.f32 %v1403, %v1425
        %v1438 = vmul.f32 %v1408, %v1425
        %v1439 = vmul.f32 %v1411, %v1425
        %v1440 = vmul.f32 %v1416, %v1425
        %v1441 = vmul.f32 %v1419, %v1425
        %v1442 = vlaneseq
        %v1443 = vshrl.u32 %v1442, 7
        %v1444 = vsub.s32 3, %v1443
        %v1445 = vrot.slane %v339, %v1444
        %v1446 = vadd.f32 %v1426, %v1445
        %v1447 = vadd.f32 %v1427, %v1445
        %v1448 = vadd.f32 %v1428, %v1445
        %v1449 = vadd.f32 %v1429, %v1445
        %v1450 = vadd.f32 %v1430, %v1445
        %v1451 = vadd.f32 %v1431, %v1445
        %v1452 = vadd.f32 %v1432, %v1445
        %v1453 = vadd.f32 %v1433, %v1445
        %v1454 = vadd.f32 %v1434, %v1445
        %v1455 = vadd.f32 %v1435, %v1445
        %v1456 = vadd.f32 %v1436, %v1445
        %v1457 = vadd.f32 %v1437, %v1445
        %v1458 = vadd.f32 %v1438, %v1445
        %v1459 = vadd.f32 %v1439, %v1445
        %v1460 = vadd.f32 %v1440, %v1445
        %v1461 = vadd.f32 %v1441, %v1445
        %v1462 = vmax.f32 %v1446, 0.0
        %v1463 = vmax.f32 %v1447, 0.0
        %v1464 = vmax.f32 %v1448, 0.0
        %v1465 = vmax.f32 %v1449, 0.0
        %v1466 = vmax.f32 %v1450, 0.0
        %v1467 = vmax.f32 %v1451, 0.0
        %v1468 = vmax.f32 %v1452, 0.0
        %v1469 = vmax.f32 %v1453, 0.0
        %v1470 = vmax.f32 %v1454, 0.0
        %v1471 = vmax.f32 %v1455, 0.0
        %v1472 = vmax.f32 %v1456, 0.0
        %v1473 = vmax.f32 %v1457, 0.0
        %v1474 = vmax.f32 %v1458, 0.0
        %v1475 = vmax.f32 %v1459, 0.0
        %v1476 = vmax.f32 %v1460, 0.0
        %v1477 = vmax.f32 %v1461, 0.0
        %v1478 = vadd.f32 %v1462, %v1044
        %v1479 = vadd.f32 %v1463, %v1045
        %v1480 = vadd.f32 %v1464, %v1046
        %v1481 = vadd.f32 %v1465, %v1047
        %v1482 = vadd.f32 %v1466, %v1048
        %v1483 = vadd.f32 %v1467, %v1049
        %v1484 = vadd.f32 %v1468, %v1050
        %v1485 = vadd.f32 %v1469, %v1051
        %v1486 = vadd.f32 %v1470, %v1052
        %v1487 = vadd.f32 %v1471, %v1053
        %v1488 = vadd.f32 %v1472, %v1054
        %v1489 = vadd.f32 %v1473, %v1055
        %v1490 = vadd.f32 %v1474, %v1056
        %v1491 = vadd.f32 %v1475, %v1057
        %v1492 = vadd.f32 %v1476, %v1058
        %v1493 = vadd.f32 %v1477, %v1059
        %v1494 = vpack.c.bf16 %v1479, %v1478
        %v1495 = vpack.c.bf16 %v1481, %v1480
        %v1496 = vpack.c.bf16 %v1483, %v1482
        %v1497 = vpack.c.bf16 %v1485, %v1484
        %v1498 = vpack.c.bf16 %v1487, %v1486
        %v1499 = vpack.c.bf16 %v1489, %v1488
        %v1500 = vpack.c.bf16 %v1491, %v1490
        %v1501 = vpack.c.bf16 %v1493, %v1492
        %v1510 = vunpack.c.l.b16 %v1494
        %v1511 = vunpack.c.h.b16 %v1494
        %v1512 = vunpack.c.l.b16 %v1495
        %v1513 = vunpack.c.h.b16 %v1495
        %v1514 = vunpack.c.l.b16 %v1496
        %v1515 = vunpack.c.h.b16 %v1496
        %v1516 = vunpack.c.l.b16 %v1497
        %v1517 = vunpack.c.h.b16 %v1497
        %v1518 = vunpack.c.l.b16 %v1498
        %v1519 = vunpack.c.h.b16 %v1498
        %v1520 = vunpack.c.l.b16 %v1499
        %v1521 = vunpack.c.h.b16 %v1499
        %v1522 = vunpack.c.l.b16 %v1500
        %v1523 = vunpack.c.h.b16 %v1500
        %v1524 = vunpack.c.l.b16 %v1501
        %v1525 = vunpack.c.h.b16 %v1501
        %v1526 = vpack.c.b16 %v1510, %v1510
        %v1527 = vpack.c.b16 %v1511, %v1511
        %v1528 = vpack.c.b16 %v1512, %v1512
        %v1529 = vpack.c.b16 %v1513, %v1513
        %v1530 = vpack.c.b16 %v1514, %v1514
        %v1531 = vpack.c.b16 %v1515, %v1515
        %v1532 = vpack.c.b16 %v1516, %v1516
        %v1533 = vpack.c.b16 %v1517, %v1517
        %v1534 = vpack.c.b16 %v1518, %v1518
        %v1535 = vpack.c.b16 %v1519, %v1519
        %v1536 = vpack.c.b16 %v1520, %v1520
        %v1537 = vpack.c.b16 %v1521, %v1521
        %v1538 = vpack.c.b16 %v1522, %v1522
        %v1539 = vpack.c.b16 %v1523, %v1523
        %v1540 = vpack.c.b16 %v1524, %v1524
        %v1541 = vpack.c.b16 %v1525, %v1525
        %s1558 = sadd.s32 %s287, 16
        %s1559 = smul.addr %s1558, 4
        %s1560 = scalar_lea.vmem [#allocation2], %s1559
        %1561 = vst [vmem:[%s1560] sm:$0xf] %v1526
        %1562 = vst [vmem:[%s1560 + $0x4] sm:$0xf] %v1527
        %1563 = vst [vmem:[%s1560 + $0x8] sm:$0xf] %v1528
        %1564 = vst [vmem:[%s1560 + $0xc] sm:$0xf] %v1529
        %1565 = vst [vmem:[%s1560 + $0x10] sm:$0xf] %v1530
        %1566 = vst [vmem:[%s1560 + $0x14] sm:$0xf] %v1531
        %1567 = vst [vmem:[%s1560 + $0x18] sm:$0xf] %v1532
        %1568 = vst [vmem:[%s1560 + $0x1c] sm:$0xf] %v1533
        %1569 = vst [vmem:[%s1560 + $0x20] sm:$0xf] %v1534
        %1570 = vst [vmem:[%s1560 + $0x24] sm:$0xf] %v1535
        %1571 = vst [vmem:[%s1560 + $0x28] sm:$0xf] %v1536
        %1572 = vst [vmem:[%s1560 + $0x2c] sm:$0xf] %v1537
        %1573 = vst [vmem:[%s1560 + $0x30] sm:$0xf] %v1538
        %1574 = vst [vmem:[%s1560 + $0x34] sm:$0xf] %v1539
        %1575 = vst [vmem:[%s1560 + $0x38] sm:$0xf] %v1540
        %1576 = vst [vmem:[%s1560 + $0x3c] sm:$0xf] %v1541
        %s1577 = scalar_lea.vmem [#allocation3], %s286
        %v1578 = vld [vmem:[%s1577] sm:$0xff]
        %v1579 = vld [vmem:[%s1577 + $0x8] sm:$0xff]
        %v1580 = vld [vmem:[%s1577 + $0x10] sm:$0xff]
        %v1581 = vld [vmem:[%s1577 + $0x18] sm:$0xff]
        %v1582 = vld [vmem:[%s1577 + $0x20] sm:$0xff]
        %v1583 = vld [vmem:[%s1577 + $0x28] sm:$0xff]
        %v1584 = vld [vmem:[%s1577 + $0x30] sm:$0xff]
        %v1585 = vld [vmem:[%s1577 + $0x38] sm:$0xff]
        %v1586 = vld [vmem:[%s1577 + $0x40] sm:$0xff]
        %v1587 = vld [vmem:[%s1577 + $0x48] sm:$0xff]
        %v1588 = vld [vmem:[%s1577 + $0x50] sm:$0xff]
        %v1589 = vld [vmem:[%s1577 + $0x58] sm:$0xff]
        %v1590 = vld [vmem:[%s1577 + $0x60] sm:$0xff]
        %v1591 = vld [vmem:[%s1577 + $0x68] sm:$0xff]
        %v1592 = vld [vmem:[%s1577 + $0x70] sm:$0xff]
        %v1593 = vld [vmem:[%s1577 + $0x78] sm:$0xff]
        %v1610 = vunpack.c.l.b16 %v323
        %v1611 = vunpack.c.l.b16 %v324
        %v1612 = vunpack.c.l.b16 %v325
        %v1613 = vunpack.c.l.b16 %v326
        %v1614 = vunpack.c.l.b16 %v327
        %v1615 = vunpack.c.l.b16 %v328
        %v1616 = vunpack.c.l.b16 %v329
        %v1617 = vunpack.c.l.b16 %v330
        %v1618 = vunpack.c.l.b16 %v331
        %v1619 = vunpack.c.l.b16 %v332
        %v1620 = vunpack.c.l.b16 %v333
        %v1621 = vunpack.c.l.b16 %v334
        %v1622 = vunpack.c.l.b16 %v335
        %v1623 = vunpack.c.l.b16 %v336
        %v1624 = vunpack.c.l.b16 %v337
        %v1625 = vunpack.c.l.b16 %v338
        %v1626 = vpack.c.b16 %v1611, %v1610
        %v1627 = vpack.c.b16 %v1613, %v1612
        %v1628 = vpack.c.b16 %v1615, %v1614
        %v1629 = vpack.c.b16 %v1617, %v1616
        %v1630 = vpack.c.b16 %v1619, %v1618
        %v1631 = vpack.c.b16 %v1621, %v1620
        %v1632 = vpack.c.b16 %v1623, %v1622
        %v1633 = vpack.c.b16 %v1625, %v1624
        %1642 = vmatprep.subr.bf16.mxu0 0
        %1643 = vmatpush1.bf16.msra.mxu0 %v1633
        %1644 = vmatprep.subr.bf16.mxu0 0
        %1645 = vmatpush1.bf16.msra.mxu0 %v1632
        %1646 = vmatprep.subr.bf16.mxu0 0
        %1647 = vmatpush1.bf16.msra.mxu0 %v1631
        %1648 = vmatprep.subr.bf16.mxu0 0
        %1649 = vmatpush1.bf16.msra.mxu0 %v1630
        %1650 = vmatprep.subr.bf16.mxu0 0
        %1651 = vmatpush1.bf16.msra.mxu0 %v1629
        %1652 = vmatprep.subr.bf16.mxu0 0
        %1653 = vmatpush1.bf16.msra.mxu0 %v1628
        %1654 = vmatprep.subr.bf16.mxu0 0
        %1655 = vmatpush1.bf16.msra.mxu0 %v1627
        %1656 = vmatprep.subr.bf16.mxu0 0
        %1657 = vmatpush1.bf16.msra.mxu0 %v1626
        %1658 = vmatprep.subr.bf16.mxu0 0
        %1659 = vmatpush2.bf16.msra.mxu0 0
        %1660 = vmatprep.subr.bf16.mxu0 0
        %1661 = vmatpush2.bf16.msra.mxu0 0
        %1662 = vmatprep.subr.bf16.mxu0 0
        %1663 = vmatpush2.bf16.msra.mxu0 0
        %1664 = vmatprep.subr.bf16.mxu0 0
        %1665 = vmatpush2.bf16.msra.mxu0 0
        %1666 = vmatprep.subr.bf16.mxu0 0
        %1667 = vmatpush2.bf16.msra.mxu0 0
        %1668 = vmatprep.subr.bf16.mxu0 0
        %1669 = vmatpush2.bf16.msra.mxu0 0
        %1670 = vmatprep.subr.bf16.mxu0 0
        %1671 = vmatpush2.bf16.msra.mxu0 0
        %1672 = vmatprep.subr.bf16.mxu0 0
        %1673 = vmatpush2.bf16.msra.mxu0 0
        %1674 = vmatprep.mubr.bf16.mxu0 0
        %1675 = vmatmul.mubr.bf16.gmra.mxu0 %v1494
        %v1676 = vpop.f32.mrf.mxu0
        %v1677 = vadd.f32 0.0, %v1676
        %v1678 = vpop.f32.mrf.mxu0
        %v1679 = vpop.f32.mrf.mxu0
        %v1680 = vadd.f32 0.0, %v1679
        %v1681 = vpop.f32.mrf.mxu0
        %1682 = vmatprep.mubr.bf16.mxu0 0
        %1683 = vmatmul.mubr.bf16.gmra.mxu0 %v1495
        %v1684 = vpop.f32.mrf.mxu0
        %v1685 = vadd.f32 0.0, %v1684
        %v1686 = vpop.f32.mrf.mxu0
        %v1687 = vpop.f32.mrf.mxu0
        %v1688 = vadd.f32 0.0, %v1687
        %v1689 = vpop.f32.mrf.mxu0
        %1690 = vmatprep.mubr.bf16.mxu0 0
        %1691 = vmatmul.mubr.bf16.gmra.mxu0 %v1496
        %v1692 = vpop.f32.mrf.mxu0
        %v1693 = vadd.f32 0.0, %v1692
        %v1694 = vpop.f32.mrf.mxu0
        %v1695 = vpop.f32.mrf.mxu0
        %v1696 = vadd.f32 0.0, %v1695
        %v1697 = vpop.f32.mrf.mxu0
        %1698 = vmatprep.mubr.bf16.mxu0 0
        %1699 = vmatmul.mubr.bf16.gmra.mxu0 %v1497
        %v1700 = vpop.f32.mrf.mxu0
        %v1701 = vadd.f32 0.0, %v1700
        %v1702 = vpop.f32.mrf.mxu0
        %v1703 = vpop.f32.mrf.mxu0
        %v1704 = vadd.f32 0.0, %v1703
        %v1705 = vpop.f32.mrf.mxu0
        %1706 = vmatprep.mubr.bf16.mxu0 0
        %1707 = vmatmul.mubr.bf16.gmra.mxu0 %v1498
        %v1708 = vpop.f32.mrf.mxu0
        %v1709 = vadd.f32 0.0, %v1708
        %v1710 = vpop.f32.mrf.mxu0
        %v1711 = vpop.f32.mrf.mxu0
        %v1712 = vadd.f32 0.0, %v1711
        %v1713 = vpop.f32.mrf.mxu0
        %1714 = vmatprep.mubr.bf16.mxu0 0
        %1715 = vmatmul.mubr.bf16.gmra.mxu0 %v1499
        %v1716 = vpop.f32.mrf.mxu0
        %v1717 = vadd.f32 0.0, %v1716
        %v1718 = vpop.f32.mrf.mxu0
        %v1719 = vpop.f32.mrf.mxu0
        %v1720 = vadd.f32 0.0, %v1719
        %v1721 = vpop.f32.mrf.mxu0
        %1722 = vmatprep.mubr.bf16.mxu0 0
        %1723 = vmatmul.mubr.bf16.gmra.mxu0 %v1500
        %v1724 = vpop.f32.mrf.mxu0
        %v1725 = vadd.f32 0.0, %v1724
        %v1726 = vpop.f32.mrf.mxu0
        %v1727 = vpop.f32.mrf.mxu0
        %v1728 = vadd.f32 0.0, %v1727
        %v1729 = vpop.f32.mrf.mxu0
        %1730 = vmatprep.mubr.bf16.mxu0 0
        %1731 = vmatmul.mubr.bf16.gmra.mxu0 %v1501
        %v1732 = vpop.f32.mrf.mxu0
        %v1733 = vadd.f32 0.0, %v1732
        %v1734 = vpop.f32.mrf.mxu0
        %v1735 = vpop.f32.mrf.mxu0
        %v1736 = vadd.f32 0.0, %v1735
        %v1737 = vpop.f32.mrf.mxu0
        %1738 = vdwg.mxu0
        %v1739 = vadd.f32 %v1578, %v1677
        %v1740 = vadd.f32 %v1579, %v1680
        %v1741 = vadd.f32 %v1580, %v1685
        %v1742 = vadd.f32 %v1581, %v1688
        %v1743 = vadd.f32 %v1582, %v1693
        %v1744 = vadd.f32 %v1583, %v1696
        %v1745 = vadd.f32 %v1584, %v1701
        %v1746 = vadd.f32 %v1585, %v1704
        %v1747 = vadd.f32 %v1586, %v1709
        %v1748 = vadd.f32 %v1587, %v1712
        %v1749 = vadd.f32 %v1588, %v1717
        %v1750 = vadd.f32 %v1589, %v1720
        %v1751 = vadd.f32 %v1590, %v1725
        %v1752 = vadd.f32 %v1591, %v1728
        %v1753 = vadd.f32 %v1592, %v1733
        %v1754 = vadd.f32 %v1593, %v1736
        %1755 = vst [vmem:[%s1577] sm:$0xff] %v1739
        %1756 = vst [vmem:[%s1577 + $0x8] sm:$0xff] %v1740
        %1757 = vst [vmem:[%s1577 + $0x10] sm:$0xff] %v1741
        %1758 = vst [vmem:[%s1577 + $0x18] sm:$0xff] %v1742
        %1759 = vst [vmem:[%s1577 + $0x20] sm:$0xff] %v1743
        %1760 = vst [vmem:[%s1577 + $0x28] sm:$0xff] %v1744
        %1761 = vst [vmem:[%s1577 + $0x30] sm:$0xff] %v1745
        %1762 = vst [vmem:[%s1577 + $0x38] sm:$0xff] %v1746
        %1763 = vst [vmem:[%s1577 + $0x40] sm:$0xff] %v1747
        %1764 = vst [vmem:[%s1577 + $0x48] sm:$0xff] %v1748
        %1765 = vst [vmem:[%s1577 + $0x50] sm:$0xff] %v1749
        %1766 = vst [vmem:[%s1577 + $0x58] sm:$0xff] %v1750
        %1767 = vst [vmem:[%s1577 + $0x60] sm:$0xff] %v1751
        %1768 = vst [vmem:[%s1577 + $0x68] sm:$0xff] %v1752
        %1769 = vst [vmem:[%s1577 + $0x70] sm:$0xff] %v1753
        %1770 = vst [vmem:[%s1577 + $0x78] sm:$0xff] %v1754
        %1771 = vst [vmem:[%s283] sm:$0xff] %v1739
        %1772 = vst [vmem:[%s283 + $0x8] sm:$0xff] %v1740
        %1773 = vst [vmem:[%s283 + $0x10] sm:$0xff] %v1741
        %1774 = vst [vmem:[%s283 + $0x18] sm:$0xff] %v1742
        %1775 = vst [vmem:[%s283 + $0x20] sm:$0xff] %v1743
        %1776 = vst [vmem:[%s283 + $0x28] sm:$0xff] %v1744
        %1777 = vst [vmem:[%s283 + $0x30] sm:$0xff] %v1745
        %1778 = vst [vmem:[%s283 + $0x38] sm:$0xff] %v1746
        %1779 = vst [vmem:[%s283 + $0x40] sm:$0xff] %v1747
        %1780 = vst [vmem:[%s283 + $0x48] sm:$0xff] %v1748
        %1781 = vst [vmem:[%s283 + $0x50] sm:$0xff] %v1749
        %1782 = vst [vmem:[%s283 + $0x58] sm:$0xff] %v1750
        %1783 = vst [vmem:[%s283 + $0x60] sm:$0xff] %v1751
        %1784 = vst [vmem:[%s283 + $0x68] sm:$0xff] %v1752
        %1785 = vst [vmem:[%s283 + $0x70] sm:$0xff] %v1753
        %1786 = vst [vmem:[%s283 + $0x78] sm:$0xff] %v1754
      $region52: #{_ognn_forward_impl.1} parent=43 // pred_fallthru
        _
      %p1787 = scmp.eq.s32.totalorder %s21, 2
      // Predicated region
      $region53: #{_ognn_forward_impl.1} parent=43 // pred_check
        %p1788 = pneg %p1787
      $region54: #{_ognn_forward_impl.1} parent=43 // pred_check_branch
        %1790 = sbr.rel (%p1788) target = $region56
      $region55: #{_ognn_forward_impl.1} parent=43 // pred_region
        %s1791 = sadd.s32 %s287, 16
        %s1792 = smul.addr %s1791, 4
        %s1793 = scalar_lea.vmem [#allocation2], %s1792
        %v1794 = vld [vmem:[%s1793] sm:$0xf]
        %v1795 = vld [vmem:[%s1793 + $0x4] sm:$0xf]
        %v1796 = vld [vmem:[%s1793 + $0x8] sm:$0xf]
        %v1797 = vld [vmem:[%s1793 + $0xc] sm:$0xf]
        %v1798 = vld [vmem:[%s1793 + $0x10] sm:$0xf]
        %v1799 = vld [vmem:[%s1793 + $0x14] sm:$0xf]
        %v1800 = vld [vmem:[%s1793 + $0x18] sm:$0xf]
        %v1801 = vld [vmem:[%s1793 + $0x1c] sm:$0xf]
        %v1802 = vld [vmem:[%s1793 + $0x20] sm:$0xf]
        %v1803 = vld [vmem:[%s1793 + $0x24] sm:$0xf]
        %v1804 = vld [vmem:[%s1793 + $0x28] sm:$0xf]
        %v1805 = vld [vmem:[%s1793 + $0x2c] sm:$0xf]
        %v1806 = vld [vmem:[%s1793 + $0x30] sm:$0xf]
        %v1807 = vld [vmem:[%s1793 + $0x34] sm:$0xf]
        %v1808 = vld [vmem:[%s1793 + $0x38] sm:$0xf]
        %v1809 = vld [vmem:[%s1793 + $0x3c] sm:$0xf]
        %v1810 = vunpack.c.l.bf16 %v1794
        %v1811 = vunpack.c.l.bf16 %v1795
        %v1812 = vunpack.c.l.bf16 %v1796
        %v1813 = vunpack.c.l.bf16 %v1797
        %v1814 = vunpack.c.l.bf16 %v1798
        %v1815 = vunpack.c.l.bf16 %v1799
        %v1816 = vunpack.c.l.bf16 %v1800
        %v1817 = vunpack.c.l.bf16 %v1801
        %v1818 = vunpack.c.l.bf16 %v1802
        %v1819 = vunpack.c.l.bf16 %v1803
        %v1820 = vunpack.c.l.bf16 %v1804
        %v1821 = vunpack.c.l.bf16 %v1805
        %v1822 = vunpack.c.l.bf16 %v1806
        %v1823 = vunpack.c.l.bf16 %v1807
        %v1824 = vunpack.c.l.bf16 %v1808
        %v1825 = vunpack.c.l.bf16 %v1809
        %s1826 = scalar_lea.vmem [#allocation2], 64
        %v1827 = vld [vmem:[%s1826] sm:$0xf]
        %v1828 = vld [vmem:[%s1826 + $0x4] sm:$0xf]
        %v1829 = vld [vmem:[%s1826 + $0x8] sm:$0xf]
        %v1830 = vld [vmem:[%s1826 + $0xc] sm:$0xf]
        %v1831 = vld [vmem:[%s1826 + $0x10] sm:$0xf]
        %v1832 = vld [vmem:[%s1826 + $0x14] sm:$0xf]
        %v1833 = vld [vmem:[%s1826 + $0x18] sm:$0xf]
        %v1834 = vld [vmem:[%s1826 + $0x1c] sm:$0xf]
        %v1835 = vld [vmem:[%s1826 + $0x20] sm:$0xf]
        %v1836 = vld [vmem:[%s1826 + $0x24] sm:$0xf]
        %v1837 = vld [vmem:[%s1826 + $0x28] sm:$0xf]
        %v1838 = vld [vmem:[%s1826 + $0x2c] sm:$0xf]
        %v1839 = vld [vmem:[%s1826 + $0x30] sm:$0xf]
        %v1840 = vld [vmem:[%s1826 + $0x34] sm:$0xf]
        %v1841 = vld [vmem:[%s1826 + $0x38] sm:$0xf]
        %v1842 = vld [vmem:[%s1826 + $0x3c] sm:$0xf]
        %v1859 = vunpack.c.l.b16 %v291
        %v1860 = vunpack.c.l.b16 %v292
        %v1861 = vunpack.c.l.b16 %v293
        %v1862 = vunpack.c.l.b16 %v294
        %v1863 = vunpack.c.l.b16 %v295
        %v1864 = vunpack.c.l.b16 %v296
        %v1865 = vunpack.c.l.b16 %v297
        %v1866 = vunpack.c.l.b16 %v298
        %v1867 = vunpack.c.l.b16 %v299
        %v1868 = vunpack.c.l.b16 %v300
        %v1869 = vunpack.c.l.b16 %v301
        %v1870 = vunpack.c.l.b16 %v302
        %v1871 = vunpack.c.l.b16 %v303
        %v1872 = vunpack.c.l.b16 %v304
        %v1873 = vunpack.c.l.b16 %v305
        %v1874 = vunpack.c.l.b16 %v306
        %v1875 = vpack.c.b16 %v1860, %v1859
        %v1876 = vpack.c.b16 %v1862, %v1861
        %v1877 = vpack.c.b16 %v1864, %v1863
        %v1878 = vpack.c.b16 %v1866, %v1865
        %v1879 = vpack.c.b16 %v1868, %v1867
        %v1880 = vpack.c.b16 %v1870, %v1869
        %v1881 = vpack.c.b16 %v1872, %v1871
        %v1882 = vpack.c.b16 %v1874, %v1873
        %v1907 = vunpack.c.l.b16 %v1827
        %v1908 = vunpack.c.l.b16 %v1828
        %v1909 = vunpack.c.l.b16 %v1829
        %v1910 = vunpack.c.l.b16 %v1830
        %v1911 = vunpack.c.l.b16 %v1831
        %v1912 = vunpack.c.l.b16 %v1832
        %v1913 = vunpack.c.l.b16 %v1833
        %v1914 = vunpack.c.l.b16 %v1834
        %v1915 = vunpack.c.l.b16 %v1835
        %v1916 = vunpack.c.l.b16 %v1836
        %v1917 = vunpack.c.l.b16 %v1837
        %v1918 = vunpack.c.l.b16 %v1838
        %v1919 = vunpack.c.l.b16 %v1839
        %v1920 = vunpack.c.l.b16 %v1840
        %v1921 = vunpack.c.l.b16 %v1841
        %v1922 = vunpack.c.l.b16 %v1842
        %v1923 = vpack.c.b16 %v1908, %v1907
        %v1924 = vpack.c.b16 %v1910, %v1909
        %v1925 = vpack.c.b16 %v1912, %v1911
        %v1926 = vpack.c.b16 %v1914, %v1913
        %v1927 = vpack.c.b16 %v1916, %v1915
        %v1928 = vpack.c.b16 %v1918, %v1917
        %v1929 = vpack.c.b16 %v1920, %v1919
        %v1930 = vpack.c.b16 %v1922, %v1921
        %1939 = vmatprep.subr.bf16.mxu0 0
        %1940 = vmatpush1.bf16.msra.mxu0 %v1930
        %1941 = vmatprep.subr.bf16.mxu0 0
        %1942 = vmatpush1.bf16.msra.mxu0 %v1929
        %1943 = vmatprep.subr.bf16.mxu0 0
        %1944 = vmatpush1.bf16.msra.mxu0 %v1928
        %1945 = vmatprep.subr.bf16.mxu0 0
        %1946 = vmatpush1.bf16.msra.mxu0 %v1927
        %1947 = vmatprep.subr.bf16.mxu0 0
        %1948 = vmatpush1.bf16.msra.mxu0 %v1926
        %1949 = vmatprep.subr.bf16.mxu0 0
        %1950 = vmatpush1.bf16.msra.mxu0 %v1925
        %1951 = vmatprep.subr.bf16.mxu0 0
        %1952 = vmatpush1.bf16.msra.mxu0 %v1924
        %1953 = vmatprep.subr.bf16.mxu0 0
        %1954 = vmatpush1.bf16.msra.mxu0 %v1923
        %1955 = vmatprep.subr.bf16.mxu0 0
        %1956 = vmatpush2.bf16.msra.mxu0 0
        %1957 = vmatprep.subr.bf16.mxu0 0
        %1958 = vmatpush2.bf16.msra.mxu0 0
        %1959 = vmatprep.subr.bf16.mxu0 0
        %1960 = vmatpush2.bf16.msra.mxu0 0
        %1961 = vmatprep.subr.bf16.mxu0 0
        %1962 = vmatpush2.bf16.msra.mxu0 0
        %1963 = vmatprep.subr.bf16.mxu0 0
        %1964 = vmatpush2.bf16.msra.mxu0 0
        %1965 = vmatprep.subr.bf16.mxu0 0
        %1966 = vmatpush2.bf16.msra.mxu0 0
        %1967 = vmatprep.subr.bf16.mxu0 0
        %1968 = vmatpush2.bf16.msra.mxu0 0
        %1969 = vmatprep.subr.bf16.mxu0 0
        %1970 = vmatpush2.bf16.msra.mxu0 0
        %1971 = vmatprep.mubr.bf16.mxu0 0
        %1972 = vmatmul.mubr.bf16.gmra.mxu0 %v1875
        %v1973 = vpop.f32.mrf.mxu0
        %v1974 = vadd.f32 0.0, %v1973
        %v1975 = vpop.f32.mrf.mxu0
        %v1976 = vpop.f32.mrf.mxu0
        %v1977 = vadd.f32 0.0, %v1976
        %v1978 = vpop.f32.mrf.mxu0
        %1979 = vmatprep.mubr.bf16.mxu0 0
        %1980 = vmatmul.mubr.bf16.gmra.mxu0 %v1876
        %v1981 = vpop.f32.mrf.mxu0
        %v1982 = vadd.f32 0.0, %v1981
        %v1983 = vpop.f32.mrf.mxu0
        %v1984 = vpop.f32.mrf.mxu0
        %v1985 = vadd.f32 0.0, %v1984
        %v1986 = vpop.f32.mrf.mxu0
        %1987 = vmatprep.mubr.bf16.mxu0 0
        %1988 = vmatmul.mubr.bf16.gmra.mxu0 %v1877
        %v1989 = vpop.f32.mrf.mxu0
        %v1990 = vadd.f32 0.0, %v1989
        %v1991 = vpop.f32.mrf.mxu0
        %v1992 = vpop.f32.mrf.mxu0
        %v1993 = vadd.f32 0.0, %v1992
        %v1994 = vpop.f32.mrf.mxu0
        %1995 = vmatprep.mubr.bf16.mxu0 0
        %1996 = vmatmul.mubr.bf16.gmra.mxu0 %v1878
        %v1997 = vpop.f32.mrf.mxu0
        %v1998 = vadd.f32 0.0, %v1997
        %v1999 = vpop.f32.mrf.mxu0
        %v2000 = vpop.f32.mrf.mxu0
        %v2001 = vadd.f32 0.0, %v2000
        %v2002 = vpop.f32.mrf.mxu0
        %2003 = vmatprep.mubr.bf16.mxu0 0
        %2004 = vmatmul.mubr.bf16.gmra.mxu0 %v1879
        %v2005 = vpop.f32.mrf.mxu0
        %v2006 = vadd.f32 0.0, %v2005
        %v2007 = vpop.f32.mrf.mxu0
        %v2008 = vpop.f32.mrf.mxu0
        %v2009 = vadd.f32 0.0, %v2008
        %v2010 = vpop.f32.mrf.mxu0
        %2011 = vmatprep.mubr.bf16.mxu0 0
        %2012 = vmatmul.mubr.bf16.gmra.mxu0 %v1880
        %v2013 = vpop.f32.mrf.mxu0
        %v2014 = vadd.f32 0.0, %v2013
        %v2015 = vpop.f32.mrf.mxu0
        %v2016 = vpop.f32.mrf.mxu0
        %v2017 = vadd.f32 0.0, %v2016
        %v2018 = vpop.f32.mrf.mxu0
        %2019 = vmatprep.mubr.bf16.mxu0 0
        %2020 = vmatmul.mubr.bf16.gmra.mxu0 %v1881
        %v2021 = vpop.f32.mrf.mxu0
        %v2022 = vadd.f32 0.0, %v2021
        %v2023 = vpop.f32.mrf.mxu0
        %v2024 = vpop.f32.mrf.mxu0
        %v2025 = vadd.f32 0.0, %v2024
        %v2026 = vpop.f32.mrf.mxu0
        %2027 = vmatprep.mubr.bf16.mxu0 0
        %2028 = vmatmul.mubr.bf16.gmra.mxu0 %v1882
        %v2029 = vpop.f32.mrf.mxu0
        %v2030 = vadd.f32 0.0, %v2029
        %v2031 = vpop.f32.mrf.mxu0
        %v2032 = vpop.f32.mrf.mxu0
        %v2033 = vadd.f32 0.0, %v2032
        %v2034 = vpop.f32.mrf.mxu0
        %2035 = vdwg.mxu0
        %v2036 = vpack.c.bf16 %v1977, %v1974
        %v2037 = vpack.c.bf16 %v1985, %v1982
        %v2038 = vpack.c.bf16 %v1993, %v1990
        %v2039 = vpack.c.bf16 %v2001, %v1998
        %v2040 = vpack.c.bf16 %v2009, %v2006
        %v2041 = vpack.c.bf16 %v2017, %v2014
        %v2042 = vpack.c.bf16 %v2025, %v2022
        %v2043 = vpack.c.bf16 %v2033, %v2030
        %v2044 = vlaneseq
        %v2045 = vshrl.u32 %v2044, 7
        %v2046 = vsub.s32 4, %v2045
        %v2047 = vrot.slane %v339, %v2046
        %v2064 = vunpack.c.l.b16 %v307
        %v2065 = vunpack.c.l.b16 %v308
        %v2066 = vunpack.c.l.b16 %v309
        %v2067 = vunpack.c.l.b16 %v310
        %v2068 = vunpack.c.l.b16 %v311
        %v2069 = vunpack.c.l.b16 %v312
        %v2070 = vunpack.c.l.b16 %v313
        %v2071 = vunpack.c.l.b16 %v314
        %v2072 = vunpack.c.l.b16 %v315
        %v2073 = vunpack.c.l.b16 %v316
        %v2074 = vunpack.c.l.b16 %v317
        %v2075 = vunpack.c.l.b16 %v318
        %v2076 = vunpack.c.l.b16 %v319
        %v2077 = vunpack.c.l.b16 %v320
        %v2078 = vunpack.c.l.b16 %v321
        %v2079 = vunpack.c.l.b16 %v322
        %v2080 = vpack.c.b16 %v2065, %v2064
        %v2081 = vpack.c.b16 %v2067, %v2066
        %v2082 = vpack.c.b16 %v2069, %v2068
        %v2083 = vpack.c.b16 %v2071, %v2070
        %v2084 = vpack.c.b16 %v2073, %v2072
        %v2085 = vpack.c.b16 %v2075, %v2074
        %v2086 = vpack.c.b16 %v2077, %v2076
        %v2087 = vpack.c.b16 %v2079, %v2078
        %2096 = vmatprep.subr.bf16.mxu0 0
        %2097 = vmatpush1.bf16.msra.mxu0 %v2087
        %2098 = vmatprep.subr.bf16.mxu0 0
        %2099 = vmatpush1.bf16.msra.mxu0 %v2086
        %2100 = vmatprep.subr.bf16.mxu0 0
        %2101 = vmatpush1.bf16.msra.mxu0 %v2085
        %2102 = vmatprep.subr.bf16.mxu0 0
        %2103 = vmatpush1.bf16.msra.mxu0 %v2084
        %2104 = vmatprep.subr.bf16.mxu0 0
        %2105 = vmatpush1.bf16.msra.mxu0 %v2083
        %2106 = vmatprep.subr.bf16.mxu0 0
        %2107 = vmatpush1.bf16.msra.mxu0 %v2082
        %2108 = vmatprep.subr.bf16.mxu0 0
        %2109 = vmatpush1.bf16.msra.mxu0 %v2081
        %2110 = vmatprep.subr.bf16.mxu0 0
        %2111 = vmatpush1.bf16.msra.mxu0 %v2080
        %2112 = vmatprep.subr.bf16.mxu0 0
        %2113 = vmatpush2.bf16.msra.mxu0 0
        %2114 = vmatprep.subr.bf16.mxu0 0
        %2115 = vmatpush2.bf16.msra.mxu0 0
        %2116 = vmatprep.subr.bf16.mxu0 0
        %2117 = vmatpush2.bf16.msra.mxu0 0
        %2118 = vmatprep.subr.bf16.mxu0 0
        %2119 = vmatpush2.bf16.msra.mxu0 0
        %2120 = vmatprep.subr.bf16.mxu0 0
        %2121 = vmatpush2.bf16.msra.mxu0 0
        %2122 = vmatprep.subr.bf16.mxu0 0
        %2123 = vmatpush2.bf16.msra.mxu0 0
        %2124 = vmatprep.subr.bf16.mxu0 0
        %2125 = vmatpush2.bf16.msra.mxu0 0
        %2126 = vmatprep.subr.bf16.mxu0 0
        %2127 = vmatpush2.bf16.msra.mxu0 0
        %2128 = vmatprep.mubr.bf16.mxu0 0
        %2129 = vmatmul.mubr.bf16.gmra.mxu0 %v2036
        %v2130 = vpop.f32.mrf.mxu0
        %v2131 = vadd.f32 %v2047, %v2130
        %v2132 = vpop.f32.mrf.mxu0
        %v2133 = vpop.f32.mrf.mxu0
        %v2134 = vadd.f32 %v2047, %v2133
        %v2135 = vpop.f32.mrf.mxu0
        %2136 = vmatprep.mubr.bf16.mxu0 0
        %2137 = vmatmul.mubr.bf16.gmra.mxu0 %v2037
        %v2138 = vpop.f32.mrf.mxu0
        %v2139 = vadd.f32 %v2047, %v2138
        %v2140 = vpop.f32.mrf.mxu0
        %v2141 = vpop.f32.mrf.mxu0
        %v2142 = vadd.f32 %v2047, %v2141
        %v2143 = vpop.f32.mrf.mxu0
        %2144 = vmatprep.mubr.bf16.mxu0 0
        %2145 = vmatmul.mubr.bf16.gmra.mxu0 %v2038
        %v2146 = vpop.f32.mrf.mxu0
        %v2147 = vadd.f32 %v2047, %v2146
        %v2148 = vpop.f32.mrf.mxu0
        %v2149 = vpop.f32.mrf.mxu0
        %v2150 = vadd.f32 %v2047, %v2149
        %v2151 = vpop.f32.mrf.mxu0
        %2152 = vmatprep.mubr.bf16.mxu0 0
        %2153 = vmatmul.mubr.bf16.gmra.mxu0 %v2039
        %v2154 = vpop.f32.mrf.mxu0
        %v2155 = vadd.f32 %v2047, %v2154
        %v2156 = vpop.f32.mrf.mxu0
        %v2157 = vpop.f32.mrf.mxu0
        %v2158 = vadd.f32 %v2047, %v2157
        %v2159 = vpop.f32.mrf.mxu0
        %2160 = vmatprep.mubr.bf16.mxu0 0
        %2161 = vmatmul.mubr.bf16.gmra.mxu0 %v2040
        %v2162 = vpop.f32.mrf.mxu0
        %v2163 = vadd.f32 %v2047, %v2162
        %v2164 = vpop.f32.mrf.mxu0
        %v2165 = vpop.f32.mrf.mxu0
        %v2166 = vadd.f32 %v2047, %v2165
        %v2167 = vpop.f32.mrf.mxu0
        %2168 = vmatprep.mubr.bf16.mxu0 0
        %2169 = vmatmul.mubr.bf16.gmra.mxu0 %v2041
        %v2170 = vpop.f32.mrf.mxu0
        %v2171 = vadd.f32 %v2047, %v2170
        %v2172 = vpop.f32.mrf.mxu0
        %v2173 = vpop.f32.mrf.mxu0
        %v2174 = vadd.f32 %v2047, %v2173
        %v2175 = vpop.f32.mrf.mxu0
        %2176 = vmatprep.mubr.bf16.mxu0 0
        %2177 = vmatmul.mubr.bf16.gmra.mxu0 %v2042
        %v2178 = vpop.f32.mrf.mxu0
        %v2179 = vadd.f32 %v2047, %v2178
        %v2180 = vpop.f32.mrf.mxu0
        %v2181 = vpop.f32.mrf.mxu0
        %v2182 = vadd.f32 %v2047, %v2181
        %v2183 = vpop.f32.mrf.mxu0
        %2184 = vmatprep.mubr.bf16.mxu0 0
        %2185 = vmatmul.mubr.bf16.gmra.mxu0 %v2043
        %v2186 = vpop.f32.mrf.mxu0
        %v2187 = vadd.f32 %v2047, %v2186
        %v2188 = vpop.f32.mrf.mxu0
        %v2189 = vpop.f32.mrf.mxu0
        %v2190 = vadd.f32 %v2047, %v2189
        %v2191 = vpop.f32.mrf.mxu0
        %2192 = vdwg.mxu0
        %v2193 = vadd.f32 %v2131, %v1810
        %v2194 = vadd.f32 %v2134, %v1811
        %v2195 = vadd.f32 %v2139, %v1812
        %v2196 = vadd.f32 %v2142, %v1813
        %v2197 = vadd.f32 %v2147, %v1814
        %v2198 = vadd.f32 %v2150, %v1815
        %v2199 = vadd.f32 %v2155, %v1816
        %v2200 = vadd.f32 %v2158, %v1817
        %v2201 = vadd.f32 %v2163, %v1818
        %v2202 = vadd.f32 %v2166, %v1819
        %v2203 = vadd.f32 %v2171, %v1820
        %v2204 = vadd.f32 %v2174, %v1821
        %v2205 = vadd.f32 %v2179, %v1822
        %v2206 = vadd.f32 %v2182, %v1823
        %v2207 = vadd.f32 %v2187, %v1824
        %v2208 = vadd.f32 %v2190, %v1825
        %s2209 = scalar_lea.vmem [#allocation3], %s286
        %v2210 = vld [vmem:[%s2209] sm:$0xff]
        %v2211 = vld [vmem:[%s2209 + $0x8] sm:$0xff]
        %v2212 = vld [vmem:[%s2209 + $0x10] sm:$0xff]
        %v2213 = vld [vmem:[%s2209 + $0x18] sm:$0xff]
        %v2214 = vld [vmem:[%s2209 + $0x20] sm:$0xff]
        %v2215 = vld [vmem:[%s2209 + $0x28] sm:$0xff]
        %v2216 = vld [vmem:[%s2209 + $0x30] sm:$0xff]
        %v2217 = vld [vmem:[%s2209 + $0x38] sm:$0xff]
        %v2218 = vld [vmem:[%s2209 + $0x40] sm:$0xff]
        %v2219 = vld [vmem:[%s2209 + $0x48] sm:$0xff]
        %v2220 = vld [vmem:[%s2209 + $0x50] sm:$0xff]
        %v2221 = vld [vmem:[%s2209 + $0x58] sm:$0xff]
        %v2222 = vld [vmem:[%s2209 + $0x60] sm:$0xff]
        %v2223 = vld [vmem:[%s2209 + $0x68] sm:$0xff]
        %v2224 = vld [vmem:[%s2209 + $0x70] sm:$0xff]
        %v2225 = vld [vmem:[%s2209 + $0x78] sm:$0xff]
        %v2226 = vpack.c.bf16 %v2194, %v2193
        %v2227 = vpack.c.bf16 %v2196, %v2195
        %v2228 = vpack.c.bf16 %v2198, %v2197
        %v2229 = vpack.c.bf16 %v2200, %v2199
        %v2230 = vpack.c.bf16 %v2202, %v2201
        %v2231 = vpack.c.bf16 %v2204, %v2203
        %v2232 = vpack.c.bf16 %v2206, %v2205
        %v2233 = vpack.c.bf16 %v2208, %v2207
        %v2250 = vunpack.c.l.b16 %v323
        %v2251 = vunpack.c.l.b16 %v324
        %v2252 = vunpack.c.l.b16 %v325
        %v2253 = vunpack.c.l.b16 %v326
        %v2254 = vunpack.c.l.b16 %v327
        %v2255 = vunpack.c.l.b16 %v328
        %v2256 = vunpack.c.l.b16 %v329
        %v2257 = vunpack.c.l.b16 %v330
        %v2258 = vunpack.c.l.b16 %v331
        %v2259 = vunpack.c.l.b16 %v332
        %v2260 = vunpack.c.l.b16 %v333
        %v2261 = vunpack.c.l.b16 %v334
        %v2262 = vunpack.c.l.b16 %v335
        %v2263 = vunpack.c.l.b16 %v336
        %v2264 = vunpack.c.l.b16 %v337
        %v2265 = vunpack.c.l.b16 %v338
        %v2266 = vpack.c.b16 %v2251, %v2250
        %v2267 = vpack.c.b16 %v2253, %v2252
        %v2268 = vpack.c.b16 %v2255, %v2254
        %v2269 = vpack.c.b16 %v2257, %v2256
        %v2270 = vpack.c.b16 %v2259, %v2258
        %v2271 = vpack.c.b16 %v2261, %v2260
        %v2272 = vpack.c.b16 %v2263, %v2262
        %v2273 = vpack.c.b16 %v2265, %v2264
        %2282 = vmatprep.subr.bf16.mxu0 0
        %2283 = vmatpush1.bf16.msra.mxu0 %v2273
        %2284 = vmatprep.subr.bf16.mxu0 0
        %2285 = vmatpush1.bf16.msra.mxu0 %v2272
        %2286 = vmatprep.subr.bf16.mxu0 0
        %2287 = vmatpush1.bf16.msra.mxu0 %v2271
        %2288 = vmatprep.subr.bf16.mxu0 0
        %2289 = vmatpush1.bf16.msra.mxu0 %v2270
        %2290 = vmatprep.subr.bf16.mxu0 0
        %2291 = vmatpush1.bf16.msra.mxu0 %v2269
        %2292 = vmatprep.subr.bf16.mxu0 0
        %2293 = vmatpush1.bf16.msra.mxu0 %v2268
        %2294 = vmatprep.subr.bf16.mxu0 0
        %2295 = vmatpush1.bf16.msra.mxu0 %v2267
        %2296 = vmatprep.subr.bf16.mxu0 0
        %2297 = vmatpush1.bf16.msra.mxu0 %v2266
        %2298 = vmatprep.subr.bf16.mxu0 0
        %2299 = vmatpush2.bf16.msra.mxu0 0
        %2300 = vmatprep.subr.bf16.mxu0 0
        %2301 = vmatpush2.bf16.msra.mxu0 0
        %2302 = vmatprep.subr.bf16.mxu0 0
        %2303 = vmatpush2.bf16.msra.mxu0 0
        %2304 = vmatprep.subr.bf16.mxu0 0
        %2305 = vmatpush2.bf16.msra.mxu0 0
        %2306 = vmatprep.subr.bf16.mxu0 0
        %2307 = vmatpush2.bf16.msra.mxu0 0
        %2308 = vmatprep.subr.bf16.mxu0 0
        %2309 = vmatpush2.bf16.msra.mxu0 0
        %2310 = vmatprep.subr.bf16.mxu0 0
        %2311 = vmatpush2.bf16.msra.mxu0 0
        %2312 = vmatprep.subr.bf16.mxu0 0
        %2313 = vmatpush2.bf16.msra.mxu0 0
        %2314 = vmatprep.mubr.bf16.mxu0 0
        %2315 = vmatmul.mubr.bf16.gmra.mxu0 %v2226
        %v2316 = vpop.f32.mrf.mxu0
        %v2317 = vadd.f32 0.0, %v2316
        %v2318 = vpop.f32.mrf.mxu0
        %v2319 = vpop.f32.mrf.mxu0
        %v2320 = vadd.f32 0.0, %v2319
        %v2321 = vpop.f32.mrf.mxu0
        %2322 = vmatprep.mubr.bf16.mxu0 0
        %2323 = vmatmul.mubr.bf16.gmra.mxu0 %v2227
        %v2324 = vpop.f32.mrf.mxu0
        %v2325 = vadd.f32 0.0, %v2324
        %v2326 = vpop.f32.mrf.mxu0
        %v2327 = vpop.f32.mrf.mxu0
        %v2328 = vadd.f32 0.0, %v2327
        %v2329 = vpop.f32.mrf.mxu0
        %2330 = vmatprep.mubr.bf16.mxu0 0
        %2331 = vmatmul.mubr.bf16.gmra.mxu0 %v2228
        %v2332 = vpop.f32.mrf.mxu0
        %v2333 = vadd.f32 0.0, %v2332
        %v2334 = vpop.f32.mrf.mxu0
        %v2335 = vpop.f32.mrf.mxu0
        %v2336 = vadd.f32 0.0, %v2335
        %v2337 = vpop.f32.mrf.mxu0
        %2338 = vmatprep.mubr.bf16.mxu0 0
        %2339 = vmatmul.mubr.bf16.gmra.mxu0 %v2229
        %v2340 = vpop.f32.mrf.mxu0
        %v2341 = vadd.f32 0.0, %v2340
        %v2342 = vpop.f32.mrf.mxu0
        %v2343 = vpop.f32.mrf.mxu0
        %v2344 = vadd.f32 0.0, %v2343
        %v2345 = vpop.f32.mrf.mxu0
        %2346 = vmatprep.mubr.bf16.mxu0 0
        %2347 = vmatmul.mubr.bf16.gmra.mxu0 %v2230
        %v2348 = vpop.f32.mrf.mxu0
        %v2349 = vadd.f32 0.0, %v2348
        %v2350 = vpop.f32.mrf.mxu0
        %v2351 = vpop.f32.mrf.mxu0
        %v2352 = vadd.f32 0.0, %v2351
        %v2353 = vpop.f32.mrf.mxu0
        %2354 = vmatprep.mubr.bf16.mxu0 0
        %2355 = vmatmul.mubr.bf16.gmra.mxu0 %v2231
        %v2356 = vpop.f32.mrf.mxu0
        %v2357 = vadd.f32 0.0, %v2356
        %v2358 = vpop.f32.mrf.mxu0
        %v2359 = vpop.f32.mrf.mxu0
        %v2360 = vadd.f32 0.0, %v2359
        %v2361 = vpop.f32.mrf.mxu0
        %2362 = vmatprep.mubr.bf16.mxu0 0
        %2363 = vmatmul.mubr.bf16.gmra.mxu0 %v2232
        %v2364 = vpop.f32.mrf.mxu0
        %v2365 = vadd.f32 0.0, %v2364
        %v2366 = vpop.f32.mrf.mxu0
        %v2367 = vpop.f32.mrf.mxu0
        %v2368 = vadd.f32 0.0, %v2367
        %v2369 = vpop.f32.mrf.mxu0
        %2370 = vmatprep.mubr.bf16.mxu0 0
        %2371 = vmatmul.mubr.bf16.gmra.mxu0 %v2233
        %v2372 = vpop.f32.mrf.mxu0
        %v2373 = vadd.f32 0.0, %v2372
        %v2374 = vpop.f32.mrf.mxu0
        %v2375 = vpop.f32.mrf.mxu0
        %v2376 = vadd.f32 0.0, %v2375
        %v2377 = vpop.f32.mrf.mxu0
        %2378 = vdwg.mxu0
        %v2379 = vadd.f32 %v2210, %v2317
        %v2380 = vadd.f32 %v2211, %v2320
        %v2381 = vadd.f32 %v2212, %v2325
        %v2382 = vadd.f32 %v2213, %v2328
        %v2383 = vadd.f32 %v2214, %v2333
        %v2384 = vadd.f32 %v2215, %v2336
        %v2385 = vadd.f32 %v2216, %v2341
        %v2386 = vadd.f32 %v2217, %v2344
        %v2387 = vadd.f32 %v2218, %v2349
        %v2388 = vadd.f32 %v2219, %v2352
        %v2389 = vadd.f32 %v2220, %v2357
        %v2390 = vadd.f32 %v2221, %v2360
        %v2391 = vadd.f32 %v2222, %v2365
        %v2392 = vadd.f32 %v2223, %v2368
        %v2393 = vadd.f32 %v2224, %v2373
        %v2394 = vadd.f32 %v2225, %v2376
        %v2395 = vld [vmem:[%s5] sm:$0x1]
        %v2397 = vlaneseq
        %v2398 = vshrl.u32 %v2397, 7
        %v2399 = vsub.s32 0, %v2398
        %v2400 = vrot.slane %v2395, %v2399
        %v2402 = vadd.f32 %v2379, %v2400
        %v2403 = vadd.f32 %v2380, %v2400
        %v2404 = vadd.f32 %v2381, %v2400
        %v2405 = vadd.f32 %v2382, %v2400
        %v2406 = vadd.f32 %v2383, %v2400
        %v2407 = vadd.f32 %v2384, %v2400
        %v2408 = vadd.f32 %v2385, %v2400
        %v2409 = vadd.f32 %v2386, %v2400
        %v2410 = vadd.f32 %v2387, %v2400
        %v2411 = vadd.f32 %v2388, %v2400
        %v2412 = vadd.f32 %v2389, %v2400
        %v2413 = vadd.f32 %v2390, %v2400
        %v2414 = vadd.f32 %v2391, %v2400
        %v2415 = vadd.f32 %v2392, %v2400
        %v2416 = vadd.f32 %v2393, %v2400
        %v2417 = vadd.f32 %v2394, %v2400
        %2418 = vmax.xlane.f32.xlu0 %v2402
        %v2419 = vpop.xlane.xlu0 %2418
        %2420 = vmax.xlane.f32.xlu0 %v2403
        %v2421 = vpop.xlane.xlu0 %2420
        %2422 = vmax.xlane.f32.xlu0 %v2404
        %v2423 = vpop.xlane.xlu0 %2422
        %2424 = vmax.xlane.f32.xlu0 %v2405
        %v2425 = vpop.xlane.xlu0 %2424
        %2426 = vmax.xlane.f32.xlu0 %v2406
        %v2427 = vpop.xlane.xlu0 %2426
        %2428 = vmax.xlane.f32.xlu0 %v2407
        %v2429 = vpop.xlane.xlu0 %2428
        %2430 = vmax.xlane.f32.xlu0 %v2408
        %v2431 = vpop.xlane.xlu0 %2430
        %2432 = vmax.xlane.f32.xlu0 %v2409
        %v2433 = vpop.xlane.xlu0 %2432
        %2434 = vmax.xlane.f32.xlu0 %v2410
        %v2435 = vpop.xlane.xlu0 %2434
        %2436 = vmax.xlane.f32.xlu0 %v2411
        %v2437 = vpop.xlane.xlu0 %2436
        %2438 = vmax.xlane.f32.xlu0 %v2412
        %v2439 = vpop.xlane.xlu0 %2438
        %2440 = vmax.xlane.f32.xlu0 %v2413
        %v2441 = vpop.xlane.xlu0 %2440
        %2442 = vmax.xlane.f32.xlu0 %v2414
        %v2443 = vpop.xlane.xlu0 %2442
        %2444 = vmax.xlane.f32.xlu0 %v2415
        %v2445 = vpop.xlane.xlu0 %2444
        %2446 = vmax.xlane.f32.xlu0 %v2416
        %v2447 = vpop.xlane.xlu0 %2446
        %2448 = vmax.xlane.f32.xlu0 %v2417
        %v2449 = vpop.xlane.xlu0 %2448
        %v2450 = vsub.f32 %v2402, %v2419
        %v2451 = vsub.f32 %v2403, %v2421
        %v2452 = vsub.f32 %v2404, %v2423
        %v2453 = vsub.f32 %v2405, %v2425
        %v2454 = vsub.f32 %v2406, %v2427
        %v2455 = vsub.f32 %v2407, %v2429
        %v2456 = vsub.f32 %v2408, %v2431
        %v2457 = vsub.f32 %v2409, %v2433
        %v2458 = vsub.f32 %v2410, %v2435
        %v2459 = vsub.f32 %v2411, %v2437
        %v2460 = vsub.f32 %v2412, %v2439
        %v2461 = vsub.f32 %v2413, %v2441
        %v2462 = vsub.f32 %v2414, %v2443
        %v2463 = vsub.f32 %v2415, %v2445
        %v2464 = vsub.f32 %v2416, %v2447
        %v2465 = vsub.f32 %v2417, %v2449
        %v2466 = vmul.f32 %v2450, 1.442695
        %v2467 = vpow.pop %v2466
        %v2468 = vmul.f32 %v2451, 1.442695
        %v2469 = vpow.pop %v2468
        %v2470 = vmul.f32 %v2452, 1.442695
        %v2471 = vpow.pop %v2470
        %v2472 = vmul.f32 %v2453, 1.442695
        %v2473 = vpow.pop %v2472
        %v2474 = vmul.f32 %v2454, 1.442695
        %v2475 = vpow.pop %v2474
        %v2476 = vmul.f32 %v2455, 1.442695
        %v2477 = vpow.pop %v2476
        %v2478 = vmul.f32 %v2456, 1.442695
        %v2479 = vpow.pop %v2478
        %v2480 = vmul.f32 %v2457, 1.442695
        %v2481 = vpow.pop %v2480
        %v2482 = vmul.f32 %v2458, 1.442695
        %v2483 = vpow.pop %v2482
        %v2484 = vmul.f32 %v2459, 1.442695
        %v2485 = vpow.pop %v2484
        %v2486 = vmul.f32 %v2460, 1.442695
        %v2487 = vpow.pop %v2486
        %v2488 = vmul.f32 %v2461, 1.442695
        %v2489 = vpow.pop %v2488
        %v2490 = vmul.f32 %v2462, 1.442695
        %v2491 = vpow.pop %v2490
        %v2492 = vmul.f32 %v2463, 1.442695
        %v2493 = vpow.pop %v2492
        %v2494 = vmul.f32 %v2464, 1.442695
        %v2495 = vpow.pop %v2494
        %v2496 = vmul.f32 %v2465, 1.442695
        %v2497 = vpow.pop %v2496
        %2498 = vadd.xlane.f32.xlu0 %v2467
        %v2499 = vpop.xlane.xlu0 %2498
        %2500 = vadd.xlane.f32.xlu0 %v2469
        %v2501 = vpop.xlane.xlu0 %2500
        %2502 = vadd.xlane.f32.xlu0 %v2471
        %v2503 = vpop.xlane.xlu0 %2502
        %2504 = vadd.xlane.f32.xlu0 %v2473
        %v2505 = vpop.xlane.xlu0 %2504
        %2506 = vadd.xlane.f32.xlu0 %v2475
        %v2507 = vpop.xlane.xlu0 %2506
        %2508 = vadd.xlane.f32.xlu0 %v2477
        %v2509 = vpop.xlane.xlu0 %2508
        %2510 = vadd.xlane.f32.xlu0 %v2479
        %v2511 = vpop.xlane.xlu0 %2510
        %2512 = vadd.xlane.f32.xlu0 %v2481
        %v2513 = vpop.xlane.xlu0 %2512
        %2514 = vadd.xlane.f32.xlu0 %v2483
        %v2515 = vpop.xlane.xlu0 %2514
        %2516 = vadd.xlane.f32.xlu0 %v2485
        %v2517 = vpop.xlane.xlu0 %2516
        %2518 = vadd.xlane.f32.xlu0 %v2487
        %v2519 = vpop.xlane.xlu0 %2518
        %2520 = vadd.xlane.f32.xlu0 %v2489
        %v2521 = vpop.xlane.xlu0 %2520
        %2522 = vadd.xlane.f32.xlu0 %v2491
        %v2523 = vpop.xlane.xlu0 %2522
        %2524 = vadd.xlane.f32.xlu0 %v2493
        %v2525 = vpop.xlane.xlu0 %2524
        %2526 = vadd.xlane.f32.xlu0 %v2495
        %v2527 = vpop.xlane.xlu0 %2526
        %2528 = vadd.xlane.f32.xlu0 %v2497
        %v2529 = vpop.xlane.xlu0 %2528
        %v2530 = vlog2.pop %v2499
        %v2531 = vmul.f32 %v2530, 0.6931472
        %v2532 = vlog2.pop %v2501
        %v2533 = vmul.f32 %v2532, 0.6931472
        %v2534 = vlog2.pop %v2503
        %v2535 = vmul.f32 %v2534, 0.6931472
        %v2536 = vlog2.pop %v2505
        %v2537 = vmul.f32 %v2536, 0.6931472
        %v2538 = vlog2.pop %v2507
        %v2539 = vmul.f32 %v2538, 0.6931472
        %v2540 = vlog2.pop %v2509
        %v2541 = vmul.f32 %v2540, 0.6931472
        %v2542 = vlog2.pop %v2511
        %v2543 = vmul.f32 %v2542, 0.6931472
        %v2544 = vlog2.pop %v2513
        %v2545 = vmul.f32 %v2544, 0.6931472
        %v2546 = vlog2.pop %v2515
        %v2547 = vmul.f32 %v2546, 0.6931472
        %v2548 = vlog2.pop %v2517
        %v2549 = vmul.f32 %v2548, 0.6931472
        %v2550 = vlog2.pop %v2519
        %v2551 = vmul.f32 %v2550, 0.6931472
        %v2552 = vlog2.pop %v2521
        %v2553 = vmul.f32 %v2552, 0.6931472
        %v2554 = vlog2.pop %v2523
        %v2555 = vmul.f32 %v2554, 0.6931472
        %v2556 = vlog2.pop %v2525
        %v2557 = vmul.f32 %v2556, 0.6931472
        %v2558 = vlog2.pop %v2527
        %v2559 = vmul.f32 %v2558, 0.6931472
        %v2560 = vlog2.pop %v2529
        %v2561 = vmul.f32 %v2560, 0.6931472
        %v2562 = vsub.f32 %v2450, %v2531
        %v2563 = vsub.f32 %v2451, %v2533
        %v2564 = vsub.f32 %v2452, %v2535
        %v2565 = vsub.f32 %v2453, %v2537
        %v2566 = vsub.f32 %v2454, %v2539
        %v2567 = vsub.f32 %v2455, %v2541
        %v2568 = vsub.f32 %v2456, %v2543
        %v2569 = vsub.f32 %v2457, %v2545
        %v2570 = vsub.f32 %v2458, %v2547
        %v2571 = vsub.f32 %v2459, %v2549
        %v2572 = vsub.f32 %v2460, %v2551
        %v2573 = vsub.f32 %v2461, %v2553
        %v2574 = vsub.f32 %v2462, %v2555
        %v2575 = vsub.f32 %v2463, %v2557
        %v2576 = vsub.f32 %v2464, %v2559
        %v2577 = vsub.f32 %v2465, %v2561
        %2578 = vst [vmem:[%s283] sm:$0xff] %v2562
        %2579 = vst [vmem:[%s283 + $0x8] sm:$0xff] %v2563
        %2580 = vst [vmem:[%s283 + $0x10] sm:$0xff] %v2564
        %2581 = vst [vmem:[%s283 + $0x18] sm:$0xff] %v2565
        %2582 = vst [vmem:[%s283 + $0x20] sm:$0xff] %v2566
        %2583 = vst [vmem:[%s283 + $0x28] sm:$0xff] %v2567
        %2584 = vst [vmem:[%s283 + $0x30] sm:$0xff] %v2568
        %2585 = vst [vmem:[%s283 + $0x38] sm:$0xff] %v2569
        %2586 = vst [vmem:[%s283 + $0x40] sm:$0xff] %v2570
        %2587 = vst [vmem:[%s283 + $0x48] sm:$0xff] %v2571
        %2588 = vst [vmem:[%s283 + $0x50] sm:$0xff] %v2572
        %2589 = vst [vmem:[%s283 + $0x58] sm:$0xff] %v2573
        %2590 = vst [vmem:[%s283 + $0x60] sm:$0xff] %v2574
        %2591 = vst [vmem:[%s283 + $0x68] sm:$0xff] %v2575
        %2592 = vst [vmem:[%s283 + $0x70] sm:$0xff] %v2576
        %2593 = vst [vmem:[%s283 + $0x78] sm:$0xff] %v2577
      $region56: #{_ognn_forward_impl.1} parent=43 // pred_fallthru
        _
      %s2594 = smul.u32 16, %s22
      %p2595 = scmp.lt.s32.totalorder %s2594, 15
      %s2596 = scalar_select %p2595, %s2594, 15
      %s2597 = smul.addr %s2596, 8
      %s2598 = scalar_lea.vmem %s6, %s2597
      // Predicated region
      $region57: #{_ognn_forward_impl.1} parent=43 // pred_check
        %p2599 = pneg %p183
      $region58: #{_ognn_forward_impl.1} parent=43 // pred_check_branch
        %2601 = sbr.rel (%p2599) target = $region60
      $region59: #{_ognn_forward_impl.1} parent=43 // pred_region
        %s2602 = smul.u32 16, %s22
      $region60: #{_ognn_forward_impl.1} parent=43 // pred_fallthru
        _
      // Predicated region
      $region61: #{_ognn_forward_impl.1} parent=43 // pred_check
        %p2603 = pneg %p183
      $region62: #{_ognn_forward_impl.1} parent=43 // pred_check_branch
        %2605 = sbr.rel (%p2603) target = $region64
      $region63: #{_ognn_forward_impl.1} parent=43 // pred_region
        %s2606 = smul.u32 16, %s22
        %p2607 = scmp.lt.s32.totalorder %s2606, 15
        %s2608 = scalar_select %p2607, %s2606, 15
        %s2609 = smul.addr %s2608, 8
        %s2610 = scalar_lea.vmem %s6, %s2609
      $region64: #{_ognn_forward_impl.1} parent=43 // pred_fallthru
        _
    $region44: #{_ognn_forward_impl.1} parent=5 // pred_fallthru
      _
    %p2611 = scmp.le.s32.totalorder 2, %s12
    // Predicated region
    $region65: #{_ognn_forward_impl.1} parent=5 // pred_check
      %p2612 = pneg %p2611
    $region66: #{_ognn_forward_impl.1} parent=5 // pred_check_branch
      %2614 = sbr.rel (%p2612) target = $region68
    $region67: #{_ognn_forward_impl.1} parent=5 // pred_region
      %s2615 = ssub.s32 %s12, 2
    $region68: #{_ognn_forward_impl.1} parent=5 // pred_fallthru
      _
  $region6: #{_ognn_forward_impl.1} parent=0 // loop_footer
    %s16 = sadd.s32 1, %s12
  $region7: #{_ognn_forward_impl.1} parent=0 // loop_footer_branch
    %11 = sbr.rel target = $region3
  $region8: #{_ognn_forward_impl.1} parent=0 // loop_exit
    _

</llo_original>
